<compile_context>
chip_gen: v6e
topology: v6e:2x2x1
jax: 0.10.0
libtpu: 0.0.40
codegen_flags: <defaults>
</compile_context>

<pallas_src>
import functools

import jax
import jax.numpy as jnp
from jax.experimental import pallas as pl
from jax.experimental.pallas import tpu as pltpu

BN_EPS = 1e-5
# MXU input precision for all matmuls.  f32 keeps the small-shape correctness
# check tight; flip to jnp.bfloat16 on v6e/v7x for ~2x MXU throughput.
MXU_DTYPE = jnp.float32
# Explicit scoped-VMEM ceiling: safe on v5e (16 MiB default), v6e and v7x.
VMEM_LIMIT_BYTES = 32 * 1024 * 1024


def _interp_matrix(n_in, n_out):
    """Bilinear interpolation matrix (align_corners=True), shape (n_out, n_in)."""
    o = jnp.arange(n_out, dtype=jnp.float32)
    if n_out == 1:
        c = jnp.zeros((n_out,), jnp.float32)
    else:
        c = o * (n_in - 1) / (n_out - 1)
    i0 = jnp.clip(jnp.floor(c), 0.0, n_in - 1)
    i1 = jnp.minimum(i0 + 1.0, n_in - 1)
    f = c - i0
    return ((1.0 - f)[:, None] * jax.nn.one_hot(i0.astype(jnp.int32), n_in, dtype=jnp.float32)
            + f[:, None] * jax.nn.one_hot(i1.astype(jnp.int32), n_in, dtype=jnp.float32))


def _compiler_params():
    return pltpu.CompilerParams(
        dimension_semantics=("parallel",),       # batch axis -> both TCs on v7x
        vmem_limit_bytes=VMEM_LIMIT_BYTES,
    )


# ---------------------------------------------------------------------------
# Shared in-kernel helpers
# ---------------------------------------------------------------------------
def _im2col_matmul(xpad_ref, patch_ref, w_ref):
    """3x3 SAME conv of a padded (H+2, W+2, Cin) VMEM tile as ONE fat matmul.

    The nine taps are packed side-by-side into the (H*W, 9*Cin) im2col scratch,
    so the contraction dim is K = 9*Cin instead of nine K=Cin micro-matmuls.
    Returns the raw (pre-BN) activations, shape (H*W, Cout), f32.
    """
    hp, wp, cin = xpad_ref.shape
    h, w = hp - 2, wp - 2
    k = 0
    for dy in range(3):
        for dx in range(3):
            tap = xpad_ref[dy:dy + h, dx:dx + w, :]            # (H, W, Cin)
            patch_ref[:, k * cin:(k + 1) * cin] = (
                tap.reshape(h * w, cin).astype(patch_ref.dtype))
            k += 1
    return jnp.dot(patch_ref[...], w_ref[...].astype(patch_ref.dtype),
                   preferred_element_type=jnp.float32)


def _store_conv_and_stats(acc, o_ref, st_ref):
    """Store the raw conv tile + this tile's partial BN stats (sum, sum^2)."""
    _, h, w, cout = o_ref.shape
    o_ref[0] = acc.reshape(h, w, cout)
    st_ref[0, 0:1, :] = jnp.sum(acc, axis=0, keepdims=True)           # (1, Cout)
    st_ref[0, 1:2, :] = jnp.sum(acc * acc, axis=0, keepdims=True)     # (1, Cout)


# ---------------------------------------------------------------------------
# Kernel A: upsample + pad + concat + conv1 + partial BN stats
# ---------------------------------------------------------------------------
def _up_concat_conv1_kernel(x1_ref, x2_ref, m_ref, w1_ref,
                            o_ref, st_ref, cat_ref, patch_ref, *, pads):
    _, h1, w1, c1 = x1_ref.shape
    _, h2, w2, c2 = x2_ref.shape
    h2u, w2u = 2 * h1, 2 * w1
    pad_t, pad_l = pads[0], pads[2]   # bottom/right pads are absorbed by cat_ref size

    # Bilinear 2x upsample (align_corners=True) as ONE MXU matmul:
    # kron(AH, AW) acts on the flattened spatial axis; channels stay on lanes,
    # so no lane-dim reshapes / relayouts are needed.
    x1f = x1_ref[0].reshape(h1 * w1, c1)                       # collapse major dims
    up = jnp.dot(m_ref[...].astype(patch_ref.dtype), x1f.astype(patch_ref.dtype),
                 preferred_element_type=jnp.float32)           # (H2u*W2u, C1)
    up = up.reshape(h2u, w2u, c1)

    # Fused glue: F.pad(x1, diff), torch.cat([x2, x1], dim=1) and the conv's
    # 1-px zero halo are assembled directly into the padded VMEM scratch.
    cat_ref[...] = jnp.zeros(cat_ref.shape, cat_ref.dtype)
    cat_ref[1:1 + h2, 1:1 + w2, 0:c2] = x2_ref[0]
    cat_ref[1 + pad_t:1 + pad_t + h2u, 1 + pad_l:1 + pad_l + w2u, c2:c2 + c1] = up

    # conv1: single (H2*W2, 9*C) x (9*C, Cmid) matmul + partial BN stats.
    acc = _im2col_matmul(cat_ref, patch_ref, w1_ref)
    _store_conv_and_stats(acc, o_ref, st_ref)


def _up_concat_conv1(x1_nhwc, x2_nhwc, w1mat):
    n, h1, w1, c1 = x1_nhwc.shape
    _, h2, w2, c2 = x2_nhwc.shape
    h2u, w2u = 2 * h1, 2 * w1
    diff_y, diff_x = h2 - h2u, w2 - w2u
    pads = (diff_y // 2, diff_y - diff_y // 2, diff_x // 2, diff_x - diff_x // 2)
    c = c1 + c2
    cmid = w1mat.shape[1]
    # Dense bilinear-upsample operator on the flattened spatial axis.
    # TODO(synk): for large H1*W1, apply AH / AW separably per spatial tile
    # instead of materializing the full (H2u*W2u, H1*W1) kron operator.
    m = jnp.kron(_interp_matrix(h1, h2u), _interp_matrix(w1, w2u))

    kernel = functools.partial(_up_concat_conv1_kernel, pads=pads)
    return pl.pallas_call(
        kernel,
        grid=(n,),
        in_specs=[
            pl.BlockSpec((1, h1, w1, c1), lambda b: (b, 0, 0, 0)),
            pl.BlockSpec((1, h2, w2, c2), lambda b: (b, 0, 0, 0)),
            pl.BlockSpec((h2u * w2u, h1 * w1), lambda b: (0, 0)),
            pl.BlockSpec((9 * c, cmid), lambda b: (0, 0)),
        ],
        out_specs=(
            pl.BlockSpec((1, h2, w2, cmid), lambda b: (b, 0, 0, 0)),
            pl.BlockSpec((1, 2, cmid), lambda b: (b, 0, 0)),
        ),
        out_shape=(
            jax.ShapeDtypeStruct((n, h2, w2, cmid), jnp.float32),   # raw conv1
            jax.ShapeDtypeStruct((n, 2, cmid), jnp.float32),        # per-image stats
        ),
        scratch_shapes=[
            pltpu.VMEM((h2 + 2, w2 + 2, c), jnp.float32),   # padded concat tile
            pltpu.VMEM((h2 * w2, 9 * c), MXU_DTYPE),        # im2col scratch
        ],
        compiler_params=_compiler_params(),
    )(x1_nhwc, x2_nhwc, m, w1mat)


# ---------------------------------------------------------------------------
# Kernel B: BN(prev) + ReLU fused with conv2 + partial BN stats
# ---------------------------------------------------------------------------
def _bnrelu_conv_kernel(x_ref, sc_ref, sh_ref, w_ref,
                        o_ref, st_ref, xpad_ref, patch_ref):
    _, h, w, _ = x_ref.shape
    # BN1 (batch statistics folded into per-channel scale/shift) + ReLU, fused
    # here so the normalized mid activation never round-trips HBM on its own.
    x = jnp.maximum(x_ref[0] * sc_ref[0] + sh_ref[0], 0.0)
    xpad_ref[...] = jnp.zeros(xpad_ref.shape, xpad_ref.dtype)
    xpad_ref[1:1 + h, 1:1 + w, :] = x
    acc = _im2col_matmul(xpad_ref, patch_ref, w_ref)
    _store_conv_and_stats(acc, o_ref, st_ref)


def _bnrelu_conv(x_raw, scale, shift, wmat):
    n, h, w, cin = x_raw.shape
    cout = wmat.shape[1]
    return pl.pallas_call(
        _bnrelu_conv_kernel,
        grid=(n,),
        in_specs=[
            pl.BlockSpec((1, h, w, cin), lambda b: (b, 0, 0, 0)),
            pl.BlockSpec((1, 1, cin), lambda b: (0, 0, 0)),
            pl.BlockSpec((1, 1, cin), lambda b: (0, 0, 0)),
            pl.BlockSpec((9 * cin, cout), lambda b: (0, 0)),
        ],
        out_specs=(
            pl.BlockSpec((1, h, w, cout), lambda b: (b, 0, 0, 0)),
            pl.BlockSpec((1, 2, cout), lambda b: (b, 0, 0)),
        ),
        out_shape=(
            jax.ShapeDtypeStruct((n, h, w, cout), jnp.float32),
            jax.ShapeDtypeStruct((n, 2, cout), jnp.float32),
        ),
        scratch_shapes=[
            pltpu.VMEM((h + 2, w + 2, cin), jnp.float32),
            pltpu.VMEM((h * w, 9 * cin), MXU_DTYPE),
        ],
        compiler_params=_compiler_params(),
    )(x_raw, scale, shift, wmat)


# ---------------------------------------------------------------------------
# Kernel C: final BN + ReLU
# ---------------------------------------------------------------------------
def _bnrelu_kernel(x_ref, sc_ref, sh_ref, o_ref):
    o_ref[0] = jnp.maximum(x_ref[0] * sc_ref[0] + sh_ref[0], 0.0)


def _bn_relu(x_raw, scale, shift):
    n, h, w, c = x_raw.shape
    return pl.pallas_call(
        _bnrelu_kernel,
        grid=(n,),
        in_specs=[
            pl.BlockSpec((1, h, w, c), lambda b: (b, 0, 0, 0)),
            pl.BlockSpec((1, 1, c), lambda b: (0, 0, 0)),
            pl.BlockSpec((1, 1, c), lambda b: (0, 0, 0)),
        ],
        out_specs=pl.BlockSpec((1, h, w, c), lambda b: (b, 0, 0, 0)),
        out_shape=jax.ShapeDtypeStruct((n, h, w, c), jnp.float32),
        compiler_params=_compiler_params(),
    )(x_raw, scale, shift)


# ---------------------------------------------------------------------------
# BN affine parameters from accumulated partial stats (exact batch statistics)
# ---------------------------------------------------------------------------
def _bn_affine(stats, gamma, beta, count):
    s = jnp.sum(stats[:, 0, :], axis=0)
    ss = jnp.sum(stats[:, 1, :], axis=0)
    mean = s / count
    var = jnp.maximum(ss / count - mean * mean, 0.0)     # biased variance
    scale = gamma * jax.lax.rsqrt(var + BN_EPS)
    shift = beta - mean * scale
    c = gamma.shape[0]
    return scale.reshape(1, 1, c), shift.reshape(1, 1, c)


# ---------------------------------------------------------------------------
# Up module forward (PyTorch-facing NCHW API)
# ---------------------------------------------------------------------------
def init_params(key, in_channels, out_channels, mid_channels):
    ks = jax.random.split(key, 6)
    return dict(
        w1=0.1 * jax.random.normal(ks[0], (3, 3, in_channels, mid_channels), jnp.float32),
        g1=1.0 + 0.1 * jax.random.normal(ks[1], (mid_channels,), jnp.float32),
        b1=0.1 * jax.random.normal(ks[2], (mid_channels,), jnp.float32),
        w2=0.1 * jax.random.normal(ks[3], (3, 3, mid_channels, out_channels), jnp.float32),
        g2=1.0 + 0.1 * jax.random.normal(ks[4], (out_channels,), jnp.float32),
        b2=0.1 * jax.random.normal(ks[5], (out_channels,), jnp.float32),
    )


def up_forward(x1, x2, params):
    """Up.forward(x1, x2) with bilinear=True.  Inputs/outputs are NCHW."""
    n = x1.shape[0]
    h2, w2 = x2.shape[2], x2.shape[3]
    cin = x1.shape[1] + x2.shape[1]
    cmid = params["w1"].shape[-1]
    cout = params["w2"].shape[-1]

    # Single layout conversion at the API boundary; everything internal is NHWC
    # (channels on lanes -> lane-dense conv stores at realistic channel counts).
    x1_nhwc = jnp.transpose(x1, (0, 2, 3, 1))
    x2_nhwc = jnp.transpose(x2, (0, 2, 3, 1))
    w1mat = params["w1"].reshape(9 * cin, cmid)      # HWIO -> (9*Cin, Cout) im2col weight
    w2mat = params["w2"].reshape(9 * cmid, cout)
    count = float(n * h2 * w2)

    raw1, st1 = _up_concat_conv1(x1_nhwc, x2_nhwc, w1mat)            # Pallas kernel A
    sc1, sh1 = _bn_affine(st1, params["g1"], params["b1"], count)    # tiny scalar math
    raw2, st2 = _bnrelu_conv(raw1, sc1, sh1, w2mat)                  # Pallas kernel B
    sc2, sh2 = _bn_affine(st2, params["g2"], params["b2"], count)
    y = _bn_relu(raw2, sc2, sh2)                                     # Pallas kernel C
    return jnp.transpose(y, (0, 3, 1, 2))                            # NHWC -> NCHW


# ---------------------------------------------------------------------------
# Pure-JAX reference (for the in-script correctness check)
# ---------------------------------------------------------------------------
def _ref_forward(x1, x2, params):
    _, _, h1, w1 = x1.shape
    _, _, h2, w2 = x2.shape
    ah = _interp_matrix(h1, 2 * h1)
    aw = _interp_matrix(w1, 2 * w1)
    up = jnp.einsum("oh,nchw->ncow", ah, x1)
    up = jnp.einsum("pw,ncow->ncop", aw, up)
    diff_y = h2 - up.shape[2]
    diff_x = w2 - up.shape[3]
    up = jnp.pad(up, ((0, 0), (0, 0),
                      (diff_y // 2, diff_y - diff_y // 2),
                      (diff_x // 2, diff_x - diff_x // 2)))
    x = jnp.concatenate([x2, up], axis=1)
    x = jnp.transpose(x, (0, 2, 3, 1))

    def cbr(xh, wk, g, b):
        yh = jax.lax.conv_general_dilated(
            xh, wk, window_strides=(1, 1), padding="SAME",
            dimension_numbers=("NHWC", "HWIO", "NHWC"))
        m = jnp.mean(yh, axis=(0, 1, 2))
        v = jnp.mean(jnp.square(yh - m), axis=(0, 1, 2))
        yh = (yh - m) * jax.lax.rsqrt(v + BN_EPS) * g + b
        return jnp.maximum(yh, 0.0)

    yh = cbr(x, params["w1"], params["g1"], params["b1"])
    yh = cbr(yh, params["w2"], params["g2"], params["b2"])
    return jnp.transpose(yh, (0, 3, 1, 2))


if __name__ == "__main__":
    key = jax.random.PRNGKey(0)
    k_x1, k_x2, k_p = jax.random.split(key, 3)
    in_channels, out_channels = 8, 4      # Up(8, 4, bilinear=True) -> mid = 4
    N, H1, W1 = 2, 8, 8
    # UNet convention: x1 (deep path) and x2 (skip) each carry in_channels//2
    # channels; after upsample+concat the first conv sees in_channels.
    x1 = jax.random.normal(k_x1, (N, in_channels // 2, H1, W1), jnp.float32)
    x2 = jax.random.normal(k_x2, (N, in_channels // 2, 2 * H1, 2 * W1), jnp.float32)
    params = init_params(k_p, in_channels, out_channels, in_channels // 2)

    out = jax.block_until_ready(up_forward(x1, x2, params))
    ref = jax.block_until_ready(_ref_forward(x1, x2, params))

    assert out.shape == (N, out_channels, 2 * H1, 2 * W1), out.shape
    max_err = float(jnp.max(jnp.abs(out - ref)))
    assert max_err < 1e-3, f"max abs error {max_err}"
    print("KERNEL_OK")
</pallas_src>

<mosaic_0001>
module attributes {stable_mosaic.version = 11 : i64} {
  func.func @_up_concat_conv1_kernel(%arg0: i32, %arg1: memref<1x8x8x4xf32, #tpu.memory_space<vmem>>, %arg2: memref<1x16x16x4xf32, #tpu.memory_space<vmem>>, %arg3: memref<256x64xf32, #tpu.memory_space<vmem>>, %arg4: memref<72x4xf32, #tpu.memory_space<vmem>>, %arg5: memref<1x16x16x4xf32, #tpu.memory_space<vmem>>, %arg6: memref<1x2x4xf32, #tpu.memory_space<vmem>>, %arg7: memref<18x18x8xf32, #tpu.memory_space<vmem>>, %arg8: memref<256x72xf32, #tpu.memory_space<vmem>>) attributes {dimension_semantics = [#tpu.dimension_semantics<parallel>], iteration_bounds = array<i64: 2>, scalar_prefetch = 0 : i64, scratch_operands = 2 : i64, tpu.core_type = #tpu.core_type<tc>, window_params = [{transform_indices = @transform_0, window_bounds = array<i64: 1, 8, 8, 4>}, {transform_indices = @transform_1, window_bounds = array<i64: 1, 16, 16, 4>}, {pipeline_mode = #tpu.pipeline_mode<synchronous>, transform_indices = @transform_2, window_bounds = array<i64: 256, 64>}, {pipeline_mode = #tpu.pipeline_mode<synchronous>, transform_indices = @transform_3, window_bounds = array<i64: 72, 4>}, {transform_indices = @transform_4, window_bounds = array<i64: 1, 16, 16, 4>}, {transform_indices = @transform_5, window_bounds = array<i64: 1, 2, 4>}]} {
    %c0 = arith.constant 0 : index
    %c0_0 = arith.constant 0 : index
    %c0_1 = arith.constant 0 : index
    %c0_2 = arith.constant 0 : index
    %0 = vector.load %arg1[%c0, %c0_0, %c0_1, %c0_2] : memref<1x8x8x4xf32, #tpu.memory_space<vmem>>, vector<1x8x8x4xf32>
    %1 = vector.shape_cast %0 : vector<1x8x8x4xf32> to vector<8x8x4xf32>
    %2 = vector.shape_cast %1 : vector<8x8x4xf32> to vector<64x4xf32>
    %c0_3 = arith.constant 0 : index
    %c0_4 = arith.constant 0 : index
    %3 = vector.load %arg3[%c0_3, %c0_4] : memref<256x64xf32, #tpu.memory_space<vmem>>, vector<256x64xf32>
    %cst = arith.constant dense<0.000000e+00> : vector<256x4xf32>
    %4 = tpu.matmul %3, %2, %cst {dimension_numbers = #tpu.dot_dimension_numbers<[1], [0], [0], [1], [0, 0, 1, 1], [], []>} : vector<256x64xf32>, vector<64x4xf32>, vector<256x4xf32> -> vector<256x4xf32>
    %5 = vector.shape_cast %4 : vector<256x4xf32> to vector<16x16x4xf32>
    %cst_5 = arith.constant 0.000000e+00 : f32
    %6 = vector.broadcast %cst_5 : f32 to vector<18x18x8xf32>
    %c0_6 = arith.constant 0 : index
    %c0_7 = arith.constant 0 : index
    %c0_8 = arith.constant 0 : index
    %7 = vector.load %arg7[%c0_6, %c0_7, %c0_8] : memref<18x18x8xf32, #tpu.memory_space<vmem>>, vector<18x18x8xf32>
    tpu.vector_store %arg7[%c0_6, %c0_7, %c0_8], %6 {strides = array<i32>} : memref<18x18x8xf32, #tpu.memory_space<vmem>>, vector<18x18x8xf32>,
    %c0_9 = arith.constant 0 : index
    %c0_10 = arith.constant 0 : index
    %c0_11 = arith.constant 0 : index
    %c0_12 = arith.constant 0 : index
    %8 = vector.load %arg2[%c0_9, %c0_10, %c0_11, %c0_12] : memref<1x16x16x4xf32, #tpu.memory_space<vmem>>, vector<1x16x16x4xf32>
    %9 = vector.shape_cast %8 : vector<1x16x16x4xf32> to vector<16x16x4xf32>
    %c1 = arith.constant 1 : index
    %c1_13 = arith.constant 1 : index
    %c0_14 = arith.constant 0 : index
    %10 = vector.load %arg7[%c1, %c1_13, %c0_14] : memref<18x18x8xf32, #tpu.memory_space<vmem>>, vector<16x16x4xf32>
    tpu.vector_store %arg7[%c1, %c1_13, %c0_14], %9 {strides = array<i32>} : memref<18x18x8xf32, #tpu.memory_space<vmem>>, vector<16x16x4xf32>,
    %c1_15 = arith.constant 1 : index
    %c1_16 = arith.constant 1 : index
    %c4 = arith.constant 4 : index
    %11 = vector.load %arg7[%c1_15, %c1_16, %c4] : memref<18x18x8xf32, #tpu.memory_space<vmem>>, vector<16x16x4xf32>
    tpu.vector_store %arg7[%c1_15, %c1_16, %c4], %5 {strides = array<i32>} : memref<18x18x8xf32, #tpu.memory_space<vmem>>, vector<16x16x4xf32>,
    %c0_17 = arith.constant 0 : index
    %c0_18 = arith.constant 0 : index
    %c0_19 = arith.constant 0 : index
    %12 = vector.load %arg7[%c0_17, %c0_18, %c0_19] : memref<18x18x8xf32, #tpu.memory_space<vmem>>, vector<16x16x8xf32>
    %13 = vector.shape_cast %12 : vector<16x16x8xf32> to vector<256x8xf32>
    %c0_20 = arith.constant 0 : index
    %c0_21 = arith.constant 0 : index
    %14 = vector.load %arg8[%c0_20, %c0_21] : memref<256x72xf32, #tpu.memory_space<vmem>>, vector<256x8xf32>
    tpu.vector_store %arg8[%c0_20, %c0_21], %13 {strides = array<i32>} : memref<256x72xf32, #tpu.memory_space<vmem>>, vector<256x8xf32>,
    %c0_22 = arith.constant 0 : index
    %c1_23 = arith.constant 1 : index
    %c0_24 = arith.constant 0 : index
    %15 = vector.load %arg7[%c0_22, %c1_23, %c0_24] : memref<18x18x8xf32, #tpu.memory_space<vmem>>, vector<16x16x8xf32>
    %16 = vector.shape_cast %15 : vector<16x16x8xf32> to vector<256x8xf32>
    %c0_25 = arith.constant 0 : index
    %c8 = arith.constant 8 : index
    %17 = vector.load %arg8[%c0_25, %c8] : memref<256x72xf32, #tpu.memory_space<vmem>>, vector<256x8xf32>
    tpu.vector_store %arg8[%c0_25, %c8], %16 {strides = array<i32>} : memref<256x72xf32, #tpu.memory_space<vmem>>, vector<256x8xf32>,
    %c0_26 = arith.constant 0 : index
    %c2 = arith.constant 2 : index
    %c0_27 = arith.constant 0 : index
    %18 = vector.load %arg7[%c0_26, %c2, %c0_27] : memref<18x18x8xf32, #tpu.memory_space<vmem>>, vector<16x16x8xf32>
    %19 = vector.shape_cast %18 : vector<16x16x8xf32> to vector<256x8xf32>
    %c0_28 = arith.constant 0 : index
    %c16 = arith.constant 16 : index
    %20 = vector.load %arg8[%c0_28, %c16] : memref<256x72xf32, #tpu.memory_space<vmem>>, vector<256x8xf32>
    tpu.vector_store %arg8[%c0_28, %c16], %19 {strides = array<i32>} : memref<256x72xf32, #tpu.memory_space<vmem>>, vector<256x8xf32>,
    %c1_29 = arith.constant 1 : index
    %c0_30 = arith.constant 0 : index
    %c0_31 = arith.constant 0 : index
    %21 = vector.load %arg7[%c1_29, %c0_30, %c0_31] : memref<18x18x8xf32, #tpu.memory_space<vmem>>, vector<16x16x8xf32>
    %22 = vector.shape_cast %21 : vector<16x16x8xf32> to vector<256x8xf32>
    %c0_32 = arith.constant 0 : index
    %c24 = arith.constant 24 : index
    %23 = vector.load %arg8[%c0_32, %c24] : memref<256x72xf32, #tpu.memory_space<vmem>>, vector<256x8xf32>
    tpu.vector_store %arg8[%c0_32, %c24], %22 {strides = array<i32>} : memref<256x72xf32, #tpu.memory_space<vmem>>, vector<256x8xf32>,
    %c1_33 = arith.constant 1 : index
    %c1_34 = arith.constant 1 : index
    %c0_35 = arith.constant 0 : index
    %24 = vector.load %arg7[%c1_33, %c1_34, %c0_35] : memref<18x18x8xf32, #tpu.memory_space<vmem>>, vector<16x16x8xf32>
    %25 = vector.shape_cast %24 : vector<16x16x8xf32> to vector<256x8xf32>
    %c0_36 = arith.constant 0 : index
    %c32 = arith.constant 32 : index
    %26 = vector.load %arg8[%c0_36, %c32] : memref<256x72xf32, #tpu.memory_space<vmem>>, vector<256x8xf32>
    tpu.vector_store %arg8[%c0_36, %c32], %25 {strides = array<i32>} : memref<256x72xf32, #tpu.memory_space<vmem>>, vector<256x8xf32>,
    %c1_37 = arith.constant 1 : index
    %c2_38 = arith.constant 2 : index
    %c0_39 = arith.constant 0 : index
    %27 = vector.load %arg7[%c1_37, %c2_38, %c0_39] : memref<18x18x8xf32, #tpu.memory_space<vmem>>, vector<16x16x8xf32>
    %28 = vector.shape_cast %27 : vector<16x16x8xf32> to vector<256x8xf32>
    %c0_40 = arith.constant 0 : index
    %c40 = arith.constant 40 : index
    %29 = vector.load %arg8[%c0_40, %c40] : memref<256x72xf32, #tpu.memory_space<vmem>>, vector<256x8xf32>
    tpu.vector_store %arg8[%c0_40, %c40], %28 {strides = array<i32>} : memref<256x72xf32, #tpu.memory_space<vmem>>, vector<256x8xf32>,
    %c2_41 = arith.constant 2 : index
    %c0_42 = arith.constant 0 : index
    %c0_43 = arith.constant 0 : index
    %30 = vector.load %arg7[%c2_41, %c0_42, %c0_43] : memref<18x18x8xf32, #tpu.memory_space<vmem>>, vector<16x16x8xf32>
    %31 = vector.shape_cast %30 : vector<16x16x8xf32> to vector<256x8xf32>
    %c0_44 = arith.constant 0 : index
    %c48 = arith.constant 48 : index
    %32 = vector.load %arg8[%c0_44, %c48] : memref<256x72xf32, #tpu.memory_space<vmem>>, vector<256x8xf32>
    tpu.vector_store %arg8[%c0_44, %c48], %31 {strides = array<i32>} : memref<256x72xf32, #tpu.memory_space<vmem>>, vector<256x8xf32>,
    %c2_45 = arith.constant 2 : index
    %c1_46 = arith.constant 1 : index
    %c0_47 = arith.constant 0 : index
    %33 = vector.load %arg7[%c2_45, %c1_46, %c0_47] : memref<18x18x8xf32, #tpu.memory_space<vmem>>, vector<16x16x8xf32>
    %34 = vector.shape_cast %33 : vector<16x16x8xf32> to vector<256x8xf32>
    %c0_48 = arith.constant 0 : index
    %c56 = arith.constant 56 : index
    %35 = vector.load %arg8[%c0_48, %c56] : memref<256x72xf32, #tpu.memory_space<vmem>>, vector<256x8xf32>
    tpu.vector_store %arg8[%c0_48, %c56], %34 {strides = array<i32>} : memref<256x72xf32, #tpu.memory_space<vmem>>, vector<256x8xf32>,
    %c2_49 = arith.constant 2 : index
    %c2_50 = arith.constant 2 : index
    %c0_51 = arith.constant 0 : index
    %36 = vector.load %arg7[%c2_49, %c2_50, %c0_51] : memref<18x18x8xf32, #tpu.memory_space<vmem>>, vector<16x16x8xf32>
    %37 = vector.shape_cast %36 : vector<16x16x8xf32> to vector<256x8xf32>
    %c0_52 = arith.constant 0 : index
    %c64 = arith.constant 64 : index
    %38 = vector.load %arg8[%c0_52, %c64] : memref<256x72xf32, #tpu.memory_space<vmem>>, vector<256x8xf32>
    tpu.vector_store %arg8[%c0_52, %c64], %37 {strides = array<i32>} : memref<256x72xf32, #tpu.memory_space<vmem>>, vector<256x8xf32>,
    %c0_53 = arith.constant 0 : index
    %c0_54 = arith.constant 0 : index
    %39 = vector.load %arg8[%c0_53, %c0_54] : memref<256x72xf32, #tpu.memory_space<vmem>>, vector<256x72xf32>
    %c0_55 = arith.constant 0 : index
    %c0_56 = arith.constant 0 : index
    %40 = vector.load %arg4[%c0_55, %c0_56] : memref<72x4xf32, #tpu.memory_space<vmem>>, vector<72x4xf32>
    %cst_57 = arith.constant dense<0.000000e+00> : vector<256x4xf32>
    %41 = tpu.matmul %39, %40, %cst_57 {dimension_numbers = #tpu.dot_dimension_numbers<[1], [0], [0], [1], [0, 0, 1, 1], [], []>} : vector<256x72xf32>, vector<72x4xf32>, vector<256x4xf32> -> vector<256x4xf32>
    %42 = vector.shape_cast %41 : vector<256x4xf32> to vector<16x16x4xf32>
    %c0_58 = arith.constant 0 : index
    %c0_59 = arith.constant 0 : index
    %c0_60 = arith.constant 0 : index
    %c0_61 = arith.constant 0 : index
    %43 = vector.load %arg5[%c0_58, %c0_59, %c0_60, %c0_61] : memref<1x16x16x4xf32, #tpu.memory_space<vmem>>, vector<1x16x16x4xf32>
    %44 = vector.shape_cast %43 : vector<1x16x16x4xf32> to vector<16x16x4xf32>
    %45 = vector.shape_cast %42 : vector<16x16x4xf32> to vector<1x16x16x4xf32>
    tpu.vector_store %arg5[%c0_58, %c0_59, %c0_60, %c0_61], %45 {strides = array<i32>} : memref<1x16x16x4xf32, #tpu.memory_space<vmem>>, vector<1x16x16x4xf32>,
    %cst_62 = arith.constant dense<0.000000e+00> : vector<4xf32>
    %46 = vector.multi_reduction <add>, %41, %cst_62 [0] : vector<256x4xf32> to vector<4xf32>
    %47 = vector.shape_cast %46 : vector<4xf32> to vector<1x4xf32>
    %c0_63 = arith.constant 0 : index
    %c0_64 = arith.constant 0 : index
    %c0_65 = arith.constant 0 : index
    %48 = vector.load %arg6[%c0_63, %c0_64, %c0_65] : memref<1x2x4xf32, #tpu.memory_space<vmem>>, vector<1x1x4xf32>
    %49 = vector.shape_cast %48 : vector<1x1x4xf32> to vector<1x4xf32>
    %50 = vector.shape_cast %47 : vector<1x4xf32> to vector<1x1x4xf32>
    tpu.vector_store %arg6[%c0_63, %c0_64, %c0_65], %50 {strides = array<i32>} : memref<1x2x4xf32, #tpu.memory_space<vmem>>, vector<1x1x4xf32>,
    %51 = arith.mulf %41, %41 : vector<256x4xf32>
    %cst_66 = arith.constant dense<0.000000e+00> : vector<4xf32>
    %52 = vector.multi_reduction <add>, %51, %cst_66 [0] : vector<256x4xf32> to vector<4xf32>
    %53 = vector.shape_cast %52 : vector<4xf32> to vector<1x4xf32>
    %c0_67 = arith.constant 0 : index
    %c1_68 = arith.constant 1 : index
    %c0_69 = arith.constant 0 : index
    %54 = vector.load %arg6[%c0_67, %c1_68, %c0_69] : memref<1x2x4xf32, #tpu.memory_space<vmem>>, vector<1x1x4xf32>
    %55 = vector.shape_cast %54 : vector<1x1x4xf32> to vector<1x4xf32>
    %56 = vector.shape_cast %53 : vector<1x4xf32> to vector<1x1x4xf32>
    tpu.vector_store %arg6[%c0_67, %c1_68, %c0_69], %56 {strides = array<i32>} : memref<1x2x4xf32, #tpu.memory_space<vmem>>, vector<1x1x4xf32>,
    return
  }
  func.func @transform_0(%arg0: i32) -> (i32, i32, i32, i32) {
    %c0_i32 = arith.constant 0 : i32
    %c0_i32_0 = arith.constant 0 : i32
    %c0_i32_1 = arith.constant 0 : i32
    %c0_i32_2 = arith.constant 0 : i32
    return %arg0, %c0_i32, %c0_i32_0, %c0_i32_1 : i32, i32, i32, i32
  }
  func.func @transform_1(%arg0: i32) -> (i32, i32, i32, i32) {
    %c0_i32 = arith.constant 0 : i32
    %c0_i32_0 = arith.constant 0 : i32
    %c0_i32_1 = arith.constant 0 : i32
    %c0_i32_2 = arith.constant 0 : i32
    return %arg0, %c0_i32, %c0_i32_0, %c0_i32_1 : i32, i32, i32, i32
  }
  func.func @transform_2(%arg0: i32) -> (i32, i32) {
    %c0_i32 = arith.constant 0 : i32
    %c0_i32_0 = arith.constant 0 : i32
    %c0_i32_1 = arith.constant 0 : i32
    return %c0_i32, %c0_i32_0 : i32, i32
  }
  func.func @transform_3(%arg0: i32) -> (i32, i32) {
    %c0_i32 = arith.constant 0 : i32
    %c0_i32_0 = arith.constant 0 : i32
    %c0_i32_1 = arith.constant 0 : i32
    return %c0_i32, %c0_i32_0 : i32, i32
  }
  func.func @transform_4(%arg0: i32) -> (i32, i32, i32, i32) {
    %c0_i32 = arith.constant 0 : i32
    %c0_i32_0 = arith.constant 0 : i32
    %c0_i32_1 = arith.constant 0 : i32
    %c0_i32_2 = arith.constant 0 : i32
    return %arg0, %c0_i32, %c0_i32_0, %c0_i32_1 : i32, i32, i32, i32
  }
  func.func @transform_5(%arg0: i32) -> (i32, i32, i32) {
    %c0_i32 = arith.constant 0 : i32
    %c0_i32_0 = arith.constant 0 : i32
    %c0_i32_1 = arith.constant 0 : i32
    return %arg0, %c0_i32, %c0_i32_0 : i32, i32, i32
  }
}

</mosaic_0001>

<llo_original>
// kernel: tpu_custom_call.1
$region0: #{tpu_custom_call.1}
  #allocation0 [shape = 'u32[]', space=smem, size = 0x4, offset = 0x4, fixed_abs, tag = 'smem constant byte address 0x4 - core index']
  #allocation1 [shape = 'u32[144,128]{1,0:T(1,128)}', space=vmem, size = 0x12000, scoped, tag = 'internal scratch']
  #allocation2 [shape = 'f32[18,18,8]{2,1,0:T(8,128)}', space=vmem, size = 0x36000, scoped, tag = 'scratch operand']
  #allocation3 [shape = 'f32[256,72]{1,0:T(8,128)}', space=vmem, size = 0x20000, scoped, tag = 'scratch operand']
  %s0 = inlined_call_operand.vmem [shape: f32[2,8,8,4], index: 0, kind: input, shape index: {}]
  %s1 = inlined_call_operand.vmem [shape: f32[2,16,16,4], index: 1, kind: input, shape index: {}]
  %s2 = inlined_call_operand.vmem [shape: f32[256,64], index: 2, kind: input, shape index: {}]
  %s3 = inlined_call_operand.vmem [shape: f32[72,4], index: 3, kind: input, shape index: {}]
  %s4 = inlined_call_operand.vmem [shape: f32[2,16,16,4], index: 4, kind: output, shape index: {0}]
  %s5 = inlined_call_operand.hbm [shape: f32[2,2,4], index: 5, kind: output, shape index: {1}]
  %6 = xla_tuple %s4, %s5
  %s7 = sld [smem:[#allocation0]]
  $region57: #{tpu_custom_call.1} parent=0
    _
  %s9 = ssub.s32 1, %s7
  %s10 = scalar_select 0, %s9, %s7
  $region1: #{tpu_custom_call.1} parent=0
    #allocation4 [shape = 'u8[2048]{0}', space=vmem, size = 0x800, scoped, tag = 'output window, operand 1']
    #allocation5 [shape = 's32[2]{0}', space=sflag, size = 0x8, scoped, tag = 'scoped memory for tpu_custom_call.1']
    %11 = vsyncpa [#allocation5], 0
    %s12 = scalar_lea.sflag [#allocation5], 1
    %13 = vsyncpa %s12, 0
    loop: start=0, step=1, limit=4
    $region2: #{tpu_custom_call.1} parent=1 // loop_pre_header
      _
    $region3: #{tpu_custom_call.1} parent=1 // loop_header
      %s15 = sphi 0, %s19
      %p16 = scmp.ge.s32.totalorder %s15, 4
      %s25 = sphi 0, %s27
      %s28 = sphi 0, %s25
      %s29 = sphi 0, %s28
      %s45 = sphi 0, %s29
      %s51 = sphi 0, %s53
      %s54 = sphi 0, %s51
      %s55 = sphi 0, %s54
      %s71 = sphi 0, %s55
      %s75 = sphi 0, %s75
      %s77 = sphi 0, %s75
      %s78 = sphi 0, %s77
      %s92 = sphi 0, %s78
      %s96 = sphi 0, %s96
      %s98 = sphi 0, %s96
      %s99 = sphi 0, %s98
      %s113 = sphi 0, %s99
      %s119 = sphi 0, %s121
      %s122 = sphi 0, %s119
      %s123 = sphi 0, %s122
      %s139 = sphi 0, %s123
      %s145 = sphi 0, %s147
      %s148 = sphi 0, %s145
      %s149 = sphi 0, %s148
      %s165 = sphi 0, %s149
    $region4: #{tpu_custom_call.1} parent=1 // loop_header_branch
      %18 = sbr.rel (%p16) target = $region8
    $region5: #{tpu_custom_call.1} parent=1 // loop_body
      %s20 = ssub.s32 %s15, 1
      %s21 = ssub.s32 %s15, 2
      %s22 = sadd.s32 %s15, 1
      %s23 = ssub.s32 %s15, %s22
      %p24 = scmp.eq.s32.totalorder %s23, 0
      %s26 = sadd.s32 %s25, 1
      %s27 = scalar_select %p24, %s25, %s26
      %p30 = pneg %p24
      %p31 = scmp.eq.s32.totalorder %s15, 1
      %p32 = por %p30, %p31
      %p33 = scmp.ne.s32.totalorder %s25, %s28
      %p34 = scmp.eq.s32.totalorder %s15, 0
      %p35 = por %p33, %p34
      %p36 = scmp.ne.s32.totalorder %s25, %s28
      %p37 = scmp.eq.s32.totalorder %s20, 1
      %p38 = por %p36, %p37
      %p39 = scmp.ne.s32.totalorder %s28, %s29
      %p40 = scmp.eq.s32.totalorder %s20, 0
      %p41 = por %p39, %p40
      %p42 = scmp.ne.s32.totalorder %s28, %s29
      %p43 = scmp.eq.s32.totalorder %s21, 1
      %p44 = por %p42, %p43
      %p46 = scmp.ne.s32.totalorder %s29, %s45
      %p47 = scmp.eq.s32.totalorder %s21, 0
      %p48 = por %p46, %p47
      %s49 = ssub.s32 %s15, %s22
      %p50 = scmp.eq.s32.totalorder %s49, 0
      %s52 = sadd.s32 %s51, 1
      %s53 = scalar_select %p50, %s51, %s52
      %p56 = pneg %p50
      %p57 = scmp.eq.s32.totalorder %s15, 1
      %p58 = por %p56, %p57
      %p59 = scmp.ne.s32.totalorder %s51, %s54
      %p60 = scmp.eq.s32.totalorder %s15, 0
      %p61 = por %p59, %p60
      %p62 = scmp.ne.s32.totalorder %s51, %s54
      %p63 = scmp.eq.s32.totalorder %s20, 1
      %p64 = por %p62, %p63
      %p65 = scmp.ne.s32.totalorder %s54, %s55
      %p66 = scmp.eq.s32.totalorder %s20, 0
      %p67 = por %p65, %p66
      %p68 = scmp.ne.s32.totalorder %s54, %s55
      %p69 = scmp.eq.s32.totalorder %s21, 1
      %p70 = por %p68, %p69
      %p72 = scmp.ne.s32.totalorder %s55, %s71
      %p73 = scmp.eq.s32.totalorder %s21, 0
      %p74 = por %p72, %p73
      %s76 = sadd.s32 %s75, 1
      %p79 = scmp.eq.s32.totalorder %s15, 1
      %p80 = scmp.ne.s32.totalorder %s75, %s77
      %p81 = scmp.eq.s32.totalorder %s15, 0
      %p82 = por %p80, %p81
      %p83 = scmp.ne.s32.totalorder %s75, %s77
      %p84 = scmp.eq.s32.totalorder %s20, 1
      %p85 = por %p83, %p84
      %p86 = scmp.ne.s32.totalorder %s77, %s78
      %p87 = scmp.eq.s32.totalorder %s20, 0
      %p88 = por %p86, %p87
      %p89 = scmp.ne.s32.totalorder %s77, %s78
      %p90 = scmp.eq.s32.totalorder %s21, 1
      %p91 = por %p89, %p90
      %p93 = scmp.ne.s32.totalorder %s78, %s92
      %p94 = scmp.eq.s32.totalorder %s21, 0
      %p95 = por %p93, %p94
      %s97 = sadd.s32 %s96, 1
      %p100 = scmp.eq.s32.totalorder %s15, 1
      %p101 = scmp.ne.s32.totalorder %s96, %s98
      %p102 = scmp.eq.s32.totalorder %s15, 0
      %p103 = por %p101, %p102
      %p104 = scmp.ne.s32.totalorder %s96, %s98
      %p105 = scmp.eq.s32.totalorder %s20, 1
      %p106 = por %p104, %p105
      %p107 = scmp.ne.s32.totalorder %s98, %s99
      %p108 = scmp.eq.s32.totalorder %s20, 0
      %p109 = por %p107, %p108
      %p110 = scmp.ne.s32.totalorder %s98, %s99
      %p111 = scmp.eq.s32.totalorder %s21, 1
      %p112 = por %p110, %p111
      %p114 = scmp.ne.s32.totalorder %s99, %s113
      %p115 = scmp.eq.s32.totalorder %s21, 0
      %p116 = por %p114, %p115
      %s117 = ssub.s32 %s15, %s22
      %p118 = scmp.eq.s32.totalorder %s117, 0
      %s120 = sadd.s32 %s119, 1
      %s121 = scalar_select %p118, %s119, %s120
      %p124 = pneg %p118
      %p125 = scmp.eq.s32.totalorder %s15, 1
      %p126 = por %p124, %p125
      %p127 = scmp.ne.s32.totalorder %s119, %s122
      %p128 = scmp.eq.s32.totalorder %s15, 0
      %p129 = por %p127, %p128
      %p130 = scmp.ne.s32.totalorder %s119, %s122
      %p131 = scmp.eq.s32.totalorder %s20, 1
      %p132 = por %p130, %p131
      %p133 = scmp.ne.s32.totalorder %s122, %s123
      %p134 = scmp.eq.s32.totalorder %s20, 0
      %p135 = por %p133, %p134
      %p136 = scmp.ne.s32.totalorder %s122, %s123
      %p137 = scmp.eq.s32.totalorder %s21, 1
      %p138 = por %p136, %p137
      %p140 = scmp.ne.s32.totalorder %s123, %s139
      %p141 = scmp.eq.s32.totalorder %s21, 0
      %p142 = por %p140, %p141
      %s143 = ssub.s32 %s15, %s22
      %p144 = scmp.eq.s32.totalorder %s143, 0
      %s146 = sadd.s32 %s145, 1
      %s147 = scalar_select %p144, %s145, %s146
      %p150 = pneg %p144
      %p151 = scmp.eq.s32.totalorder %s15, 1
      %p152 = por %p150, %p151
      %p153 = scmp.ne.s32.totalorder %s145, %s148
      %p154 = scmp.eq.s32.totalorder %s15, 0
      %p155 = por %p153, %p154
      %p156 = scmp.ne.s32.totalorder %s145, %s148
      %p157 = scmp.eq.s32.totalorder %s20, 1
      %p158 = por %p156, %p157
      %p159 = scmp.ne.s32.totalorder %s148, %s149
      %p160 = scmp.eq.s32.totalorder %s20, 0
      %p161 = por %p159, %p160
      %p162 = scmp.ne.s32.totalorder %s148, %s149
      %p163 = scmp.eq.s32.totalorder %s21, 1
      %p164 = por %p162, %p163
      %p166 = scmp.ne.s32.totalorder %s149, %s165
      %p167 = scmp.eq.s32.totalorder %s21, 0
      %p168 = por %p166, %p167
      %p169 = scmp.le.s32.totalorder 1, %s15
      %p170 = scmp.lt.s32.totalorder %s15, 3
      %p171 = pnand %p169, %p170
      %p172 = pneg %p171
      // Predicated region
      $region9: #{tpu_custom_call.1} parent=5 // pred_check
        _
      $region10: #{tpu_custom_call.1} parent=5 // pred_check_branch
        %174 = sbr.rel (%p171) target = $region12
      $region11: #{tpu_custom_call.1} parent=5 // pred_region
        %s175 = ssub.s32 %s15, 1
        // Predicated region
        $region13: #{tpu_custom_call.1} parent=11 // pred_check
          %p176 = pneg %p88
        $region14: #{tpu_custom_call.1} parent=11 // pred_check_branch
          %178 = sbr.rel (%p176) target = $region16
        $region15: #{tpu_custom_call.1} parent=11 // pred_region
          _
        $region16: #{tpu_custom_call.1} parent=11 // pred_fallthru
          _
        // Predicated region
        $region17: #{tpu_custom_call.1} parent=11 // pred_check
          %p179 = pneg %p109
        $region18: #{tpu_custom_call.1} parent=11 // pred_check_branch
          %181 = sbr.rel (%p179) target = $region20
        $region19: #{tpu_custom_call.1} parent=11 // pred_region
          _
        $region20: #{tpu_custom_call.1} parent=11 // pred_fallthru
          _
      $region12: #{tpu_custom_call.1} parent=5 // pred_fallthru
        _
      %p182 = scmp.lt.s32.totalorder %s15, 2
      // Predicated region
      $region21: #{tpu_custom_call.1} parent=5 // pred_check
        %p183 = pneg %p182
      $region22: #{tpu_custom_call.1} parent=5 // pred_check_branch
        %185 = sbr.rel (%p183) target = $region24
      $region23: #{tpu_custom_call.1} parent=5 // pred_region
        // Predicated region
        $region25: #{tpu_custom_call.1} parent=23 // pred_check
          %p186 = pneg %p35
        $region26: #{tpu_custom_call.1} parent=23 // pred_check_branch
          %188 = sbr.rel (%p186) target = $region28
        $region27: #{tpu_custom_call.1} parent=23 // pred_region
          %p189 = scmp.lt.s32.totalorder %s15, 1
          %s190 = scalar_select %p189, %s15, 1
          %s191 = smul.addr %s190, 8
          %s192 = smul.addr %s191, 8
          %s193 = scalar_lea.vmem %s0, %s192
        $region28: #{tpu_custom_call.1} parent=23 // pred_fallthru
          _
        // Predicated region
        $region29: #{tpu_custom_call.1} parent=23 // pred_check
          %p194 = pneg %p61
        $region30: #{tpu_custom_call.1} parent=23 // pred_check_branch
          %196 = sbr.rel (%p194) target = $region32
        $region31: #{tpu_custom_call.1} parent=23 // pred_region
          %p197 = scmp.lt.s32.totalorder %s15, 1
          %s198 = scalar_select %p197, %s15, 1
          %s199 = smul.addr %s198, 32
          %s200 = smul.addr %s199, 8
          %s201 = scalar_lea.vmem %s1, %s200
        $region32: #{tpu_custom_call.1} parent=23 // pred_fallthru
          _
      $region24: #{tpu_custom_call.1} parent=5 // pred_fallthru
        _
      %p202 = scmp.le.s32.totalorder 1, %s15
      %p203 = scmp.lt.s32.totalorder %s15, 3
      %p204 = pnand %p202, %p203
      %p205 = pneg %p204
      // Predicated region
      $region33: #{tpu_custom_call.1} parent=5 // pred_check
        _
      $region34: #{tpu_custom_call.1} parent=5 // pred_check_branch
        %207 = sbr.rel (%p204) target = $region36
      $region35: #{tpu_custom_call.1} parent=5 // pred_region
        %s208 = ssub.s32 %s15, 1
        %p209 = scmp.lt.s32.totalorder %s20, 1
        %s210 = scalar_select %p209, %s20, 1
        %s211 = smul.addr %s210, 8
        %s212 = smul.addr %s211, 8
        %s213 = scalar_lea.vmem %s0, %s212
        %p214 = pneg %p41
        %p215 = pneg %p38
        %p216 = scmp.lt.s32.totalorder %s20, 1
        %s217 = scalar_select %p216, %s20, 1
        %s218 = smul.addr %s217, 32
        %s219 = smul.addr %s218, 8
        %s220 = scalar_lea.vmem %s1, %s219
        %p221 = pneg %p67
        %p222 = pneg %p64
        %p223 = pneg %p88
        %p224 = pneg %p85
        %p225 = pneg %p109
        %p226 = pneg %p106
        %p227 = pneg %p135
        %p228 = pneg %p132
        %p229 = scmp.lt.s32.totalorder %s20, 1
        %s230 = scalar_select %p229, %s20, 1
        %s231 = smul.addr %s230, 32
        %s232 = smul.addr %s231, 8
        %s233 = scalar_lea.vmem %s4, %s232
        %p234 = pneg %p161
        %p235 = pneg %p158
        %s236 = sand.u32 %s148, 1
        %s237 = scalar_lea.sflag [#allocation5], %s236
        %s238 = sand.u32 %s148, 1
        %s239 = smul.addr %s238, 2
        %s240 = scalar_lea.vmem [#allocation4], %s239
        %p241 = scmp.lt.s32.totalorder %s20, 1
        %s242 = scalar_select %p241, %s20, 1
        %s243 = smul.addr %s242, 8
        %s244 = smul.addr %s243, 8
        %s245 = scalar_lea.vmem %s0, %s244
        %p246 = scmp.lt.s32.totalorder %s20, 1
        %s247 = scalar_select %p246, %s20, 1
        %s248 = smul.addr %s247, 32
        %s249 = smul.addr %s248, 8
        %s250 = scalar_lea.vmem %s1, %s249
        %p251 = scmp.lt.s32.totalorder %s20, 1
        %s252 = scalar_select %p251, %s20, 1
        %s253 = smul.addr %s252, 32
        %s254 = smul.addr %s253, 8
        %s255 = scalar_lea.vmem %s4, %s254
        %v256 = vld [vmem:[%s245] sm:$0xff]
        %v257 = vld [vmem:[%s245 + $0x8] sm:$0xff]
        %v258 = vld [vmem:[%s245 + $0x10] sm:$0xff]
        %v259 = vld [vmem:[%s245 + $0x18] sm:$0xff]
        %v260 = vld [vmem:[%s245 + $0x20] sm:$0xff]
        %v261 = vld [vmem:[%s245 + $0x28] sm:$0xff]
        %v262 = vld [vmem:[%s245 + $0x30] sm:$0xff]
        %v263 = vld [vmem:[%s245 + $0x38] sm:$0xff]
        %v264 = vld [vmem:[%s2] sm:$0xff]
        %v265 = vld [vmem:[%s2 + $0x8] sm:$0xff]
        %v266 = vld [vmem:[%s2 + $0x10] sm:$0xff]
        %v267 = vld [vmem:[%s2 + $0x18] sm:$0xff]
        %v268 = vld [vmem:[%s2 + $0x20] sm:$0xff]
        %v269 = vld [vmem:[%s2 + $0x28] sm:$0xff]
        %v270 = vld [vmem:[%s2 + $0x30] sm:$0xff]
        %v271 = vld [vmem:[%s2 + $0x38] sm:$0xff]
        %v272 = vld [vmem:[%s2 + $0x40] sm:$0xff]
        %v273 = vld [vmem:[%s2 + $0x48] sm:$0xff]
        %v274 = vld [vmem:[%s2 + $0x50] sm:$0xff]
        %v275 = vld [vmem:[%s2 + $0x58] sm:$0xff]
        %v276 = vld [vmem:[%s2 + $0x60] sm:$0xff]
        %v277 = vld [vmem:[%s2 + $0x68] sm:$0xff]
        %v278 = vld [vmem:[%s2 + $0x70] sm:$0xff]
        %v279 = vld [vmem:[%s2 + $0x78] sm:$0xff]
        %v280 = vld [vmem:[%s2 + $0x80] sm:$0xff]
        %v281 = vld [vmem:[%s2 + $0x88] sm:$0xff]
        %v282 = vld [vmem:[%s2 + $0x90] sm:$0xff]
        %v283 = vld [vmem:[%s2 + $0x98] sm:$0xff]
        %v284 = vld [vmem:[%s2 + $0xa0] sm:$0xff]
        %v285 = vld [vmem:[%s2 + $0xa8] sm:$0xff]
        %v286 = vld [vmem:[%s2 + $0xb0] sm:$0xff]
        %v287 = vld [vmem:[%s2 + $0xb8] sm:$0xff]
        %v288 = vld [vmem:[%s2 + $0xc0] sm:$0xff]
        %v289 = vld [vmem:[%s2 + $0xc8] sm:$0xff]
        %v290 = vld [vmem:[%s2 + $0xd0] sm:$0xff]
        %v291 = vld [vmem:[%s2 + $0xd8] sm:$0xff]
        %v292 = vld [vmem:[%s2 + $0xe0] sm:$0xff]
        %v293 = vld [vmem:[%s2 + $0xe8] sm:$0xff]
        %v294 = vld [vmem:[%s2 + $0xf0] sm:$0xff]
        %v295 = vld [vmem:[%s2 + $0xf8] sm:$0xff]
        %vm296 = vcmask 523264
        %v298 = vsel %vm296, %v264, 0
        %v301 = vsel %vm296, %v265, 0
        %v304 = vsel %vm296, %v266, 0
        %v307 = vsel %vm296, %v267, 0
        %v310 = vsel %vm296, %v268, 0
        %v313 = vsel %vm296, %v269, 0
        %v316 = vsel %vm296, %v270, 0
        %v319 = vsel %vm296, %v271, 0
        %v322 = vsel %vm296, %v272, 0
        %v325 = vsel %vm296, %v273, 0
        %v328 = vsel %vm296, %v274, 0
        %v331 = vsel %vm296, %v275, 0
        %v334 = vsel %vm296, %v276, 0
        %v337 = vsel %vm296, %v277, 0
        %v340 = vsel %vm296, %v278, 0
        %v343 = vsel %vm296, %v279, 0
        %v346 = vsel %vm296, %v280, 0
        %v349 = vsel %vm296, %v281, 0
        %v352 = vsel %vm296, %v282, 0
        %v355 = vsel %vm296, %v283, 0
        %v358 = vsel %vm296, %v284, 0
        %v361 = vsel %vm296, %v285, 0
        %v364 = vsel %vm296, %v286, 0
        %v367 = vsel %vm296, %v287, 0
        %v370 = vsel %vm296, %v288, 0
        %v373 = vsel %vm296, %v289, 0
        %v376 = vsel %vm296, %v290, 0
        %v379 = vsel %vm296, %v291, 0
        %v382 = vsel %vm296, %v292, 0
        %v385 = vsel %vm296, %v293, 0
        %v388 = vsel %vm296, %v294, 0
        %v391 = vsel %vm296, %v295, 0
        %393 = vmatprep.subr.mxu0 0.0
        %394 = vmatpush1.msra.mxu0 0.0
        %395 = vmatprep.subr.mxu0 0.0
        %396 = vmatpush1.msra.mxu0 0.0
        %397 = vmatprep.subr.mxu0 0.0
        %398 = vmatpush1.msra.mxu0 0.0
        %399 = vmatprep.subr.mxu0 0.0
        %400 = vmatpush1.msra.mxu0 0.0
        %401 = vmatprep.subr.mxu0 0.0
        %402 = vmatpush1.msra.mxu0 0.0
        %403 = vmatprep.subr.mxu0 0.0
        %404 = vmatpush1.msra.mxu0 0.0
        %405 = vmatprep.subr.mxu0 0.0
        %406 = vmatpush1.msra.mxu0 0.0
        %407 = vmatprep.subr.mxu0 0.0
        %408 = vmatpush1.msra.mxu0 0.0
        %409 = vmatprep.subr.mxu0 0.0
        %410 = vmatpush1.msra.mxu0 %v263
        %411 = vmatprep.subr.mxu0 0.0
        %412 = vmatpush1.msra.mxu0 %v262
        %413 = vmatprep.subr.mxu0 0.0
        %414 = vmatpush1.msra.mxu0 %v261
        %415 = vmatprep.subr.mxu0 0.0
        %416 = vmatpush1.msra.mxu0 %v260
        %417 = vmatprep.subr.mxu0 0.0
        %418 = vmatpush1.msra.mxu0 %v259
        %419 = vmatprep.subr.mxu0 0.0
        %420 = vmatpush1.msra.mxu0 %v258
        %421 = vmatprep.subr.mxu0 0.0
        %422 = vmatpush1.msra.mxu0 %v257
        %423 = vmatprep.subr.mxu0 0.0
        %424 = vmatpush1.msra.mxu0 %v256
        %425 = vmatprep.subr.mxu0 0.0
        %426 = vmatpush2.msra.mxu0 0.0
        %427 = vmatprep.subr.mxu0 0.0
        %428 = vmatpush2.msra.mxu0 0.0
        %429 = vmatprep.subr.mxu0 0.0
        %430 = vmatpush2.msra.mxu0 0.0
        %431 = vmatprep.subr.mxu0 0.0
        %432 = vmatpush2.msra.mxu0 0.0
        %433 = vmatprep.subr.mxu0 0.0
        %434 = vmatpush2.msra.mxu0 0.0
        %435 = vmatprep.subr.mxu0 0.0
        %436 = vmatpush2.msra.mxu0 0.0
        %437 = vmatprep.subr.mxu0 0.0
        %438 = vmatpush2.msra.mxu0 0.0
        %439 = vmatprep.subr.mxu0 0.0
        %440 = vmatpush2.msra.mxu0 0.0
        %441 = vmatprep.subr.mxu0 0.0
        %442 = vmatpush2.msra.mxu0 0.0
        %443 = vmatprep.subr.mxu0 0.0
        %444 = vmatpush2.msra.mxu0 0.0
        %445 = vmatprep.subr.mxu0 0.0
        %446 = vmatpush2.msra.mxu0 0.0
        %447 = vmatprep.subr.mxu0 0.0
        %448 = vmatpush2.msra.mxu0 0.0
        %449 = vmatprep.subr.mxu0 0.0
        %450 = vmatpush2.msra.mxu0 0.0
        %451 = vmatprep.subr.mxu0 0.0
        %452 = vmatpush2.msra.mxu0 0.0
        %453 = vmatprep.subr.mxu0 0.0
        %454 = vmatpush2.msra.mxu0 0.0
        %455 = vmatprep.subr.mxu0 0.0
        %456 = vmatpush2.msra.mxu0 0.0
        %457 = vmatprep.mubr.f32.mxu0 0.0
        %458 = vmatmul.mubr.f32.gmra.mxu0 %v298
        %v459 = vpop.f32.mrf.mxu0
        %v460 = vadd.f32 0.0, %v459
        %v461 = vpop.f32.mrf.mxu0
        %462 = vmatprep.mubr.f32.mxu0 0.0
        %463 = vmatmul.mubr.f32.gmra.mxu0 %v301
        %v464 = vpop.f32.mrf.mxu0
        %v465 = vadd.f32 0.0, %v464
        %v466 = vpop.f32.mrf.mxu0
        %467 = vmatprep.mubr.f32.mxu0 0.0
        %468 = vmatmul.mubr.f32.gmra.mxu0 %v304
        %v469 = vpop.f32.mrf.mxu0
        %v470 = vadd.f32 0.0, %v469
        %v471 = vpop.f32.mrf.mxu0
        %472 = vmatprep.mubr.f32.mxu0 0.0
        %473 = vmatmul.mubr.f32.gmra.mxu0 %v307
        %v474 = vpop.f32.mrf.mxu0
        %v475 = vadd.f32 0.0, %v474
        %v476 = vpop.f32.mrf.mxu0
        %477 = vmatprep.mubr.f32.mxu0 0.0
        %478 = vmatmul.mubr.f32.gmra.mxu0 %v310
        %v479 = vpop.f32.mrf.mxu0
        %v480 = vadd.f32 0.0, %v479
        %v481 = vpop.f32.mrf.mxu0
        %482 = vmatprep.mubr.f32.mxu0 0.0
        %483 = vmatmul.mubr.f32.gmra.mxu0 %v313
        %v484 = vpop.f32.mrf.mxu0
        %v485 = vadd.f32 0.0, %v484
        %v486 = vpop.f32.mrf.mxu0
        %487 = vmatprep.mubr.f32.mxu0 0.0
        %488 = vmatmul.mubr.f32.gmra.mxu0 %v316
        %v489 = vpop.f32.mrf.mxu0
        %v490 = vadd.f32 0.0, %v489
        %v491 = vpop.f32.mrf.mxu0
        %492 = vmatprep.mubr.f32.mxu0 0.0
        %493 = vmatmul.mubr.f32.gmra.mxu0 %v319
        %v494 = vpop.f32.mrf.mxu0
        %v495 = vadd.f32 0.0, %v494
        %v496 = vpop.f32.mrf.mxu0
        %497 = vmatprep.mubr.f32.mxu0 0.0
        %498 = vmatmul.mubr.f32.gmra.mxu0 %v322
        %v499 = vpop.f32.mrf.mxu0
        %v500 = vadd.f32 0.0, %v499
        %v501 = vpop.f32.mrf.mxu0
        %502 = vmatprep.mubr.f32.mxu0 0.0
        %503 = vmatmul.mubr.f32.gmra.mxu0 %v325
        %v504 = vpop.f32.mrf.mxu0
        %v505 = vadd.f32 0.0, %v504
        %v506 = vpop.f32.mrf.mxu0
        %507 = vmatprep.mubr.f32.mxu0 0.0
        %508 = vmatmul.mubr.f32.gmra.mxu0 %v328
        %v509 = vpop.f32.mrf.mxu0
        %v510 = vadd.f32 0.0, %v509
        %v511 = vpop.f32.mrf.mxu0
        %512 = vmatprep.mubr.f32.mxu0 0.0
        %513 = vmatmul.mubr.f32.gmra.mxu0 %v331
        %v514 = vpop.f32.mrf.mxu0
        %v515 = vadd.f32 0.0, %v514
        %v516 = vpop.f32.mrf.mxu0
        %517 = vmatprep.mubr.f32.mxu0 0.0
        %518 = vmatmul.mubr.f32.gmra.mxu0 %v334
        %v519 = vpop.f32.mrf.mxu0
        %v520 = vadd.f32 0.0, %v519
        %v521 = vpop.f32.mrf.mxu0
        %522 = vmatprep.mubr.f32.mxu0 0.0
        %523 = vmatmul.mubr.f32.gmra.mxu0 %v337
        %v524 = vpop.f32.mrf.mxu0
        %v525 = vadd.f32 0.0, %v524
        %v526 = vpop.f32.mrf.mxu0
        %527 = vmatprep.mubr.f32.mxu0 0.0
        %528 = vmatmul.mubr.f32.gmra.mxu0 %v340
        %v529 = vpop.f32.mrf.mxu0
        %v530 = vadd.f32 0.0, %v529
        %v531 = vpop.f32.mrf.mxu0
        %532 = vmatprep.mubr.f32.mxu0 0.0
        %533 = vmatmul.mubr.f32.gmra.mxu0 %v343
        %v534 = vpop.f32.mrf.mxu0
        %v535 = vadd.f32 0.0, %v534
        %v536 = vpop.f32.mrf.mxu0
        %537 = vmatprep.mubr.f32.mxu0 0.0
        %538 = vmatmul.mubr.f32.gmra.mxu0 %v346
        %v539 = vpop.f32.mrf.mxu0
        %v540 = vadd.f32 0.0, %v539
        %v541 = vpop.f32.mrf.mxu0
        %542 = vmatprep.mubr.f32.mxu0 0.0
        %543 = vmatmul.mubr.f32.gmra.mxu0 %v349
        %v544 = vpop.f32.mrf.mxu0
        %v545 = vadd.f32 0.0, %v544
        %v546 = vpop.f32.mrf.mxu0
        %547 = vmatprep.mubr.f32.mxu0 0.0
        %548 = vmatmul.mubr.f32.gmra.mxu0 %v352
        %v549 = vpop.f32.mrf.mxu0
        %v550 = vadd.f32 0.0, %v549
        %v551 = vpop.f32.mrf.mxu0
        %552 = vmatprep.mubr.f32.mxu0 0.0
        %553 = vmatmul.mubr.f32.gmra.mxu0 %v355
        %v554 = vpop.f32.mrf.mxu0
        %v555 = vadd.f32 0.0, %v554
        %v556 = vpop.f32.mrf.mxu0
        %557 = vmatprep.mubr.f32.mxu0 0.0
        %558 = vmatmul.mubr.f32.gmra.mxu0 %v358
        %v559 = vpop.f32.mrf.mxu0
        %v560 = vadd.f32 0.0, %v559
        %v561 = vpop.f32.mrf.mxu0
        %562 = vmatprep.mubr.f32.mxu0 0.0
        %563 = vmatmul.mubr.f32.gmra.mxu0 %v361
        %v564 = vpop.f32.mrf.mxu0
        %v565 = vadd.f32 0.0, %v564
        %v566 = vpop.f32.mrf.mxu0
        %567 = vmatprep.mubr.f32.mxu0 0.0
        %568 = vmatmul.mubr.f32.gmra.mxu0 %v364
        %v569 = vpop.f32.mrf.mxu0
        %v570 = vadd.f32 0.0, %v569
        %v571 = vpop.f32.mrf.mxu0
        %572 = vmatprep.mubr.f32.mxu0 0.0
        %573 = vmatmul.mubr.f32.gmra.mxu0 %v367
        %v574 = vpop.f32.mrf.mxu0
        %v575 = vadd.f32 0.0, %v574
        %v576 = vpop.f32.mrf.mxu0
        %577 = vmatprep.mubr.f32.mxu0 0.0
        %578 = vmatmul.mubr.f32.gmra.mxu0 %v370
        %v579 = vpop.f32.mrf.mxu0
        %v580 = vadd.f32 0.0, %v579
        %v581 = vpop.f32.mrf.mxu0
        %582 = vmatprep.mubr.f32.mxu0 0.0
        %583 = vmatmul.mubr.f32.gmra.mxu0 %v373
        %v584 = vpop.f32.mrf.mxu0
        %v585 = vadd.f32 0.0, %v584
        %v586 = vpop.f32.mrf.mxu0
        %587 = vmatprep.mubr.f32.mxu0 0.0
        %588 = vmatmul.mubr.f32.gmra.mxu0 %v376
        %v589 = vpop.f32.mrf.mxu0
        %v590 = vadd.f32 0.0, %v589
        %v591 = vpop.f32.mrf.mxu0
        %592 = vmatprep.mubr.f32.mxu0 0.0
        %593 = vmatmul.mubr.f32.gmra.mxu0 %v379
        %v594 = vpop.f32.mrf.mxu0
        %v595 = vadd.f32 0.0, %v594
        %v596 = vpop.f32.mrf.mxu0
        %597 = vmatprep.mubr.f32.mxu0 0.0
        %598 = vmatmul.mubr.f32.gmra.mxu0 %v382
        %v599 = vpop.f32.mrf.mxu0
        %v600 = vadd.f32 0.0, %v599
        %v601 = vpop.f32.mrf.mxu0
        %602 = vmatprep.mubr.f32.mxu0 0.0
        %603 = vmatmul.mubr.f32.gmra.mxu0 %v385
        %v604 = vpop.f32.mrf.mxu0
        %v605 = vadd.f32 0.0, %v604
        %v606 = vpop.f32.mrf.mxu0
        %607 = vmatprep.mubr.f32.mxu0 0.0
        %608 = vmatmul.mubr.f32.gmra.mxu0 %v388
        %v609 = vpop.f32.mrf.mxu0
        %v610 = vadd.f32 0.0, %v609
        %v611 = vpop.f32.mrf.mxu0
        %612 = vmatprep.mubr.f32.mxu0 0.0
        %613 = vmatmul.mubr.f32.gmra.mxu0 %v391
        %v614 = vpop.f32.mrf.mxu0
        %v615 = vadd.f32 0.0, %v614
        %v616 = vpop.f32.mrf.mxu0
        %617 = vdwg.mxu0
        %vm618 = vcmask 64512
        %619 = vst.msk [vmem:[#allocation2] sm:$0xff] %vm618, 0.0
        %620 = vst.msk [vmem:[#allocation2 + $0x8] sm:$0xff] %vm618, 0.0
        %vm621 = vcmask 58368
        %622 = vst.msk [vmem:[#allocation2 + $0x10] sm:$0x3] %vm621, 0.0
        %623 = vst.msk [vmem:[#allocation2 + $0x18] sm:$0xff] %vm618, 0.0
        %624 = vst.msk [vmem:[#allocation2 + $0x20] sm:$0xff] %vm618, 0.0
        %625 = vst.msk [vmem:[#allocation2 + $0x28] sm:$0x3] %vm621, 0.0
        %626 = vst.msk [vmem:[#allocation2 + $0x30] sm:$0xff] %vm618, 0.0
        %627 = vst.msk [vmem:[#allocation2 + $0x38] sm:$0xff] %vm618, 0.0
        %628 = vst.msk [vmem:[#allocation2 + $0x40] sm:$0x3] %vm621, 0.0
        %629 = vst.msk [vmem:[#allocation2 + $0x48] sm:$0xff] %vm618, 0.0
        %630 = vst.msk [vmem:[#allocation2 + $0x50] sm:$0xff] %vm618, 0.0
        %631 = vst.msk [vmem:[#allocation2 + $0x58] sm:$0x3] %vm621, 0.0
        %632 = vst.msk [vmem:[#allocation2 + $0x60] sm:$0xff] %vm618, 0.0
        %633 = vst.msk [vmem:[#allocation2 + $0x68] sm:$0xff] %vm618, 0.0
        %634 = vst.msk [vmem:[#allocation2 + $0x70] sm:$0x3] %vm621, 0.0
        %635 = vst.msk [vmem:[#allocation2 + $0x78] sm:$0xff] %vm618, 0.0
        %636 = vst.msk [vmem:[#allocation2 + $0x80] sm:$0xff] %vm618, 0.0
        %637 = vst.msk [vmem:[#allocation2 + $0x88] sm:$0x3] %vm621, 0.0
        %638 = vst.msk [vmem:[#allocation2 + $0x90] sm:$0xff] %vm618, 0.0
        %639 = vst.msk [vmem:[#allocation2 + $0x98] sm:$0xff] %vm618, 0.0
        %640 = vst.msk [vmem:[#allocation2 + $0xa0] sm:$0x3] %vm621, 0.0
        %641 = vst.msk [vmem:[#allocation2 + $0xa8] sm:$0xff] %vm618, 0.0
        %642 = vst.msk [vmem:[#allocation2 + $0xb0] sm:$0xff] %vm618, 0.0
        %643 = vst.msk [vmem:[#allocation2 + $0xb8] sm:$0x3] %vm621, 0.0
        %644 = vst.msk [vmem:[#allocation2 + $0xc0] sm:$0xff] %vm618, 0.0
        %645 = vst.msk [vmem:[#allocation2 + $0xc8] sm:$0xff] %vm618, 0.0
        %646 = vst.msk [vmem:[#allocation2 + $0xd0] sm:$0x3] %vm621, 0.0
        %647 = vst.msk [vmem:[#allocation2 + $0xd8] sm:$0xff] %vm618, 0.0
        %648 = vst.msk [vmem:[#allocation2 + $0xe0] sm:$0xff] %vm618, 0.0
        %649 = vst.msk [vmem:[#allocation2 + $0xe8] sm:$0x3] %vm621, 0.0
        %650 = vst.msk [vmem:[#allocation2 + $0xf0] sm:$0xff] %vm618, 0.0
        %651 = vst.msk [vmem:[#allocation2 + $0xf8] sm:$0xff] %vm618, 0.0
        %652 = vst.msk [vmem:[#allocation2 + $0x100] sm:$0x3] %vm621, 0.0
        %653 = vst.msk [vmem:[#allocation2 + $0x108] sm:$0xff] %vm618, 0.0
        %654 = vst.msk [vmem:[#allocation2 + $0x110] sm:$0xff] %vm618, 0.0
        %655 = vst.msk [vmem:[#allocation2 + $0x118] sm:$0x3] %vm621, 0.0
        %656 = vst.msk [vmem:[#allocation2 + $0x120] sm:$0xff] %vm618, 0.0
        %657 = vst.msk [vmem:[#allocation2 + $0x128] sm:$0xff] %vm618, 0.0
        %658 = vst.msk [vmem:[#allocation2 + $0x130] sm:$0x3] %vm621, 0.0
        %659 = vst.msk [vmem:[#allocation2 + $0x138] sm:$0xff] %vm618, 0.0
        %660 = vst.msk [vmem:[#allocation2 + $0x140] sm:$0xff] %vm618, 0.0
        %661 = vst.msk [vmem:[#allocation2 + $0x148] sm:$0x3] %vm621, 0.0
        %662 = vst.msk [vmem:[#allocation2 + $0x150] sm:$0xff] %vm618, 0.0
        %663 = vst.msk [vmem:[#allocation2 + $0x158] sm:$0xff] %vm618, 0.0
        %664 = vst.msk [vmem:[#allocation2 + $0x160] sm:$0x3] %vm621, 0.0
        %665 = vst.msk [vmem:[#allocation2 + $0x168] sm:$0xff] %vm618, 0.0
        %666 = vst.msk [vmem:[#allocation2 + $0x170] sm:$0xff] %vm618, 0.0
        %667 = vst.msk [vmem:[#allocation2 + $0x178] sm:$0x3] %vm621, 0.0
        %668 = vst.msk [vmem:[#allocation2 + $0x180] sm:$0xff] %vm618, 0.0
        %669 = vst.msk [vmem:[#allocation2 + $0x188] sm:$0xff] %vm618, 0.0
        %670 = vst.msk [vmem:[#allocation2 + $0x190] sm:$0x3] %vm621, 0.0
        %671 = vst.msk [vmem:[#allocation2 + $0x198] sm:$0xff] %vm618, 0.0
        %672 = vst.msk [vmem:[#allocation2 + $0x1a0] sm:$0xff] %vm618, 0.0
        %673 = vst.msk [vmem:[#allocation2 + $0x1a8] sm:$0x3] %vm621, 0.0
        %v674 = vld [vmem:[%s250] sm:$0xff]
        %v675 = vld [vmem:[%s250 + $0x8] sm:$0xff]
        %v676 = vld [vmem:[%s250 + $0x10] sm:$0xff]
        %v677 = vld [vmem:[%s250 + $0x18] sm:$0xff]
        %v678 = vld [vmem:[%s250 + $0x20] sm:$0xff]
        %v679 = vld [vmem:[%s250 + $0x28] sm:$0xff]
        %v680 = vld [vmem:[%s250 + $0x30] sm:$0xff]
        %v681 = vld [vmem:[%s250 + $0x38] sm:$0xff]
        %v682 = vld [vmem:[%s250 + $0x40] sm:$0xff]
        %v683 = vld [vmem:[%s250 + $0x48] sm:$0xff]
        %v684 = vld [vmem:[%s250 + $0x50] sm:$0xff]
        %v685 = vld [vmem:[%s250 + $0x58] sm:$0xff]
        %v686 = vld [vmem:[%s250 + $0x60] sm:$0xff]
        %v687 = vld [vmem:[%s250 + $0x68] sm:$0xff]
        %v688 = vld [vmem:[%s250 + $0x70] sm:$0xff]
        %v689 = vld [vmem:[%s250 + $0x78] sm:$0xff]
        %v690 = vld [vmem:[%s250 + $0x80] sm:$0xff]
        %v691 = vld [vmem:[%s250 + $0x88] sm:$0xff]
        %v692 = vld [vmem:[%s250 + $0x90] sm:$0xff]
        %v693 = vld [vmem:[%s250 + $0x98] sm:$0xff]
        %v694 = vld [vmem:[%s250 + $0xa0] sm:$0xff]
        %v695 = vld [vmem:[%s250 + $0xa8] sm:$0xff]
        %v696 = vld [vmem:[%s250 + $0xb0] sm:$0xff]
        %v697 = vld [vmem:[%s250 + $0xb8] sm:$0xff]
        %v698 = vld [vmem:[%s250 + $0xc0] sm:$0xff]
        %v699 = vld [vmem:[%s250 + $0xc8] sm:$0xff]
        %v700 = vld [vmem:[%s250 + $0xd0] sm:$0xff]
        %v701 = vld [vmem:[%s250 + $0xd8] sm:$0xff]
        %v702 = vld [vmem:[%s250 + $0xe0] sm:$0xff]
        %v703 = vld [vmem:[%s250 + $0xe8] sm:$0xff]
        %v704 = vld [vmem:[%s250 + $0xf0] sm:$0xff]
        %v705 = vld [vmem:[%s250 + $0xf8] sm:$0xff]
        %s706 = scalar_lea.vmem [#allocation2], 24
        %vm707 = vcmask 31744
        %708 = vst.msk [vmem:[%s706 + $0x1] sm:$0xff] %vm707, %v674
        %709 = vst.msk [vmem:[%s706 + $0x9] sm:$0xff] %vm707, %v675
        %710 = vst.msk [vmem:[%s706 + $0x19] sm:$0xff] %vm707, %v676
        %711 = vst.msk [vmem:[%s706 + $0x21] sm:$0xff] %vm707, %v677
        %712 = vst.msk [vmem:[%s706 + $0x31] sm:$0xff] %vm707, %v678
        %713 = vst.msk [vmem:[%s706 + $0x39] sm:$0xff] %vm707, %v679
        %714 = vst.msk [vmem:[%s706 + $0x49] sm:$0xff] %vm707, %v680
        %715 = vst.msk [vmem:[%s706 + $0x51] sm:$0xff] %vm707, %v681
        %716 = vst.msk [vmem:[%s706 + $0x61] sm:$0xff] %vm707, %v682
        %717 = vst.msk [vmem:[%s706 + $0x69] sm:$0xff] %vm707, %v683
        %718 = vst.msk [vmem:[%s706 + $0x79] sm:$0xff] %vm707, %v684
        %719 = vst.msk [vmem:[%s706 + $0x81] sm:$0xff] %vm707, %v685
        %720 = vst.msk [vmem:[%s706 + $0x91] sm:$0xff] %vm707, %v686
        %721 = vst.msk [vmem:[%s706 + $0x99] sm:$0xff] %vm707, %v687
        %722 = vst.msk [vmem:[%s706 + $0xa9] sm:$0xff] %vm707, %v688
        %723 = vst.msk [vmem:[%s706 + $0xb1] sm:$0xff] %vm707, %v689
        %724 = vst.msk [vmem:[%s706 + $0xc1] sm:$0xff] %vm707, %v690
        %725 = vst.msk [vmem:[%s706 + $0xc9] sm:$0xff] %vm707, %v691
        %726 = vst.msk [vmem:[%s706 + $0xd9] sm:$0xff] %vm707, %v692
        %727 = vst.msk [vmem:[%s706 + $0xe1] sm:$0xff] %vm707, %v693
        %728 = vst.msk [vmem:[%s706 + $0xf1] sm:$0xff] %vm707, %v694
        %729 = vst.msk [vmem:[%s706 + $0xf9] sm:$0xff] %vm707, %v695
        %730 = vst.msk [vmem:[%s706 + $0x109] sm:$0xff] %vm707, %v696
        %731 = vst.msk [vmem:[%s706 + $0x111] sm:$0xff] %vm707, %v697
        %732 = vst.msk [vmem:[%s706 + $0x121] sm:$0xff] %vm707, %v698
        %733 = vst.msk [vmem:[%s706 + $0x129] sm:$0xff] %vm707, %v699
        %734 = vst.msk [vmem:[%s706 + $0x139] sm:$0xff] %vm707, %v700
        %735 = vst.msk [vmem:[%s706 + $0x141] sm:$0xff] %vm707, %v701
        %736 = vst.msk [vmem:[%s706 + $0x151] sm:$0xff] %vm707, %v702
        %737 = vst.msk [vmem:[%s706 + $0x159] sm:$0xff] %vm707, %v703
        %738 = vst.msk [vmem:[%s706 + $0x169] sm:$0xff] %vm707, %v704
        %739 = vst.msk [vmem:[%s706 + $0x171] sm:$0xff] %vm707, %v705
        %772 = vrot.lane.b32.xlu0 %v460, 4
        %v773 = vpop.permute.xlu0 %772
        %774 = vrot.lane.b32.xlu0 %v465, 4
        %v775 = vpop.permute.xlu0 %774
        %776 = vrot.lane.b32.xlu0 %v470, 4
        %v777 = vpop.permute.xlu0 %776
        %778 = vrot.lane.b32.xlu0 %v475, 4
        %v779 = vpop.permute.xlu0 %778
        %780 = vrot.lane.b32.xlu0 %v480, 4
        %v781 = vpop.permute.xlu0 %780
        %782 = vrot.lane.b32.xlu0 %v485, 4
        %v783 = vpop.permute.xlu0 %782
        %784 = vrot.lane.b32.xlu0 %v490, 4
        %v785 = vpop.permute.xlu0 %784
        %786 = vrot.lane.b32.xlu0 %v495, 4
        %v787 = vpop.permute.xlu0 %786
        %788 = vrot.lane.b32.xlu0 %v500, 4
        %v789 = vpop.permute.xlu0 %788
        %790 = vrot.lane.b32.xlu0 %v505, 4
        %v791 = vpop.permute.xlu0 %790
        %792 = vrot.lane.b32.xlu0 %v510, 4
        %v793 = vpop.permute.xlu0 %792
        %794 = vrot.lane.b32.xlu0 %v515, 4
        %v795 = vpop.permute.xlu0 %794
        %796 = vrot.lane.b32.xlu0 %v520, 4
        %v797 = vpop.permute.xlu0 %796
        %798 = vrot.lane.b32.xlu0 %v525, 4
        %v799 = vpop.permute.xlu0 %798
        %800 = vrot.lane.b32.xlu0 %v530, 4
        %v801 = vpop.permute.xlu0 %800
        %802 = vrot.lane.b32.xlu0 %v535, 4
        %v803 = vpop.permute.xlu0 %802
        %804 = vrot.lane.b32.xlu0 %v540, 4
        %v805 = vpop.permute.xlu0 %804
        %806 = vrot.lane.b32.xlu0 %v545, 4
        %v807 = vpop.permute.xlu0 %806
        %808 = vrot.lane.b32.xlu0 %v550, 4
        %v809 = vpop.permute.xlu0 %808
        %810 = vrot.lane.b32.xlu0 %v555, 4
        %v811 = vpop.permute.xlu0 %810
        %812 = vrot.lane.b32.xlu0 %v560, 4
        %v813 = vpop.permute.xlu0 %812
        %814 = vrot.lane.b32.xlu0 %v565, 4
        %v815 = vpop.permute.xlu0 %814
        %816 = vrot.lane.b32.xlu0 %v570, 4
        %v817 = vpop.permute.xlu0 %816
        %818 = vrot.lane.b32.xlu0 %v575, 4
        %v819 = vpop.permute.xlu0 %818
        %820 = vrot.lane.b32.xlu0 %v580, 4
        %v821 = vpop.permute.xlu0 %820
        %822 = vrot.lane.b32.xlu0 %v585, 4
        %v823 = vpop.permute.xlu0 %822
        %824 = vrot.lane.b32.xlu0 %v590, 4
        %v825 = vpop.permute.xlu0 %824
        %826 = vrot.lane.b32.xlu0 %v595, 4
        %v827 = vpop.permute.xlu0 %826
        %828 = vrot.lane.b32.xlu0 %v600, 4
        %v829 = vpop.permute.xlu0 %828
        %830 = vrot.lane.b32.xlu0 %v605, 4
        %v831 = vpop.permute.xlu0 %830
        %832 = vrot.lane.b32.xlu0 %v610, 4
        %v833 = vpop.permute.xlu0 %832
        %834 = vrot.lane.b32.xlu0 %v615, 4
        %v835 = vpop.permute.xlu0 %834
        %vm868 = vcmask 64544
        %869 = vst.msk [vmem:[%s706 + $0x1] sm:$0xff] %vm868, %v773
        %870 = vst.msk [vmem:[%s706 + $0x9] sm:$0xff] %vm868, %v775
        %871 = vst.msk [vmem:[%s706 + $0x19] sm:$0xff] %vm868, %v777
        %872 = vst.msk [vmem:[%s706 + $0x21] sm:$0xff] %vm868, %v779
        %873 = vst.msk [vmem:[%s706 + $0x31] sm:$0xff] %vm868, %v781
        %874 = vst.msk [vmem:[%s706 + $0x39] sm:$0xff] %vm868, %v783
        %875 = vst.msk [vmem:[%s706 + $0x49] sm:$0xff] %vm868, %v785
        %876 = vst.msk [vmem:[%s706 + $0x51] sm:$0xff] %vm868, %v787
        %877 = vst.msk [vmem:[%s706 + $0x61] sm:$0xff] %vm868, %v789
        %878 = vst.msk [vmem:[%s706 + $0x69] sm:$0xff] %vm868, %v791
        %879 = vst.msk [vmem:[%s706 + $0x79] sm:$0xff] %vm868, %v793
        %880 = vst.msk [vmem:[%s706 + $0x81] sm:$0xff] %vm868, %v795
        %881 = vst.msk [vmem:[%s706 + $0x91] sm:$0xff] %vm868, %v797
        %882 = vst.msk [vmem:[%s706 + $0x99] sm:$0xff] %vm868, %v799
        %883 = vst.msk [vmem:[%s706 + $0xa9] sm:$0xff] %vm868, %v801
        %884 = vst.msk [vmem:[%s706 + $0xb1] sm:$0xff] %vm868, %v803
        %885 = vst.msk [vmem:[%s706 + $0xc1] sm:$0xff] %vm868, %v805
        %886 = vst.msk [vmem:[%s706 + $0xc9] sm:$0xff] %vm868, %v807
        %887 = vst.msk [vmem:[%s706 + $0xd9] sm:$0xff] %vm868, %v809
        %888 = vst.msk [vmem:[%s706 + $0xe1] sm:$0xff] %vm868, %v811
        %889 = vst.msk [vmem:[%s706 + $0xf1] sm:$0xff] %vm868, %v813
        %890 = vst.msk [vmem:[%s706 + $0xf9] sm:$0xff] %vm868, %v815
        %891 = vst.msk [vmem:[%s706 + $0x109] sm:$0xff] %vm868, %v817
        %892 = vst.msk [vmem:[%s706 + $0x111] sm:$0xff] %vm868, %v819
        %893 = vst.msk [vmem:[%s706 + $0x121] sm:$0xff] %vm868, %v821
        %894 = vst.msk [vmem:[%s706 + $0x129] sm:$0xff] %vm868, %v823
        %895 = vst.msk [vmem:[%s706 + $0x139] sm:$0xff] %vm868, %v825
        %896 = vst.msk [vmem:[%s706 + $0x141] sm:$0xff] %vm868, %v827
        %897 = vst.msk [vmem:[%s706 + $0x151] sm:$0xff] %vm868, %v829
        %898 = vst.msk [vmem:[%s706 + $0x159] sm:$0xff] %vm868, %v831
        %899 = vst.msk [vmem:[%s706 + $0x169] sm:$0xff] %vm868, %v833
        %900 = vst.msk [vmem:[%s706 + $0x171] sm:$0xff] %vm868, %v835
        %v901 = vld [vmem:[#allocation2] sm:$0xff]
        %v902 = vld [vmem:[#allocation2 + $0x8] sm:$0xff]
        %v903 = vld [vmem:[#allocation2 + $0x18] sm:$0xff]
        %v904 = vld [vmem:[#allocation2 + $0x20] sm:$0xff]
        %v905 = vld [vmem:[#allocation2 + $0x30] sm:$0xff]
        %v906 = vld [vmem:[#allocation2 + $0x38] sm:$0xff]
        %v907 = vld [vmem:[#allocation2 + $0x48] sm:$0xff]
        %v908 = vld [vmem:[#allocation2 + $0x50] sm:$0xff]
        %v909 = vld [vmem:[#allocation2 + $0x60] sm:$0xff]
        %v910 = vld [vmem:[#allocation2 + $0x68] sm:$0xff]
        %v911 = vld [vmem:[#allocation2 + $0x78] sm:$0xff]
        %v912 = vld [vmem:[#allocation2 + $0x80] sm:$0xff]
        %v913 = vld [vmem:[#allocation2 + $0x90] sm:$0xff]
        %v914 = vld [vmem:[#allocation2 + $0x98] sm:$0xff]
        %v915 = vld [vmem:[#allocation2 + $0xa8] sm:$0xff]
        %v916 = vld [vmem:[#allocation2 + $0xb0] sm:$0xff]
        %v917 = vld [vmem:[#allocation2 + $0xc0] sm:$0xff]
        %v918 = vld [vmem:[#allocation2 + $0xc8] sm:$0xff]
        %v919 = vld [vmem:[#allocation2 + $0xd8] sm:$0xff]
        %v920 = vld [vmem:[#allocation2 + $0xe0] sm:$0xff]
        %v921 = vld [vmem:[#allocation2 + $0xf0] sm:$0xff]
        %v922 = vld [vmem:[#allocation2 + $0xf8] sm:$0xff]
        %v923 = vld [vmem:[#allocation2 + $0x108] sm:$0xff]
        %v924 = vld [vmem:[#allocation2 + $0x110] sm:$0xff]
        %v925 = vld [vmem:[#allocation2 + $0x120] sm:$0xff]
        %v926 = vld [vmem:[#allocation2 + $0x128] sm:$0xff]
        %v927 = vld [vmem:[#allocation2 + $0x138] sm:$0xff]
        %v928 = vld [vmem:[#allocation2 + $0x140] sm:$0xff]
        %v929 = vld [vmem:[#allocation2 + $0x150] sm:$0xff]
        %v930 = vld [vmem:[#allocation2 + $0x158] sm:$0xff]
        %v931 = vld [vmem:[#allocation2 + $0x168] sm:$0xff]
        %v932 = vld [vmem:[#allocation2 + $0x170] sm:$0xff]
        %933 = vst.msk [vmem:[#allocation3] sm:$0xff] %vm618, %v901
        %934 = vst.msk [vmem:[#allocation3 + $0x8] sm:$0xff] %vm618, %v902
        %935 = vst.msk [vmem:[#allocation3 + $0x10] sm:$0xff] %vm618, %v903
        %936 = vst.msk [vmem:[#allocation3 + $0x18] sm:$0xff] %vm618, %v904
        %937 = vst.msk [vmem:[#allocation3 + $0x20] sm:$0xff] %vm618, %v905
        %938 = vst.msk [vmem:[#allocation3 + $0x28] sm:$0xff] %vm618, %v906
        %939 = vst.msk [vmem:[#allocation3 + $0x30] sm:$0xff] %vm618, %v907
        %940 = vst.msk [vmem:[#allocation3 + $0x38] sm:$0xff] %vm618, %v908
        %941 = vst.msk [vmem:[#allocation3 + $0x40] sm:$0xff] %vm618, %v909
        %942 = vst.msk [vmem:[#allocation3 + $0x48] sm:$0xff] %vm618, %v910
        %943 = vst.msk [vmem:[#allocation3 + $0x50] sm:$0xff] %vm618, %v911
        %944 = vst.msk [vmem:[#allocation3 + $0x58] sm:$0xff] %vm618, %v912
        %945 = vst.msk [vmem:[#allocation3 + $0x60] sm:$0xff] %vm618, %v913
        %946 = vst.msk [vmem:[#allocation3 + $0x68] sm:$0xff] %vm618, %v914
        %947 = vst.msk [vmem:[#allocation3 + $0x70] sm:$0xff] %vm618, %v915
        %948 = vst.msk [vmem:[#allocation3 + $0x78] sm:$0xff] %vm618, %v916
        %949 = vst.msk [vmem:[#allocation3 + $0x80] sm:$0xff] %vm618, %v917
        %950 = vst.msk [vmem:[#allocation3 + $0x88] sm:$0xff] %vm618, %v918
        %951 = vst.msk [vmem:[#allocation3 + $0x90] sm:$0xff] %vm618, %v919
        %952 = vst.msk [vmem:[#allocation3 + $0x98] sm:$0xff] %vm618, %v920
        %953 = vst.msk [vmem:[#allocation3 + $0xa0] sm:$0xff] %vm618, %v921
        %954 = vst.msk [vmem:[#allocation3 + $0xa8] sm:$0xff] %vm618, %v922
        %955 = vst.msk [vmem:[#allocation3 + $0xb0] sm:$0xff] %vm618, %v923
        %956 = vst.msk [vmem:[#allocation3 + $0xb8] sm:$0xff] %vm618, %v924
        %957 = vst.msk [vmem:[#allocation3 + $0xc0] sm:$0xff] %vm618, %v925
        %958 = vst.msk [vmem:[#allocation3 + $0xc8] sm:$0xff] %vm618, %v926
        %959 = vst.msk [vmem:[#allocation3 + $0xd0] sm:$0xff] %vm618, %v927
        %960 = vst.msk [vmem:[#allocation3 + $0xd8] sm:$0xff] %vm618, %v928
        %961 = vst.msk [vmem:[#allocation3 + $0xe0] sm:$0xff] %vm618, %v929
        %962 = vst.msk [vmem:[#allocation3 + $0xe8] sm:$0xff] %vm618, %v930
        %963 = vst.msk [vmem:[#allocation3 + $0xf0] sm:$0xff] %vm618, %v931
        %964 = vst.msk [vmem:[#allocation3 + $0xf8] sm:$0xff] %vm618, %v932
        %v965 = vld [vmem:[#allocation2 + $0x1] sm:$0xff]
        %v966 = vld [vmem:[#allocation2 + $0x9] sm:$0xff]
        %v967 = vld [vmem:[#allocation2 + $0x19] sm:$0xff]
        %v968 = vld [vmem:[#allocation2 + $0x21] sm:$0xff]
        %v969 = vld [vmem:[#allocation2 + $0x31] sm:$0xff]
        %v970 = vld [vmem:[#allocation2 + $0x39] sm:$0xff]
        %v971 = vld [vmem:[#allocation2 + $0x49] sm:$0xff]
        %v972 = vld [vmem:[#allocation2 + $0x51] sm:$0xff]
        %v973 = vld [vmem:[#allocation2 + $0x61] sm:$0xff]
        %v974 = vld [vmem:[#allocation2 + $0x69] sm:$0xff]
        %v975 = vld [vmem:[#allocation2 + $0x79] sm:$0xff]
        %v976 = vld [vmem:[#allocation2 + $0x81] sm:$0xff]
        %v977 = vld [vmem:[#allocation2 + $0x91] sm:$0xff]
        %v978 = vld [vmem:[#allocation2 + $0x99] sm:$0xff]
        %v979 = vld [vmem:[#allocation2 + $0xa9] sm:$0xff]
        %v980 = vld [vmem:[#allocation2 + $0xb1] sm:$0xff]
        %v981 = vld [vmem:[#allocation2 + $0xc1] sm:$0xff]
        %v982 = vld [vmem:[#allocation2 + $0xc9] sm:$0xff]
        %v983 = vld [vmem:[#allocation2 + $0xd9] sm:$0xff]
        %v984 = vld [vmem:[#allocation2 + $0xe1] sm:$0xff]
        %v985 = vld [vmem:[#allocation2 + $0xf1] sm:$0xff]
        %v986 = vld [vmem:[#allocation2 + $0xf9] sm:$0xff]
        %v987 = vld [vmem:[#allocation2 + $0x109] sm:$0xff]
        %v988 = vld [vmem:[#allocation2 + $0x111] sm:$0xff]
        %v989 = vld [vmem:[#allocation2 + $0x121] sm:$0xff]
        %v990 = vld [vmem:[#allocation2 + $0x129] sm:$0xff]
        %v991 = vld [vmem:[#allocation2 + $0x139] sm:$0xff]
        %v992 = vld [vmem:[#allocation2 + $0x141] sm:$0xff]
        %v993 = vld [vmem:[#allocation2 + $0x151] sm:$0xff]
        %v994 = vld [vmem:[#allocation2 + $0x159] sm:$0xff]
        %v995 = vld [vmem:[#allocation2 + $0x169] sm:$0xff]
        %v996 = vld [vmem:[#allocation2 + $0x171] sm:$0xff]
        %1029 = vrot.lane.b32.xlu0 %v965, 8
        %v1030 = vpop.permute.xlu0 %1029
        %1031 = vrot.lane.b32.xlu0 %v966, 8
        %v1032 = vpop.permute.xlu0 %1031
        %1033 = vrot.lane.b32.xlu0 %v967, 8
        %v1034 = vpop.permute.xlu0 %1033
        %1035 = vrot.lane.b32.xlu0 %v968, 8
        %v1036 = vpop.permute.xlu0 %1035
        %1037 = vrot.lane.b32.xlu0 %v969, 8
        %v1038 = vpop.permute.xlu0 %1037
        %1039 = vrot.lane.b32.xlu0 %v970, 8
        %v1040 = vpop.permute.xlu0 %1039
        %1041 = vrot.lane.b32.xlu0 %v971, 8
        %v1042 = vpop.permute.xlu0 %1041
        %1043 = vrot.lane.b32.xlu0 %v972, 8
        %v1044 = vpop.permute.xlu0 %1043
        %1045 = vrot.lane.b32.xlu0 %v973, 8
        %v1046 = vpop.permute.xlu0 %1045
        %1047 = vrot.lane.b32.xlu0 %v974, 8
        %v1048 = vpop.permute.xlu0 %1047
        %1049 = vrot.lane.b32.xlu0 %v975, 8
        %v1050 = vpop.permute.xlu0 %1049
        %1051 = vrot.lane.b32.xlu0 %v976, 8
        %v1052 = vpop.permute.xlu0 %1051
        %1053 = vrot.lane.b32.xlu0 %v977, 8
        %v1054 = vpop.permute.xlu0 %1053
        %1055 = vrot.lane.b32.xlu0 %v978, 8
        %v1056 = vpop.permute.xlu0 %1055
        %1057 = vrot.lane.b32.xlu0 %v979, 8
        %v1058 = vpop.permute.xlu0 %1057
        %1059 = vrot.lane.b32.xlu0 %v980, 8
        %v1060 = vpop.permute.xlu0 %1059
        %1061 = vrot.lane.b32.xlu0 %v981, 8
        %v1062 = vpop.permute.xlu0 %1061
        %1063 = vrot.lane.b32.xlu0 %v982, 8
        %v1064 = vpop.permute.xlu0 %1063
        %1065 = vrot.lane.b32.xlu0 %v983, 8
        %v1066 = vpop.permute.xlu0 %1065
        %1067 = vrot.lane.b32.xlu0 %v984, 8
        %v1068 = vpop.permute.xlu0 %1067
        %1069 = vrot.lane.b32.xlu0 %v985, 8
        %v1070 = vpop.permute.xlu0 %1069
        %1071 = vrot.lane.b32.xlu0 %v986, 8
        %v1072 = vpop.permute.xlu0 %1071
        %1073 = vrot.lane.b32.xlu0 %v987, 8
        %v1074 = vpop.permute.xlu0 %1073
        %1075 = vrot.lane.b32.xlu0 %v988, 8
        %v1076 = vpop.permute.xlu0 %1075
        %1077 = vrot.lane.b32.xlu0 %v989, 8
        %v1078 = vpop.permute.xlu0 %1077
        %1079 = vrot.lane.b32.xlu0 %v990, 8
        %v1080 = vpop.permute.xlu0 %1079
        %1081 = vrot.lane.b32.xlu0 %v991, 8
        %v1082 = vpop.permute.xlu0 %1081
        %1083 = vrot.lane.b32.xlu0 %v992, 8
        %v1084 = vpop.permute.xlu0 %1083
        %1085 = vrot.lane.b32.xlu0 %v993, 8
        %v1086 = vpop.permute.xlu0 %1085
        %1087 = vrot.lane.b32.xlu0 %v994, 8
        %v1088 = vpop.permute.xlu0 %1087
        %1089 = vrot.lane.b32.xlu0 %v995, 8
        %v1090 = vpop.permute.xlu0 %1089
        %1091 = vrot.lane.b32.xlu0 %v996, 8
        %v1092 = vpop.permute.xlu0 %1091
        %vm1125 = vcmask 130112
        %1126 = vst.msk [vmem:[#allocation3] sm:$0xff] %vm1125, %v1030
        %1127 = vst.msk [vmem:[#allocation3 + $0x8] sm:$0xff] %vm1125, %v1032
        %1128 = vst.msk [vmem:[#allocation3 + $0x10] sm:$0xff] %vm1125, %v1034
        %1129 = vst.msk [vmem:[#allocation3 + $0x18] sm:$0xff] %vm1125, %v1036
        %1130 = vst.msk [vmem:[#allocation3 + $0x20] sm:$0xff] %vm1125, %v1038
        %1131 = vst.msk [vmem:[#allocation3 + $0x28] sm:$0xff] %vm1125, %v1040
        %1132 = vst.msk [vmem:[#allocation3 + $0x30] sm:$0xff] %vm1125, %v1042
        %1133 = vst.msk [vmem:[#allocation3 + $0x38] sm:$0xff] %vm1125, %v1044
        %1134 = vst.msk [vmem:[#allocation3 + $0x40] sm:$0xff] %vm1125, %v1046
        %1135 = vst.msk [vmem:[#allocation3 + $0x48] sm:$0xff] %vm1125, %v1048
        %1136 = vst.msk [vmem:[#allocation3 + $0x50] sm:$0xff] %vm1125, %v1050
        %1137 = vst.msk [vmem:[#allocation3 + $0x58] sm:$0xff] %vm1125, %v1052
        %1138 = vst.msk [vmem:[#allocation3 + $0x60] sm:$0xff] %vm1125, %v1054
        %1139 = vst.msk [vmem:[#allocation3 + $0x68] sm:$0xff] %vm1125, %v1056
        %1140 = vst.msk [vmem:[#allocation3 + $0x70] sm:$0xff] %vm1125, %v1058
        %1141 = vst.msk [vmem:[#allocation3 + $0x78] sm:$0xff] %vm1125, %v1060
        %1142 = vst.msk [vmem:[#allocation3 + $0x80] sm:$0xff] %vm1125, %v1062
        %1143 = vst.msk [vmem:[#allocation3 + $0x88] sm:$0xff] %vm1125, %v1064
        %1144 = vst.msk [vmem:[#allocation3 + $0x90] sm:$0xff] %vm1125, %v1066
        %1145 = vst.msk [vmem:[#allocation3 + $0x98] sm:$0xff] %vm1125, %v1068
        %1146 = vst.msk [vmem:[#allocation3 + $0xa0] sm:$0xff] %vm1125, %v1070
        %1147 = vst.msk [vmem:[#allocation3 + $0xa8] sm:$0xff] %vm1125, %v1072
        %1148 = vst.msk [vmem:[#allocation3 + $0xb0] sm:$0xff] %vm1125, %v1074
        %1149 = vst.msk [vmem:[#allocation3 + $0xb8] sm:$0xff] %vm1125, %v1076
        %1150 = vst.msk [vmem:[#allocation3 + $0xc0] sm:$0xff] %vm1125, %v1078
        %1151 = vst.msk [vmem:[#allocation3 + $0xc8] sm:$0xff] %vm1125, %v1080
        %1152 = vst.msk [vmem:[#allocation3 + $0xd0] sm:$0xff] %vm1125, %v1082
        %1153 = vst.msk [vmem:[#allocation3 + $0xd8] sm:$0xff] %vm1125, %v1084
        %1154 = vst.msk [vmem:[#allocation3 + $0xe0] sm:$0xff] %vm1125, %v1086
        %1155 = vst.msk [vmem:[#allocation3 + $0xe8] sm:$0xff] %vm1125, %v1088
        %1156 = vst.msk [vmem:[#allocation3 + $0xf0] sm:$0xff] %vm1125, %v1090
        %1157 = vst.msk [vmem:[#allocation3 + $0xf8] sm:$0xff] %vm1125, %v1092
        %v1158 = vld [vmem:[#allocation2 + $0x2] sm:$0xff]
        %v1159 = vld [vmem:[#allocation2 + $0xa] sm:$0xff]
        %v1160 = vld [vmem:[#allocation2 + $0x1a] sm:$0xff]
        %v1161 = vld [vmem:[#allocation2 + $0x22] sm:$0xff]
        %v1162 = vld [vmem:[#allocation2 + $0x32] sm:$0xff]
        %v1163 = vld [vmem:[#allocation2 + $0x3a] sm:$0xff]
        %v1164 = vld [vmem:[#allocation2 + $0x4a] sm:$0xff]
        %v1165 = vld [vmem:[#allocation2 + $0x52] sm:$0xff]
        %v1166 = vld [vmem:[#allocation2 + $0x62] sm:$0xff]
        %v1167 = vld [vmem:[#allocation2 + $0x6a] sm:$0xff]
        %v1168 = vld [vmem:[#allocation2 + $0x7a] sm:$0xff]
        %v1169 = vld [vmem:[#allocation2 + $0x82] sm:$0xff]
        %v1170 = vld [vmem:[#allocation2 + $0x92] sm:$0xff]
        %v1171 = vld [vmem:[#allocation2 + $0x9a] sm:$0xff]
        %v1172 = vld [vmem:[#allocation2 + $0xaa] sm:$0xff]
        %v1173 = vld [vmem:[#allocation2 + $0xb2] sm:$0xff]
        %v1174 = vld [vmem:[#allocation2 + $0xc2] sm:$0xff]
        %v1175 = vld [vmem:[#allocation2 + $0xca] sm:$0xff]
        %v1176 = vld [vmem:[#allocation2 + $0xda] sm:$0xff]
        %v1177 = vld [vmem:[#allocation2 + $0xe2] sm:$0xff]
        %v1178 = vld [vmem:[#allocation2 + $0xf2] sm:$0xff]
        %v1179 = vld [vmem:[#allocation2 + $0xfa] sm:$0xff]
        %v1180 = vld [vmem:[#allocation2 + $0x10a] sm:$0xff]
        %v1181 = vld [vmem:[#allocation2 + $0x112] sm:$0xff]
        %v1182 = vld [vmem:[#allocation2 + $0x122] sm:$0xff]
        %v1183 = vld [vmem:[#allocation2 + $0x12a] sm:$0xff]
        %v1184 = vld [vmem:[#allocation2 + $0x13a] sm:$0xff]
        %v1185 = vld [vmem:[#allocation2 + $0x142] sm:$0xff]
        %v1186 = vld [vmem:[#allocation2 + $0x152] sm:$0xff]
        %v1187 = vld [vmem:[#allocation2 + $0x15a] sm:$0xff]
        %v1188 = vld [vmem:[#allocation2 + $0x16a] sm:$0xff]
        %v1189 = vld [vmem:[#allocation2 + $0x172] sm:$0xff]
        %1222 = vrot.lane.b32.xlu0 %v1158, 16
        %v1223 = vpop.permute.xlu0 %1222
        %1224 = vrot.lane.b32.xlu0 %v1159, 16
        %v1225 = vpop.permute.xlu0 %1224
        %1226 = vrot.lane.b32.xlu0 %v1160, 16
        %v1227 = vpop.permute.xlu0 %1226
        %1228 = vrot.lane.b32.xlu0 %v1161, 16
        %v1229 = vpop.permute.xlu0 %1228
        %1230 = vrot.lane.b32.xlu0 %v1162, 16
        %v1231 = vpop.permute.xlu0 %1230
        %1232 = vrot.lane.b32.xlu0 %v1163, 16
        %v1233 = vpop.permute.xlu0 %1232
        %1234 = vrot.lane.b32.xlu0 %v1164, 16
        %v1235 = vpop.permute.xlu0 %1234
        %1236 = vrot.lane.b32.xlu0 %v1165, 16
        %v1237 = vpop.permute.xlu0 %1236
        %1238 = vrot.lane.b32.xlu0 %v1166, 16
        %v1239 = vpop.permute.xlu0 %1238
        %1240 = vrot.lane.b32.xlu0 %v1167, 16
        %v1241 = vpop.permute.xlu0 %1240
        %1242 = vrot.lane.b32.xlu0 %v1168, 16
        %v1243 = vpop.permute.xlu0 %1242
        %1244 = vrot.lane.b32.xlu0 %v1169, 16
        %v1245 = vpop.permute.xlu0 %1244
        %1246 = vrot.lane.b32.xlu0 %v1170, 16
        %v1247 = vpop.permute.xlu0 %1246
        %1248 = vrot.lane.b32.xlu0 %v1171, 16
        %v1249 = vpop.permute.xlu0 %1248
        %1250 = vrot.lane.b32.xlu0 %v1172, 16
        %v1251 = vpop.permute.xlu0 %1250
        %1252 = vrot.lane.b32.xlu0 %v1173, 16
        %v1253 = vpop.permute.xlu0 %1252
        %1254 = vrot.lane.b32.xlu0 %v1174, 16
        %v1255 = vpop.permute.xlu0 %1254
        %1256 = vrot.lane.b32.xlu0 %v1175, 16
        %v1257 = vpop.permute.xlu0 %1256
        %1258 = vrot.lane.b32.xlu0 %v1176, 16
        %v1259 = vpop.permute.xlu0 %1258
        %1260 = vrot.lane.b32.xlu0 %v1177, 16
        %v1261 = vpop.permute.xlu0 %1260
        %1262 = vrot.lane.b32.xlu0 %v1178, 16
        %v1263 = vpop.permute.xlu0 %1262
        %1264 = vrot.lane.b32.xlu0 %v1179, 16
        %v1265 = vpop.permute.xlu0 %1264
        %1266 = vrot.lane.b32.xlu0 %v1180, 16
        %v1267 = vpop.permute.xlu0 %1266
        %1268 = vrot.lane.b32.xlu0 %v1181, 16
        %v1269 = vpop.permute.xlu0 %1268
        %1270 = vrot.lane.b32.xlu0 %v1182, 16
        %v1271 = vpop.permute.xlu0 %1270
        %1272 = vrot.lane.b32.xlu0 %v1183, 16
        %v1273 = vpop.permute.xlu0 %1272
        %1274 = vrot.lane.b32.xlu0 %v1184, 16
        %v1275 = vpop.permute.xlu0 %1274
        %1276 = vrot.lane.b32.xlu0 %v1185, 16
        %v1277 = vpop.permute.xlu0 %1276
        %1278 = vrot.lane.b32.xlu0 %v1186, 16
        %v1279 = vpop.permute.xlu0 %1278
        %1280 = vrot.lane.b32.xlu0 %v1187, 16
        %v1281 = vpop.permute.xlu0 %1280
        %1282 = vrot.lane.b32.xlu0 %v1188, 16
        %v1283 = vpop.permute.xlu0 %1282
        %1284 = vrot.lane.b32.xlu0 %v1189, 16
        %v1285 = vpop.permute.xlu0 %1284
        %vm1318 = vcmask 195712
        %1319 = vst.msk [vmem:[#allocation3] sm:$0xff] %vm1318, %v1223
        %1320 = vst.msk [vmem:[#allocation3 + $0x8] sm:$0xff] %vm1318, %v1225
        %1321 = vst.msk [vmem:[#allocation3 + $0x10] sm:$0xff] %vm1318, %v1227
        %1322 = vst.msk [vmem:[#allocation3 + $0x18] sm:$0xff] %vm1318, %v1229
        %1323 = vst.msk [vmem:[#allocation3 + $0x20] sm:$0xff] %vm1318, %v1231
        %1324 = vst.msk [vmem:[#allocation3 + $0x28] sm:$0xff] %vm1318, %v1233
        %1325 = vst.msk [vmem:[#allocation3 + $0x30] sm:$0xff] %vm1318, %v1235
        %1326 = vst.msk [vmem:[#allocation3 + $0x38] sm:$0xff] %vm1318, %v1237
        %1327 = vst.msk [vmem:[#allocation3 + $0x40] sm:$0xff] %vm1318, %v1239
        %1328 = vst.msk [vmem:[#allocation3 + $0x48] sm:$0xff] %vm1318, %v1241
        %1329 = vst.msk [vmem:[#allocation3 + $0x50] sm:$0xff] %vm1318, %v1243
        %1330 = vst.msk [vmem:[#allocation3 + $0x58] sm:$0xff] %vm1318, %v1245
        %1331 = vst.msk [vmem:[#allocation3 + $0x60] sm:$0xff] %vm1318, %v1247
        %1332 = vst.msk [vmem:[#allocation3 + $0x68] sm:$0xff] %vm1318, %v1249
        %1333 = vst.msk [vmem:[#allocation3 + $0x70] sm:$0xff] %vm1318, %v1251
        %1334 = vst.msk [vmem:[#allocation3 + $0x78] sm:$0xff] %vm1318, %v1253
        %1335 = vst.msk [vmem:[#allocation3 + $0x80] sm:$0xff] %vm1318, %v1255
        %1336 = vst.msk [vmem:[#allocation3 + $0x88] sm:$0xff] %vm1318, %v1257
        %1337 = vst.msk [vmem:[#allocation3 + $0x90] sm:$0xff] %vm1318, %v1259
        %1338 = vst.msk [vmem:[#allocation3 + $0x98] sm:$0xff] %vm1318, %v1261
        %1339 = vst.msk [vmem:[#allocation3 + $0xa0] sm:$0xff] %vm1318, %v1263
        %1340 = vst.msk [vmem:[#allocation3 + $0xa8] sm:$0xff] %vm1318, %v1265
        %1341 = vst.msk [vmem:[#allocation3 + $0xb0] sm:$0xff] %vm1318, %v1267
        %1342 = vst.msk [vmem:[#allocation3 + $0xb8] sm:$0xff] %vm1318, %v1269
        %1343 = vst.msk [vmem:[#allocation3 + $0xc0] sm:$0xff] %vm1318, %v1271
        %1344 = vst.msk [vmem:[#allocation3 + $0xc8] sm:$0xff] %vm1318, %v1273
        %1345 = vst.msk [vmem:[#allocation3 + $0xd0] sm:$0xff] %vm1318, %v1275
        %1346 = vst.msk [vmem:[#allocation3 + $0xd8] sm:$0xff] %vm1318, %v1277
        %1347 = vst.msk [vmem:[#allocation3 + $0xe0] sm:$0xff] %vm1318, %v1279
        %1348 = vst.msk [vmem:[#allocation3 + $0xe8] sm:$0xff] %vm1318, %v1281
        %1349 = vst.msk [vmem:[#allocation3 + $0xf0] sm:$0xff] %vm1318, %v1283
        %1350 = vst.msk [vmem:[#allocation3 + $0xf8] sm:$0xff] %vm1318, %v1285
        %v1351 = vld [vmem:[%s706] sm:$0xff]
        %v1352 = vld [vmem:[%s706 + $0x8] sm:$0xff]
        %v1353 = vld [vmem:[%s706 + $0x18] sm:$0xff]
        %v1354 = vld [vmem:[%s706 + $0x20] sm:$0xff]
        %v1355 = vld [vmem:[%s706 + $0x30] sm:$0xff]
        %v1356 = vld [vmem:[%s706 + $0x38] sm:$0xff]
        %v1357 = vld [vmem:[%s706 + $0x48] sm:$0xff]
        %v1358 = vld [vmem:[%s706 + $0x50] sm:$0xff]
        %v1359 = vld [vmem:[%s706 + $0x60] sm:$0xff]
        %v1360 = vld [vmem:[%s706 + $0x68] sm:$0xff]
        %v1361 = vld [vmem:[%s706 + $0x78] sm:$0xff]
        %v1362 = vld [vmem:[%s706 + $0x80] sm:$0xff]
        %v1363 = vld [vmem:[%s706 + $0x90] sm:$0xff]
        %v1364 = vld [vmem:[%s706 + $0x98] sm:$0xff]
        %v1365 = vld [vmem:[%s706 + $0xa8] sm:$0xff]
        %v1366 = vld [vmem:[%s706 + $0xb0] sm:$0xff]
        %v1367 = vld [vmem:[%s706 + $0xc0] sm:$0xff]
        %v1368 = vld [vmem:[%s706 + $0xc8] sm:$0xff]
        %v1369 = vld [vmem:[%s706 + $0xd8] sm:$0xff]
        %v1370 = vld [vmem:[%s706 + $0xe0] sm:$0xff]
        %v1371 = vld [vmem:[%s706 + $0xf0] sm:$0xff]
        %v1372 = vld [vmem:[%s706 + $0xf8] sm:$0xff]
        %v1373 = vld [vmem:[%s706 + $0x108] sm:$0xff]
        %v1374 = vld [vmem:[%s706 + $0x110] sm:$0xff]
        %v1375 = vld [vmem:[%s706 + $0x120] sm:$0xff]
        %v1376 = vld [vmem:[%s706 + $0x128] sm:$0xff]
        %v1377 = vld [vmem:[%s706 + $0x138] sm:$0xff]
        %v1378 = vld [vmem:[%s706 + $0x140] sm:$0xff]
        %v1379 = vld [vmem:[%s706 + $0x150] sm:$0xff]
        %v1380 = vld [vmem:[%s706 + $0x158] sm:$0xff]
        %v1381 = vld [vmem:[%s706 + $0x168] sm:$0xff]
        %v1382 = vld [vmem:[%s706 + $0x170] sm:$0xff]
        %1415 = vrot.lane.b32.xlu0 %v1351, 24
        %v1416 = vpop.permute.xlu0 %1415
        %1417 = vrot.lane.b32.xlu0 %v1352, 24
        %v1418 = vpop.permute.xlu0 %1417
        %1419 = vrot.lane.b32.xlu0 %v1353, 24
        %v1420 = vpop.permute.xlu0 %1419
        %1421 = vrot.lane.b32.xlu0 %v1354, 24
        %v1422 = vpop.permute.xlu0 %1421
        %1423 = vrot.lane.b32.xlu0 %v1355, 24
        %v1424 = vpop.permute.xlu0 %1423
        %1425 = vrot.lane.b32.xlu0 %v1356, 24
        %v1426 = vpop.permute.xlu0 %1425
        %1427 = vrot.lane.b32.xlu0 %v1357, 24
        %v1428 = vpop.permute.xlu0 %1427
        %1429 = vrot.lane.b32.xlu0 %v1358, 24
        %v1430 = vpop.permute.xlu0 %1429
        %1431 = vrot.lane.b32.xlu0 %v1359, 24
        %v1432 = vpop.permute.xlu0 %1431
        %1433 = vrot.lane.b32.xlu0 %v1360, 24
        %v1434 = vpop.permute.xlu0 %1433
        %1435 = vrot.lane.b32.xlu0 %v1361, 24
        %v1436 = vpop.permute.xlu0 %1435
        %1437 = vrot.lane.b32.xlu0 %v1362, 24
        %v1438 = vpop.permute.xlu0 %1437
        %1439 = vrot.lane.b32.xlu0 %v1363, 24
        %v1440 = vpop.permute.xlu0 %1439
        %1441 = vrot.lane.b32.xlu0 %v1364, 24
        %v1442 = vpop.permute.xlu0 %1441
        %1443 = vrot.lane.b32.xlu0 %v1365, 24
        %v1444 = vpop.permute.xlu0 %1443
        %1445 = vrot.lane.b32.xlu0 %v1366, 24
        %v1446 = vpop.permute.xlu0 %1445
        %1447 = vrot.lane.b32.xlu0 %v1367, 24
        %v1448 = vpop.permute.xlu0 %1447
        %1449 = vrot.lane.b32.xlu0 %v1368, 24
        %v1450 = vpop.permute.xlu0 %1449
        %1451 = vrot.lane.b32.xlu0 %v1369, 24
        %v1452 = vpop.permute.xlu0 %1451
        %1453 = vrot.lane.b32.xlu0 %v1370, 24
        %v1454 = vpop.permute.xlu0 %1453
        %1455 = vrot.lane.b32.xlu0 %v1371, 24
        %v1456 = vpop.permute.xlu0 %1455
        %1457 = vrot.lane.b32.xlu0 %v1372, 24
        %v1458 = vpop.permute.xlu0 %1457
        %1459 = vrot.lane.b32.xlu0 %v1373, 24
        %v1460 = vpop.permute.xlu0 %1459
        %1461 = vrot.lane.b32.xlu0 %v1374, 24
        %v1462 = vpop.permute.xlu0 %1461
        %1463 = vrot.lane.b32.xlu0 %v1375, 24
        %v1464 = vpop.permute.xlu0 %1463
        %1465 = vrot.lane.b32.xlu0 %v1376, 24
        %v1466 = vpop.permute.xlu0 %1465
        %1467 = vrot.lane.b32.xlu0 %v1377, 24
        %v1468 = vpop.permute.xlu0 %1467
        %1469 = vrot.lane.b32.xlu0 %v1378, 24
        %v1470 = vpop.permute.xlu0 %1469
        %1471 = vrot.lane.b32.xlu0 %v1379, 24
        %v1472 = vpop.permute.xlu0 %1471
        %1473 = vrot.lane.b32.xlu0 %v1380, 24
        %v1474 = vpop.permute.xlu0 %1473
        %1475 = vrot.lane.b32.xlu0 %v1381, 24
        %v1476 = vpop.permute.xlu0 %1475
        %1477 = vrot.lane.b32.xlu0 %v1382, 24
        %v1478 = vpop.permute.xlu0 %1477
        %vm1511 = vcmask 261312
        %1512 = vst.msk [vmem:[#allocation3] sm:$0xff] %vm1511, %v1416
        %1513 = vst.msk [vmem:[#allocation3 + $0x8] sm:$0xff] %vm1511, %v1418
        %1514 = vst.msk [vmem:[#allocation3 + $0x10] sm:$0xff] %vm1511, %v1420
        %1515 = vst.msk [vmem:[#allocation3 + $0x18] sm:$0xff] %vm1511, %v1422
        %1516 = vst.msk [vmem:[#allocation3 + $0x20] sm:$0xff] %vm1511, %v1424
        %1517 = vst.msk [vmem:[#allocation3 + $0x28] sm:$0xff] %vm1511, %v1426
        %1518 = vst.msk [vmem:[#allocation3 + $0x30] sm:$0xff] %vm1511, %v1428
        %1519 = vst.msk [vmem:[#allocation3 + $0x38] sm:$0xff] %vm1511, %v1430
        %1520 = vst.msk [vmem:[#allocation3 + $0x40] sm:$0xff] %vm1511, %v1432
        %1521 = vst.msk [vmem:[#allocation3 + $0x48] sm:$0xff] %vm1511, %v1434
        %1522 = vst.msk [vmem:[#allocation3 + $0x50] sm:$0xff] %vm1511, %v1436
        %1523 = vst.msk [vmem:[#allocation3 + $0x58] sm:$0xff] %vm1511, %v1438
        %1524 = vst.msk [vmem:[#allocation3 + $0x60] sm:$0xff] %vm1511, %v1440
        %1525 = vst.msk [vmem:[#allocation3 + $0x68] sm:$0xff] %vm1511, %v1442
        %1526 = vst.msk [vmem:[#allocation3 + $0x70] sm:$0xff] %vm1511, %v1444
        %1527 = vst.msk [vmem:[#allocation3 + $0x78] sm:$0xff] %vm1511, %v1446
        %1528 = vst.msk [vmem:[#allocation3 + $0x80] sm:$0xff] %vm1511, %v1448
        %1529 = vst.msk [vmem:[#allocation3 + $0x88] sm:$0xff] %vm1511, %v1450
        %1530 = vst.msk [vmem:[#allocation3 + $0x90] sm:$0xff] %vm1511, %v1452
        %1531 = vst.msk [vmem:[#allocation3 + $0x98] sm:$0xff] %vm1511, %v1454
        %1532 = vst.msk [vmem:[#allocation3 + $0xa0] sm:$0xff] %vm1511, %v1456
        %1533 = vst.msk [vmem:[#allocation3 + $0xa8] sm:$0xff] %vm1511, %v1458
        %1534 = vst.msk [vmem:[#allocation3 + $0xb0] sm:$0xff] %vm1511, %v1460
        %1535 = vst.msk [vmem:[#allocation3 + $0xb8] sm:$0xff] %vm1511, %v1462
        %1536 = vst.msk [vmem:[#allocation3 + $0xc0] sm:$0xff] %vm1511, %v1464
        %1537 = vst.msk [vmem:[#allocation3 + $0xc8] sm:$0xff] %vm1511, %v1466
        %1538 = vst.msk [vmem:[#allocation3 + $0xd0] sm:$0xff] %vm1511, %v1468
        %1539 = vst.msk [vmem:[#allocation3 + $0xd8] sm:$0xff] %vm1511, %v1470
        %1540 = vst.msk [vmem:[#allocation3 + $0xe0] sm:$0xff] %vm1511, %v1472
        %1541 = vst.msk [vmem:[#allocation3 + $0xe8] sm:$0xff] %vm1511, %v1474
        %1542 = vst.msk [vmem:[#allocation3 + $0xf0] sm:$0xff] %vm1511, %v1476
        %1543 = vst.msk [vmem:[#allocation3 + $0xf8] sm:$0xff] %vm1511, %v1478
        %v1544 = vld [vmem:[%s706 + $0x1] sm:$0xff]
        %v1545 = vld [vmem:[%s706 + $0x9] sm:$0xff]
        %v1546 = vld [vmem:[%s706 + $0x19] sm:$0xff]
        %v1547 = vld [vmem:[%s706 + $0x21] sm:$0xff]
        %v1548 = vld [vmem:[%s706 + $0x31] sm:$0xff]
        %v1549 = vld [vmem:[%s706 + $0x39] sm:$0xff]
        %v1550 = vld [vmem:[%s706 + $0x49] sm:$0xff]
        %v1551 = vld [vmem:[%s706 + $0x51] sm:$0xff]
        %v1552 = vld [vmem:[%s706 + $0x61] sm:$0xff]
        %v1553 = vld [vmem:[%s706 + $0x69] sm:$0xff]
        %v1554 = vld [vmem:[%s706 + $0x79] sm:$0xff]
        %v1555 = vld [vmem:[%s706 + $0x81] sm:$0xff]
        %v1556 = vld [vmem:[%s706 + $0x91] sm:$0xff]
        %v1557 = vld [vmem:[%s706 + $0x99] sm:$0xff]
        %v1558 = vld [vmem:[%s706 + $0xa9] sm:$0xff]
        %v1559 = vld [vmem:[%s706 + $0xb1] sm:$0xff]
        %v1560 = vld [vmem:[%s706 + $0xc1] sm:$0xff]
        %v1561 = vld [vmem:[%s706 + $0xc9] sm:$0xff]
        %v1562 = vld [vmem:[%s706 + $0xd9] sm:$0xff]
        %v1563 = vld [vmem:[%s706 + $0xe1] sm:$0xff]
        %v1564 = vld [vmem:[%s706 + $0xf1] sm:$0xff]
        %v1565 = vld [vmem:[%s706 + $0xf9] sm:$0xff]
        %v1566 = vld [vmem:[%s706 + $0x109] sm:$0xff]
        %v1567 = vld [vmem:[%s706 + $0x111] sm:$0xff]
        %v1568 = vld [vmem:[%s706 + $0x121] sm:$0xff]
        %v1569 = vld [vmem:[%s706 + $0x129] sm:$0xff]
        %v1570 = vld [vmem:[%s706 + $0x139] sm:$0xff]
        %v1571 = vld [vmem:[%s706 + $0x141] sm:$0xff]
        %v1572 = vld [vmem:[%s706 + $0x151] sm:$0xff]
        %v1573 = vld [vmem:[%s706 + $0x159] sm:$0xff]
        %v1574 = vld [vmem:[%s706 + $0x169] sm:$0xff]
        %v1575 = vld [vmem:[%s706 + $0x171] sm:$0xff]
        %1608 = vrot.lane.b32.xlu0 %v1544, 32
        %v1609 = vpop.permute.xlu0 %1608
        %1610 = vrot.lane.b32.xlu0 %v1545, 32
        %v1611 = vpop.permute.xlu0 %1610
        %1612 = vrot.lane.b32.xlu0 %v1546, 32
        %v1613 = vpop.permute.xlu0 %1612
        %1614 = vrot.lane.b32.xlu0 %v1547, 32
        %v1615 = vpop.permute.xlu0 %1614
        %1616 = vrot.lane.b32.xlu0 %v1548, 32
        %v1617 = vpop.permute.xlu0 %1616
        %1618 = vrot.lane.b32.xlu0 %v1549, 32
        %v1619 = vpop.permute.xlu0 %1618
        %1620 = vrot.lane.b32.xlu0 %v1550, 32
        %v1621 = vpop.permute.xlu0 %1620
        %1622 = vrot.lane.b32.xlu0 %v1551, 32
        %v1623 = vpop.permute.xlu0 %1622
        %1624 = vrot.lane.b32.xlu0 %v1552, 32
        %v1625 = vpop.permute.xlu0 %1624
        %1626 = vrot.lane.b32.xlu0 %v1553, 32
        %v1627 = vpop.permute.xlu0 %1626
        %1628 = vrot.lane.b32.xlu0 %v1554, 32
        %v1629 = vpop.permute.xlu0 %1628
        %1630 = vrot.lane.b32.xlu0 %v1555, 32
        %v1631 = vpop.permute.xlu0 %1630
        %1632 = vrot.lane.b32.xlu0 %v1556, 32
        %v1633 = vpop.permute.xlu0 %1632
        %1634 = vrot.lane.b32.xlu0 %v1557, 32
        %v1635 = vpop.permute.xlu0 %1634
        %1636 = vrot.lane.b32.xlu0 %v1558, 32
        %v1637 = vpop.permute.xlu0 %1636
        %1638 = vrot.lane.b32.xlu0 %v1559, 32
        %v1639 = vpop.permute.xlu0 %1638
        %1640 = vrot.lane.b32.xlu0 %v1560, 32
        %v1641 = vpop.permute.xlu0 %1640
        %1642 = vrot.lane.b32.xlu0 %v1561, 32
        %v1643 = vpop.permute.xlu0 %1642
        %1644 = vrot.lane.b32.xlu0 %v1562, 32
        %v1645 = vpop.permute.xlu0 %1644
        %1646 = vrot.lane.b32.xlu0 %v1563, 32
        %v1647 = vpop.permute.xlu0 %1646
        %1648 = vrot.lane.b32.xlu0 %v1564, 32
        %v1649 = vpop.permute.xlu0 %1648
        %1650 = vrot.lane.b32.xlu0 %v1565, 32
        %v1651 = vpop.permute.xlu0 %1650
        %1652 = vrot.lane.b32.xlu0 %v1566, 32
        %v1653 = vpop.permute.xlu0 %1652
        %1654 = vrot.lane.b32.xlu0 %v1567, 32
        %v1655 = vpop.permute.xlu0 %1654
        %1656 = vrot.lane.b32.xlu0 %v1568, 32
        %v1657 = vpop.permute.xlu0 %1656
        %1658 = vrot.lane.b32.xlu0 %v1569, 32
        %v1659 = vpop.permute.xlu0 %1658
        %1660 = vrot.lane.b32.xlu0 %v1570, 32
        %v1661 = vpop.permute.xlu0 %1660
        %1662 = vrot.lane.b32.xlu0 %v1571, 32
        %v1663 = vpop.permute.xlu0 %1662
        %1664 = vrot.lane.b32.xlu0 %v1572, 32
        %v1665 = vpop.permute.xlu0 %1664
        %1666 = vrot.lane.b32.xlu0 %v1573, 32
        %v1667 = vpop.permute.xlu0 %1666
        %1668 = vrot.lane.b32.xlu0 %v1574, 32
        %v1669 = vpop.permute.xlu0 %1668
        %1670 = vrot.lane.b32.xlu0 %v1575, 32
        %v1671 = vpop.permute.xlu0 %1670
        %vm1704 = vcmask 326912
        %1705 = vst.msk [vmem:[#allocation3] sm:$0xff] %vm1704, %v1609
        %1706 = vst.msk [vmem:[#allocation3 + $0x8] sm:$0xff] %vm1704, %v1611
        %1707 = vst.msk [vmem:[#allocation3 + $0x10] sm:$0xff] %vm1704, %v1613
        %1708 = vst.msk [vmem:[#allocation3 + $0x18] sm:$0xff] %vm1704, %v1615
        %1709 = vst.msk [vmem:[#allocation3 + $0x20] sm:$0xff] %vm1704, %v1617
        %1710 = vst.msk [vmem:[#allocation3 + $0x28] sm:$0xff] %vm1704, %v1619
        %1711 = vst.msk [vmem:[#allocation3 + $0x30] sm:$0xff] %vm1704, %v1621
        %1712 = vst.msk [vmem:[#allocation3 + $0x38] sm:$0xff] %vm1704, %v1623
        %1713 = vst.msk [vmem:[#allocation3 + $0x40] sm:$0xff] %vm1704, %v1625
        %1714 = vst.msk [vmem:[#allocation3 + $0x48] sm:$0xff] %vm1704, %v1627
        %1715 = vst.msk [vmem:[#allocation3 + $0x50] sm:$0xff] %vm1704, %v1629
        %1716 = vst.msk [vmem:[#allocation3 + $0x58] sm:$0xff] %vm1704, %v1631
        %1717 = vst.msk [vmem:[#allocation3 + $0x60] sm:$0xff] %vm1704, %v1633
        %1718 = vst.msk [vmem:[#allocation3 + $0x68] sm:$0xff] %vm1704, %v1635
        %1719 = vst.msk [vmem:[#allocation3 + $0x70] sm:$0xff] %vm1704, %v1637
        %1720 = vst.msk [vmem:[#allocation3 + $0x78] sm:$0xff] %vm1704, %v1639
        %1721 = vst.msk [vmem:[#allocation3 + $0x80] sm:$0xff] %vm1704, %v1641
        %1722 = vst.msk [vmem:[#allocation3 + $0x88] sm:$0xff] %vm1704, %v1643
        %1723 = vst.msk [vmem:[#allocation3 + $0x90] sm:$0xff] %vm1704, %v1645
        %1724 = vst.msk [vmem:[#allocation3 + $0x98] sm:$0xff] %vm1704, %v1647
        %1725 = vst.msk [vmem:[#allocation3 + $0xa0] sm:$0xff] %vm1704, %v1649
        %1726 = vst.msk [vmem:[#allocation3 + $0xa8] sm:$0xff] %vm1704, %v1651
        %1727 = vst.msk [vmem:[#allocation3 + $0xb0] sm:$0xff] %vm1704, %v1653
        %1728 = vst.msk [vmem:[#allocation3 + $0xb8] sm:$0xff] %vm1704, %v1655
        %1729 = vst.msk [vmem:[#allocation3 + $0xc0] sm:$0xff] %vm1704, %v1657
        %1730 = vst.msk [vmem:[#allocation3 + $0xc8] sm:$0xff] %vm1704, %v1659
        %1731 = vst.msk [vmem:[#allocation3 + $0xd0] sm:$0xff] %vm1704, %v1661
        %1732 = vst.msk [vmem:[#allocation3 + $0xd8] sm:$0xff] %vm1704, %v1663
        %1733 = vst.msk [vmem:[#allocation3 + $0xe0] sm:$0xff] %vm1704, %v1665
        %1734 = vst.msk [vmem:[#allocation3 + $0xe8] sm:$0xff] %vm1704, %v1667
        %1735 = vst.msk [vmem:[#allocation3 + $0xf0] sm:$0xff] %vm1704, %v1669
        %1736 = vst.msk [vmem:[#allocation3 + $0xf8] sm:$0xff] %vm1704, %v1671
        %v1737 = vld [vmem:[%s706 + $0x2] sm:$0xff]
        %v1738 = vld [vmem:[%s706 + $0xa] sm:$0xff]
        %v1739 = vld [vmem:[%s706 + $0x1a] sm:$0xff]
        %v1740 = vld [vmem:[%s706 + $0x22] sm:$0xff]
        %v1741 = vld [vmem:[%s706 + $0x32] sm:$0xff]
        %v1742 = vld [vmem:[%s706 + $0x3a] sm:$0xff]
        %v1743 = vld [vmem:[%s706 + $0x4a] sm:$0xff]
        %v1744 = vld [vmem:[%s706 + $0x52] sm:$0xff]
        %v1745 = vld [vmem:[%s706 + $0x62] sm:$0xff]
        %v1746 = vld [vmem:[%s706 + $0x6a] sm:$0xff]
        %v1747 = vld [vmem:[%s706 + $0x7a] sm:$0xff]
        %v1748 = vld [vmem:[%s706 + $0x82] sm:$0xff]
        %v1749 = vld [vmem:[%s706 + $0x92] sm:$0xff]
        %v1750 = vld [vmem:[%s706 + $0x9a] sm:$0xff]
        %v1751 = vld [vmem:[%s706 + $0xaa] sm:$0xff]
        %v1752 = vld [vmem:[%s706 + $0xb2] sm:$0xff]
        %v1753 = vld [vmem:[%s706 + $0xc2] sm:$0xff]
        %v1754 = vld [vmem:[%s706 + $0xca] sm:$0xff]
        %v1755 = vld [vmem:[%s706 + $0xda] sm:$0xff]
        %v1756 = vld [vmem:[%s706 + $0xe2] sm:$0xff]
        %v1757 = vld [vmem:[%s706 + $0xf2] sm:$0xff]
        %v1758 = vld [vmem:[%s706 + $0xfa] sm:$0xff]
        %v1759 = vld [vmem:[%s706 + $0x10a] sm:$0xff]
        %v1760 = vld [vmem:[%s706 + $0x112] sm:$0xff]
        %v1761 = vld [vmem:[%s706 + $0x122] sm:$0xff]
        %v1762 = vld [vmem:[%s706 + $0x12a] sm:$0xff]
        %v1763 = vld [vmem:[%s706 + $0x13a] sm:$0xff]
        %v1764 = vld [vmem:[%s706 + $0x142] sm:$0xff]
        %v1765 = vld [vmem:[%s706 + $0x152] sm:$0xff]
        %v1766 = vld [vmem:[%s706 + $0x15a] sm:$0xff]
        %v1767 = vld [vmem:[%s706 + $0x16a] sm:$0xff]
        %v1768 = vld [vmem:[%s706 + $0x172] sm:$0xff]
        %1801 = vrot.lane.b32.xlu0 %v1737, 40
        %v1802 = vpop.permute.xlu0 %1801
        %1803 = vrot.lane.b32.xlu0 %v1738, 40
        %v1804 = vpop.permute.xlu0 %1803
        %1805 = vrot.lane.b32.xlu0 %v1739, 40
        %v1806 = vpop.permute.xlu0 %1805
        %1807 = vrot.lane.b32.xlu0 %v1740, 40
        %v1808 = vpop.permute.xlu0 %1807
        %1809 = vrot.lane.b32.xlu0 %v1741, 40
        %v1810 = vpop.permute.xlu0 %1809
        %1811 = vrot.lane.b32.xlu0 %v1742, 40
        %v1812 = vpop.permute.xlu0 %1811
        %1813 = vrot.lane.b32.xlu0 %v1743, 40
        %v1814 = vpop.permute.xlu0 %1813
        %1815 = vrot.lane.b32.xlu0 %v1744, 40
        %v1816 = vpop.permute.xlu0 %1815
        %1817 = vrot.lane.b32.xlu0 %v1745, 40
        %v1818 = vpop.permute.xlu0 %1817
        %1819 = vrot.lane.b32.xlu0 %v1746, 40
        %v1820 = vpop.permute.xlu0 %1819
        %1821 = vrot.lane.b32.xlu0 %v1747, 40
        %v1822 = vpop.permute.xlu0 %1821
        %1823 = vrot.lane.b32.xlu0 %v1748, 40
        %v1824 = vpop.permute.xlu0 %1823
        %1825 = vrot.lane.b32.xlu0 %v1749, 40
        %v1826 = vpop.permute.xlu0 %1825
        %1827 = vrot.lane.b32.xlu0 %v1750, 40
        %v1828 = vpop.permute.xlu0 %1827
        %1829 = vrot.lane.b32.xlu0 %v1751, 40
        %v1830 = vpop.permute.xlu0 %1829
        %1831 = vrot.lane.b32.xlu0 %v1752, 40
        %v1832 = vpop.permute.xlu0 %1831
        %1833 = vrot.lane.b32.xlu0 %v1753, 40
        %v1834 = vpop.permute.xlu0 %1833
        %1835 = vrot.lane.b32.xlu0 %v1754, 40
        %v1836 = vpop.permute.xlu0 %1835
        %1837 = vrot.lane.b32.xlu0 %v1755, 40
        %v1838 = vpop.permute.xlu0 %1837
        %1839 = vrot.lane.b32.xlu0 %v1756, 40
        %v1840 = vpop.permute.xlu0 %1839
        %1841 = vrot.lane.b32.xlu0 %v1757, 40
        %v1842 = vpop.permute.xlu0 %1841
        %1843 = vrot.lane.b32.xlu0 %v1758, 40
        %v1844 = vpop.permute.xlu0 %1843
        %1845 = vrot.lane.b32.xlu0 %v1759, 40
        %v1846 = vpop.permute.xlu0 %1845
        %1847 = vrot.lane.b32.xlu0 %v1760, 40
        %v1848 = vpop.permute.xlu0 %1847
        %1849 = vrot.lane.b32.xlu0 %v1761, 40
        %v1850 = vpop.permute.xlu0 %1849
        %1851 = vrot.lane.b32.xlu0 %v1762, 40
        %v1852 = vpop.permute.xlu0 %1851
        %1853 = vrot.lane.b32.xlu0 %v1763, 40
        %v1854 = vpop.permute.xlu0 %1853
        %1855 = vrot.lane.b32.xlu0 %v1764, 40
        %v1856 = vpop.permute.xlu0 %1855
        %1857 = vrot.lane.b32.xlu0 %v1765, 40
        %v1858 = vpop.permute.xlu0 %1857
        %1859 = vrot.lane.b32.xlu0 %v1766, 40
        %v1860 = vpop.permute.xlu0 %1859
        %1861 = vrot.lane.b32.xlu0 %v1767, 40
        %v1862 = vpop.permute.xlu0 %1861
        %1863 = vrot.lane.b32.xlu0 %v1768, 40
        %v1864 = vpop.permute.xlu0 %1863
        %vm1897 = vcmask 392512
        %1898 = vst.msk [vmem:[#allocation3] sm:$0xff] %vm1897, %v1802
        %1899 = vst.msk [vmem:[#allocation3 + $0x8] sm:$0xff] %vm1897, %v1804
        %1900 = vst.msk [vmem:[#allocation3 + $0x10] sm:$0xff] %vm1897, %v1806
        %1901 = vst.msk [vmem:[#allocation3 + $0x18] sm:$0xff] %vm1897, %v1808
        %1902 = vst.msk [vmem:[#allocation3 + $0x20] sm:$0xff] %vm1897, %v1810
        %1903 = vst.msk [vmem:[#allocation3 + $0x28] sm:$0xff] %vm1897, %v1812
        %1904 = vst.msk [vmem:[#allocation3 + $0x30] sm:$0xff] %vm1897, %v1814
        %1905 = vst.msk [vmem:[#allocation3 + $0x38] sm:$0xff] %vm1897, %v1816
        %1906 = vst.msk [vmem:[#allocation3 + $0x40] sm:$0xff] %vm1897, %v1818
        %1907 = vst.msk [vmem:[#allocation3 + $0x48] sm:$0xff] %vm1897, %v1820
        %1908 = vst.msk [vmem:[#allocation3 + $0x50] sm:$0xff] %vm1897, %v1822
        %1909 = vst.msk [vmem:[#allocation3 + $0x58] sm:$0xff] %vm1897, %v1824
        %1910 = vst.msk [vmem:[#allocation3 + $0x60] sm:$0xff] %vm1897, %v1826
        %1911 = vst.msk [vmem:[#allocation3 + $0x68] sm:$0xff] %vm1897, %v1828
        %1912 = vst.msk [vmem:[#allocation3 + $0x70] sm:$0xff] %vm1897, %v1830
        %1913 = vst.msk [vmem:[#allocation3 + $0x78] sm:$0xff] %vm1897, %v1832
        %1914 = vst.msk [vmem:[#allocation3 + $0x80] sm:$0xff] %vm1897, %v1834
        %1915 = vst.msk [vmem:[#allocation3 + $0x88] sm:$0xff] %vm1897, %v1836
        %1916 = vst.msk [vmem:[#allocation3 + $0x90] sm:$0xff] %vm1897, %v1838
        %1917 = vst.msk [vmem:[#allocation3 + $0x98] sm:$0xff] %vm1897, %v1840
        %1918 = vst.msk [vmem:[#allocation3 + $0xa0] sm:$0xff] %vm1897, %v1842
        %1919 = vst.msk [vmem:[#allocation3 + $0xa8] sm:$0xff] %vm1897, %v1844
        %1920 = vst.msk [vmem:[#allocation3 + $0xb0] sm:$0xff] %vm1897, %v1846
        %1921 = vst.msk [vmem:[#allocation3 + $0xb8] sm:$0xff] %vm1897, %v1848
        %1922 = vst.msk [vmem:[#allocation3 + $0xc0] sm:$0xff] %vm1897, %v1850
        %1923 = vst.msk [vmem:[#allocation3 + $0xc8] sm:$0xff] %vm1897, %v1852
        %1924 = vst.msk [vmem:[#allocation3 + $0xd0] sm:$0xff] %vm1897, %v1854
        %1925 = vst.msk [vmem:[#allocation3 + $0xd8] sm:$0xff] %vm1897, %v1856
        %1926 = vst.msk [vmem:[#allocation3 + $0xe0] sm:$0xff] %vm1897, %v1858
        %1927 = vst.msk [vmem:[#allocation3 + $0xe8] sm:$0xff] %vm1897, %v1860
        %1928 = vst.msk [vmem:[#allocation3 + $0xf0] sm:$0xff] %vm1897, %v1862
        %1929 = vst.msk [vmem:[#allocation3 + $0xf8] sm:$0xff] %vm1897, %v1864
        %s1930 = scalar_lea.vmem [#allocation2], 48
        %v1931 = vld [vmem:[%s1930] sm:$0xff]
        %v1932 = vld [vmem:[%s1930 + $0x8] sm:$0xff]
        %v1933 = vld [vmem:[%s1930 + $0x18] sm:$0xff]
        %v1934 = vld [vmem:[%s1930 + $0x20] sm:$0xff]
        %v1935 = vld [vmem:[%s1930 + $0x30] sm:$0xff]
        %v1936 = vld [vmem:[%s1930 + $0x38] sm:$0xff]
        %v1937 = vld [vmem:[%s1930 + $0x48] sm:$0xff]
        %v1938 = vld [vmem:[%s1930 + $0x50] sm:$0xff]
        %v1939 = vld [vmem:[%s1930 + $0x60] sm:$0xff]
        %v1940 = vld [vmem:[%s1930 + $0x68] sm:$0xff]
        %v1941 = vld [vmem:[%s1930 + $0x78] sm:$0xff]
        %v1942 = vld [vmem:[%s1930 + $0x80] sm:$0xff]
        %v1943 = vld [vmem:[%s1930 + $0x90] sm:$0xff]
        %v1944 = vld [vmem:[%s1930 + $0x98] sm:$0xff]
        %v1945 = vld [vmem:[%s1930 + $0xa8] sm:$0xff]
        %v1946 = vld [vmem:[%s1930 + $0xb0] sm:$0xff]
        %v1947 = vld [vmem:[%s1930 + $0xc0] sm:$0xff]
        %v1948 = vld [vmem:[%s1930 + $0xc8] sm:$0xff]
        %v1949 = vld [vmem:[%s1930 + $0xd8] sm:$0xff]
        %v1950 = vld [vmem:[%s1930 + $0xe0] sm:$0xff]
        %v1951 = vld [vmem:[%s1930 + $0xf0] sm:$0xff]
        %v1952 = vld [vmem:[%s1930 + $0xf8] sm:$0xff]
        %v1953 = vld [vmem:[%s1930 + $0x108] sm:$0xff]
        %v1954 = vld [vmem:[%s1930 + $0x110] sm:$0xff]
        %v1955 = vld [vmem:[%s1930 + $0x120] sm:$0xff]
        %v1956 = vld [vmem:[%s1930 + $0x128] sm:$0xff]
        %v1957 = vld [vmem:[%s1930 + $0x138] sm:$0xff]
        %v1958 = vld [vmem:[%s1930 + $0x140] sm:$0xff]
        %v1959 = vld [vmem:[%s1930 + $0x150] sm:$0xff]
        %v1960 = vld [vmem:[%s1930 + $0x158] sm:$0xff]
        %v1961 = vld [vmem:[%s1930 + $0x168] sm:$0xff]
        %v1962 = vld [vmem:[%s1930 + $0x170] sm:$0xff]
        %1995 = vrot.lane.b32.xlu0 %v1931, 48
        %v1996 = vpop.permute.xlu0 %1995
        %1997 = vrot.lane.b32.xlu0 %v1932, 48
        %v1998 = vpop.permute.xlu0 %1997
        %1999 = vrot.lane.b32.xlu0 %v1933, 48
        %v2000 = vpop.permute.xlu0 %1999
        %2001 = vrot.lane.b32.xlu0 %v1934, 48
        %v2002 = vpop.permute.xlu0 %2001
        %2003 = vrot.lane.b32.xlu0 %v1935, 48
        %v2004 = vpop.permute.xlu0 %2003
        %2005 = vrot.lane.b32.xlu0 %v1936, 48
        %v2006 = vpop.permute.xlu0 %2005
        %2007 = vrot.lane.b32.xlu0 %v1937, 48
        %v2008 = vpop.permute.xlu0 %2007
        %2009 = vrot.lane.b32.xlu0 %v1938, 48
        %v2010 = vpop.permute.xlu0 %2009
        %2011 = vrot.lane.b32.xlu0 %v1939, 48
        %v2012 = vpop.permute.xlu0 %2011
        %2013 = vrot.lane.b32.xlu0 %v1940, 48
        %v2014 = vpop.permute.xlu0 %2013
        %2015 = vrot.lane.b32.xlu0 %v1941, 48
        %v2016 = vpop.permute.xlu0 %2015
        %2017 = vrot.lane.b32.xlu0 %v1942, 48
        %v2018 = vpop.permute.xlu0 %2017
        %2019 = vrot.lane.b32.xlu0 %v1943, 48
        %v2020 = vpop.permute.xlu0 %2019
        %2021 = vrot.lane.b32.xlu0 %v1944, 48
        %v2022 = vpop.permute.xlu0 %2021
        %2023 = vrot.lane.b32.xlu0 %v1945, 48
        %v2024 = vpop.permute.xlu0 %2023
        %2025 = vrot.lane.b32.xlu0 %v1946, 48
        %v2026 = vpop.permute.xlu0 %2025
        %2027 = vrot.lane.b32.xlu0 %v1947, 48
        %v2028 = vpop.permute.xlu0 %2027
        %2029 = vrot.lane.b32.xlu0 %v1948, 48
        %v2030 = vpop.permute.xlu0 %2029
        %2031 = vrot.lane.b32.xlu0 %v1949, 48
        %v2032 = vpop.permute.xlu0 %2031
        %2033 = vrot.lane.b32.xlu0 %v1950, 48
        %v2034 = vpop.permute.xlu0 %2033
        %2035 = vrot.lane.b32.xlu0 %v1951, 48
        %v2036 = vpop.permute.xlu0 %2035
        %2037 = vrot.lane.b32.xlu0 %v1952, 48
        %v2038 = vpop.permute.xlu0 %2037
        %2039 = vrot.lane.b32.xlu0 %v1953, 48
        %v2040 = vpop.permute.xlu0 %2039
        %2041 = vrot.lane.b32.xlu0 %v1954, 48
        %v2042 = vpop.permute.xlu0 %2041
        %2043 = vrot.lane.b32.xlu0 %v1955, 48
        %v2044 = vpop.permute.xlu0 %2043
        %2045 = vrot.lane.b32.xlu0 %v1956, 48
        %v2046 = vpop.permute.xlu0 %2045
        %2047 = vrot.lane.b32.xlu0 %v1957, 48
        %v2048 = vpop.permute.xlu0 %2047
        %2049 = vrot.lane.b32.xlu0 %v1958, 48
        %v2050 = vpop.permute.xlu0 %2049
        %2051 = vrot.lane.b32.xlu0 %v1959, 48
        %v2052 = vpop.permute.xlu0 %2051
        %2053 = vrot.lane.b32.xlu0 %v1960, 48
        %v2054 = vpop.permute.xlu0 %2053
        %2055 = vrot.lane.b32.xlu0 %v1961, 48
        %v2056 = vpop.permute.xlu0 %2055
        %2057 = vrot.lane.b32.xlu0 %v1962, 48
        %v2058 = vpop.permute.xlu0 %2057
        %vm2091 = vcmask 458112
        %2092 = vst.msk [vmem:[#allocation3] sm:$0xff] %vm2091, %v1996
        %2093 = vst.msk [vmem:[#allocation3 + $0x8] sm:$0xff] %vm2091, %v1998
        %2094 = vst.msk [vmem:[#allocation3 + $0x10] sm:$0xff] %vm2091, %v2000
        %2095 = vst.msk [vmem:[#allocation3 + $0x18] sm:$0xff] %vm2091, %v2002
        %2096 = vst.msk [vmem:[#allocation3 + $0x20] sm:$0xff] %vm2091, %v2004
        %2097 = vst.msk [vmem:[#allocation3 + $0x28] sm:$0xff] %vm2091, %v2006
        %2098 = vst.msk [vmem:[#allocation3 + $0x30] sm:$0xff] %vm2091, %v2008
        %2099 = vst.msk [vmem:[#allocation3 + $0x38] sm:$0xff] %vm2091, %v2010
        %2100 = vst.msk [vmem:[#allocation3 + $0x40] sm:$0xff] %vm2091, %v2012
        %2101 = vst.msk [vmem:[#allocation3 + $0x48] sm:$0xff] %vm2091, %v2014
        %2102 = vst.msk [vmem:[#allocation3 + $0x50] sm:$0xff] %vm2091, %v2016
        %2103 = vst.msk [vmem:[#allocation3 + $0x58] sm:$0xff] %vm2091, %v2018
        %2104 = vst.msk [vmem:[#allocation3 + $0x60] sm:$0xff] %vm2091, %v2020
        %2105 = vst.msk [vmem:[#allocation3 + $0x68] sm:$0xff] %vm2091, %v2022
        %2106 = vst.msk [vmem:[#allocation3 + $0x70] sm:$0xff] %vm2091, %v2024
        %2107 = vst.msk [vmem:[#allocation3 + $0x78] sm:$0xff] %vm2091, %v2026
        %2108 = vst.msk [vmem:[#allocation3 + $0x80] sm:$0xff] %vm2091, %v2028
        %2109 = vst.msk [vmem:[#allocation3 + $0x88] sm:$0xff] %vm2091, %v2030
        %2110 = vst.msk [vmem:[#allocation3 + $0x90] sm:$0xff] %vm2091, %v2032
        %2111 = vst.msk [vmem:[#allocation3 + $0x98] sm:$0xff] %vm2091, %v2034
        %2112 = vst.msk [vmem:[#allocation3 + $0xa0] sm:$0xff] %vm2091, %v2036
        %2113 = vst.msk [vmem:[#allocation3 + $0xa8] sm:$0xff] %vm2091, %v2038
        %2114 = vst.msk [vmem:[#allocation3 + $0xb0] sm:$0xff] %vm2091, %v2040
        %2115 = vst.msk [vmem:[#allocation3 + $0xb8] sm:$0xff] %vm2091, %v2042
        %2116 = vst.msk [vmem:[#allocation3 + $0xc0] sm:$0xff] %vm2091, %v2044
        %2117 = vst.msk [vmem:[#allocation3 + $0xc8] sm:$0xff] %vm2091, %v2046
        %2118 = vst.msk [vmem:[#allocation3 + $0xd0] sm:$0xff] %vm2091, %v2048
        %2119 = vst.msk [vmem:[#allocation3 + $0xd8] sm:$0xff] %vm2091, %v2050
        %2120 = vst.msk [vmem:[#allocation3 + $0xe0] sm:$0xff] %vm2091, %v2052
        %2121 = vst.msk [vmem:[#allocation3 + $0xe8] sm:$0xff] %vm2091, %v2054
        %2122 = vst.msk [vmem:[#allocation3 + $0xf0] sm:$0xff] %vm2091, %v2056
        %2123 = vst.msk [vmem:[#allocation3 + $0xf8] sm:$0xff] %vm2091, %v2058
        %v2124 = vld [vmem:[%s1930 + $0x1] sm:$0xff]
        %v2125 = vld [vmem:[%s1930 + $0x9] sm:$0xff]
        %v2126 = vld [vmem:[%s1930 + $0x19] sm:$0xff]
        %v2127 = vld [vmem:[%s1930 + $0x21] sm:$0xff]
        %v2128 = vld [vmem:[%s1930 + $0x31] sm:$0xff]
        %v2129 = vld [vmem:[%s1930 + $0x39] sm:$0xff]
        %v2130 = vld [vmem:[%s1930 + $0x49] sm:$0xff]
        %v2131 = vld [vmem:[%s1930 + $0x51] sm:$0xff]
        %v2132 = vld [vmem:[%s1930 + $0x61] sm:$0xff]
        %v2133 = vld [vmem:[%s1930 + $0x69] sm:$0xff]
        %v2134 = vld [vmem:[%s1930 + $0x79] sm:$0xff]
        %v2135 = vld [vmem:[%s1930 + $0x81] sm:$0xff]
        %v2136 = vld [vmem:[%s1930 + $0x91] sm:$0xff]
        %v2137 = vld [vmem:[%s1930 + $0x99] sm:$0xff]
        %v2138 = vld [vmem:[%s1930 + $0xa9] sm:$0xff]
        %v2139 = vld [vmem:[%s1930 + $0xb1] sm:$0xff]
        %v2140 = vld [vmem:[%s1930 + $0xc1] sm:$0xff]
        %v2141 = vld [vmem:[%s1930 + $0xc9] sm:$0xff]
        %v2142 = vld [vmem:[%s1930 + $0xd9] sm:$0xff]
        %v2143 = vld [vmem:[%s1930 + $0xe1] sm:$0xff]
        %v2144 = vld [vmem:[%s1930 + $0xf1] sm:$0xff]
        %v2145 = vld [vmem:[%s1930 + $0xf9] sm:$0xff]
        %v2146 = vld [vmem:[%s1930 + $0x109] sm:$0xff]
        %v2147 = vld [vmem:[%s1930 + $0x111] sm:$0xff]
        %v2148 = vld [vmem:[%s1930 + $0x121] sm:$0xff]
        %v2149 = vld [vmem:[%s1930 + $0x129] sm:$0xff]
        %v2150 = vld [vmem:[%s1930 + $0x139] sm:$0xff]
        %v2151 = vld [vmem:[%s1930 + $0x141] sm:$0xff]
        %v2152 = vld [vmem:[%s1930 + $0x151] sm:$0xff]
        %v2153 = vld [vmem:[%s1930 + $0x159] sm:$0xff]
        %v2154 = vld [vmem:[%s1930 + $0x169] sm:$0xff]
        %v2155 = vld [vmem:[%s1930 + $0x171] sm:$0xff]
        %2188 = vrot.lane.b32.xlu0 %v2124, 56
        %v2189 = vpop.permute.xlu0 %2188
        %2190 = vrot.lane.b32.xlu0 %v2125, 56
        %v2191 = vpop.permute.xlu0 %2190
        %2192 = vrot.lane.b32.xlu0 %v2126, 56
        %v2193 = vpop.permute.xlu0 %2192
        %2194 = vrot.lane.b32.xlu0 %v2127, 56
        %v2195 = vpop.permute.xlu0 %2194
        %2196 = vrot.lane.b32.xlu0 %v2128, 56
        %v2197 = vpop.permute.xlu0 %2196
        %2198 = vrot.lane.b32.xlu0 %v2129, 56
        %v2199 = vpop.permute.xlu0 %2198
        %2200 = vrot.lane.b32.xlu0 %v2130, 56
        %v2201 = vpop.permute.xlu0 %2200
        %2202 = vrot.lane.b32.xlu0 %v2131, 56
        %v2203 = vpop.permute.xlu0 %2202
        %2204 = vrot.lane.b32.xlu0 %v2132, 56
        %v2205 = vpop.permute.xlu0 %2204
        %2206 = vrot.lane.b32.xlu0 %v2133, 56
        %v2207 = vpop.permute.xlu0 %2206
        %2208 = vrot.lane.b32.xlu0 %v2134, 56
        %v2209 = vpop.permute.xlu0 %2208
        %2210 = vrot.lane.b32.xlu0 %v2135, 56
        %v2211 = vpop.permute.xlu0 %2210
        %2212 = vrot.lane.b32.xlu0 %v2136, 56
        %v2213 = vpop.permute.xlu0 %2212
        %2214 = vrot.lane.b32.xlu0 %v2137, 56
        %v2215 = vpop.permute.xlu0 %2214
        %2216 = vrot.lane.b32.xlu0 %v2138, 56
        %v2217 = vpop.permute.xlu0 %2216
        %2218 = vrot.lane.b32.xlu0 %v2139, 56
        %v2219 = vpop.permute.xlu0 %2218
        %2220 = vrot.lane.b32.xlu0 %v2140, 56
        %v2221 = vpop.permute.xlu0 %2220
        %2222 = vrot.lane.b32.xlu0 %v2141, 56
        %v2223 = vpop.permute.xlu0 %2222
        %2224 = vrot.lane.b32.xlu0 %v2142, 56
        %v2225 = vpop.permute.xlu0 %2224
        %2226 = vrot.lane.b32.xlu0 %v2143, 56
        %v2227 = vpop.permute.xlu0 %2226
        %2228 = vrot.lane.b32.xlu0 %v2144, 56
        %v2229 = vpop.permute.xlu0 %2228
        %2230 = vrot.lane.b32.xlu0 %v2145, 56
        %v2231 = vpop.permute.xlu0 %2230
        %2232 = vrot.lane.b32.xlu0 %v2146, 56
        %v2233 = vpop.permute.xlu0 %2232
        %2234 = vrot.lane.b32.xlu0 %v2147, 56
        %v2235 = vpop.permute.xlu0 %2234
        %2236 = vrot.lane.b32.xlu0 %v2148, 56
        %v2237 = vpop.permute.xlu0 %2236
        %2238 = vrot.lane.b32.xlu0 %v2149, 56
        %v2239 = vpop.permute.xlu0 %2238
        %2240 = vrot.lane.b32.xlu0 %v2150, 56
        %v2241 = vpop.permute.xlu0 %2240
        %2242 = vrot.lane.b32.xlu0 %v2151, 56
        %v2243 = vpop.permute.xlu0 %2242
        %2244 = vrot.lane.b32.xlu0 %v2152, 56
        %v2245 = vpop.permute.xlu0 %2244
        %2246 = vrot.lane.b32.xlu0 %v2153, 56
        %v2247 = vpop.permute.xlu0 %2246
        %2248 = vrot.lane.b32.xlu0 %v2154, 56
        %v2249 = vpop.permute.xlu0 %2248
        %2250 = vrot.lane.b32.xlu0 %v2155, 56
        %v2251 = vpop.permute.xlu0 %2250
        %vm2284 = vcmask 523712
        %2285 = vst.msk [vmem:[#allocation3] sm:$0xff] %vm2284, %v2189
        %2286 = vst.msk [vmem:[#allocation3 + $0x8] sm:$0xff] %vm2284, %v2191
        %2287 = vst.msk [vmem:[#allocation3 + $0x10] sm:$0xff] %vm2284, %v2193
        %2288 = vst.msk [vmem:[#allocation3 + $0x18] sm:$0xff] %vm2284, %v2195
        %2289 = vst.msk [vmem:[#allocation3 + $0x20] sm:$0xff] %vm2284, %v2197
        %2290 = vst.msk [vmem:[#allocation3 + $0x28] sm:$0xff] %vm2284, %v2199
        %2291 = vst.msk [vmem:[#allocation3 + $0x30] sm:$0xff] %vm2284, %v2201
        %2292 = vst.msk [vmem:[#allocation3 + $0x38] sm:$0xff] %vm2284, %v2203
        %2293 = vst.msk [vmem:[#allocation3 + $0x40] sm:$0xff] %vm2284, %v2205
        %2294 = vst.msk [vmem:[#allocation3 + $0x48] sm:$0xff] %vm2284, %v2207
        %2295 = vst.msk [vmem:[#allocation3 + $0x50] sm:$0xff] %vm2284, %v2209
        %2296 = vst.msk [vmem:[#allocation3 + $0x58] sm:$0xff] %vm2284, %v2211
        %2297 = vst.msk [vmem:[#allocation3 + $0x60] sm:$0xff] %vm2284, %v2213
        %2298 = vst.msk [vmem:[#allocation3 + $0x68] sm:$0xff] %vm2284, %v2215
        %2299 = vst.msk [vmem:[#allocation3 + $0x70] sm:$0xff] %vm2284, %v2217
        %2300 = vst.msk [vmem:[#allocation3 + $0x78] sm:$0xff] %vm2284, %v2219
        %2301 = vst.msk [vmem:[#allocation3 + $0x80] sm:$0xff] %vm2284, %v2221
        %2302 = vst.msk [vmem:[#allocation3 + $0x88] sm:$0xff] %vm2284, %v2223
        %2303 = vst.msk [vmem:[#allocation3 + $0x90] sm:$0xff] %vm2284, %v2225
        %2304 = vst.msk [vmem:[#allocation3 + $0x98] sm:$0xff] %vm2284, %v2227
        %2305 = vst.msk [vmem:[#allocation3 + $0xa0] sm:$0xff] %vm2284, %v2229
        %2306 = vst.msk [vmem:[#allocation3 + $0xa8] sm:$0xff] %vm2284, %v2231
        %2307 = vst.msk [vmem:[#allocation3 + $0xb0] sm:$0xff] %vm2284, %v2233
        %2308 = vst.msk [vmem:[#allocation3 + $0xb8] sm:$0xff] %vm2284, %v2235
        %2309 = vst.msk [vmem:[#allocation3 + $0xc0] sm:$0xff] %vm2284, %v2237
        %2310 = vst.msk [vmem:[#allocation3 + $0xc8] sm:$0xff] %vm2284, %v2239
        %2311 = vst.msk [vmem:[#allocation3 + $0xd0] sm:$0xff] %vm2284, %v2241
        %2312 = vst.msk [vmem:[#allocation3 + $0xd8] sm:$0xff] %vm2284, %v2243
        %2313 = vst.msk [vmem:[#allocation3 + $0xe0] sm:$0xff] %vm2284, %v2245
        %2314 = vst.msk [vmem:[#allocation3 + $0xe8] sm:$0xff] %vm2284, %v2247
        %2315 = vst.msk [vmem:[#allocation3 + $0xf0] sm:$0xff] %vm2284, %v2249
        %2316 = vst.msk [vmem:[#allocation3 + $0xf8] sm:$0xff] %vm2284, %v2251
        %v2317 = vld [vmem:[%s1930 + $0x2] sm:$0xff]
        %v2318 = vld [vmem:[%s1930 + $0xa] sm:$0xff]
        %v2319 = vld [vmem:[%s1930 + $0x1a] sm:$0xff]
        %v2320 = vld [vmem:[%s1930 + $0x22] sm:$0xff]
        %v2321 = vld [vmem:[%s1930 + $0x32] sm:$0xff]
        %v2322 = vld [vmem:[%s1930 + $0x3a] sm:$0xff]
        %v2323 = vld [vmem:[%s1930 + $0x4a] sm:$0xff]
        %v2324 = vld [vmem:[%s1930 + $0x52] sm:$0xff]
        %v2325 = vld [vmem:[%s1930 + $0x62] sm:$0xff]
        %v2326 = vld [vmem:[%s1930 + $0x6a] sm:$0xff]
        %v2327 = vld [vmem:[%s1930 + $0x7a] sm:$0xff]
        %v2328 = vld [vmem:[%s1930 + $0x82] sm:$0xff]
        %v2329 = vld [vmem:[%s1930 + $0x92] sm:$0xff]
        %v2330 = vld [vmem:[%s1930 + $0x9a] sm:$0xff]
        %v2331 = vld [vmem:[%s1930 + $0xaa] sm:$0xff]
        %v2332 = vld [vmem:[%s1930 + $0xb2] sm:$0xff]
        %v2333 = vld [vmem:[%s1930 + $0xc2] sm:$0xff]
        %v2334 = vld [vmem:[%s1930 + $0xca] sm:$0xff]
        %v2335 = vld [vmem:[%s1930 + $0xda] sm:$0xff]
        %v2336 = vld [vmem:[%s1930 + $0xe2] sm:$0xff]
        %v2337 = vld [vmem:[%s1930 + $0xf2] sm:$0xff]
        %v2338 = vld [vmem:[%s1930 + $0xfa] sm:$0xff]
        %v2339 = vld [vmem:[%s1930 + $0x10a] sm:$0xff]
        %v2340 = vld [vmem:[%s1930 + $0x112] sm:$0xff]
        %v2341 = vld [vmem:[%s1930 + $0x122] sm:$0xff]
        %v2342 = vld [vmem:[%s1930 + $0x12a] sm:$0xff]
        %v2343 = vld [vmem:[%s1930 + $0x13a] sm:$0xff]
        %v2344 = vld [vmem:[%s1930 + $0x142] sm:$0xff]
        %v2345 = vld [vmem:[%s1930 + $0x152] sm:$0xff]
        %v2346 = vld [vmem:[%s1930 + $0x15a] sm:$0xff]
        %v2347 = vld [vmem:[%s1930 + $0x16a] sm:$0xff]
        %v2348 = vld [vmem:[%s1930 + $0x172] sm:$0xff]
        %2381 = vrot.lane.b32.xlu0 %v2317, 64
        %v2382 = vpop.permute.xlu0 %2381
        %2383 = vrot.lane.b32.xlu0 %v2318, 64
        %v2384 = vpop.permute.xlu0 %2383
        %2385 = vrot.lane.b32.xlu0 %v2319, 64
        %v2386 = vpop.permute.xlu0 %2385
        %2387 = vrot.lane.b32.xlu0 %v2320, 64
        %v2388 = vpop.permute.xlu0 %2387
        %2389 = vrot.lane.b32.xlu0 %v2321, 64
        %v2390 = vpop.permute.xlu0 %2389
        %2391 = vrot.lane.b32.xlu0 %v2322, 64
        %v2392 = vpop.permute.xlu0 %2391
        %2393 = vrot.lane.b32.xlu0 %v2323, 64
        %v2394 = vpop.permute.xlu0 %2393
        %2395 = vrot.lane.b32.xlu0 %v2324, 64
        %v2396 = vpop.permute.xlu0 %2395
        %2397 = vrot.lane.b32.xlu0 %v2325, 64
        %v2398 = vpop.permute.xlu0 %2397
        %2399 = vrot.lane.b32.xlu0 %v2326, 64
        %v2400 = vpop.permute.xlu0 %2399
        %2401 = vrot.lane.b32.xlu0 %v2327, 64
        %v2402 = vpop.permute.xlu0 %2401
        %2403 = vrot.lane.b32.xlu0 %v2328, 64
        %v2404 = vpop.permute.xlu0 %2403
        %2405 = vrot.lane.b32.xlu0 %v2329, 64
        %v2406 = vpop.permute.xlu0 %2405
        %2407 = vrot.lane.b32.xlu0 %v2330, 64
        %v2408 = vpop.permute.xlu0 %2407
        %2409 = vrot.lane.b32.xlu0 %v2331, 64
        %v2410 = vpop.permute.xlu0 %2409
        %2411 = vrot.lane.b32.xlu0 %v2332, 64
        %v2412 = vpop.permute.xlu0 %2411
        %2413 = vrot.lane.b32.xlu0 %v2333, 64
        %v2414 = vpop.permute.xlu0 %2413
        %2415 = vrot.lane.b32.xlu0 %v2334, 64
        %v2416 = vpop.permute.xlu0 %2415
        %2417 = vrot.lane.b32.xlu0 %v2335, 64
        %v2418 = vpop.permute.xlu0 %2417
        %2419 = vrot.lane.b32.xlu0 %v2336, 64
        %v2420 = vpop.permute.xlu0 %2419
        %2421 = vrot.lane.b32.xlu0 %v2337, 64
        %v2422 = vpop.permute.xlu0 %2421
        %2423 = vrot.lane.b32.xlu0 %v2338, 64
        %v2424 = vpop.permute.xlu0 %2423
        %2425 = vrot.lane.b32.xlu0 %v2339, 64
        %v2426 = vpop.permute.xlu0 %2425
        %2427 = vrot.lane.b32.xlu0 %v2340, 64
        %v2428 = vpop.permute.xlu0 %2427
        %2429 = vrot.lane.b32.xlu0 %v2341, 64
        %v2430 = vpop.permute.xlu0 %2429
        %2431 = vrot.lane.b32.xlu0 %v2342, 64
        %v2432 = vpop.permute.xlu0 %2431
        %2433 = vrot.lane.b32.xlu0 %v2343, 64
        %v2434 = vpop.permute.xlu0 %2433
        %2435 = vrot.lane.b32.xlu0 %v2344, 64
        %v2436 = vpop.permute.xlu0 %2435
        %2437 = vrot.lane.b32.xlu0 %v2345, 64
        %v2438 = vpop.permute.xlu0 %2437
        %2439 = vrot.lane.b32.xlu0 %v2346, 64
        %v2440 = vpop.permute.xlu0 %2439
        %2441 = vrot.lane.b32.xlu0 %v2347, 64
        %v2442 = vpop.permute.xlu0 %2441
        %2443 = vrot.lane.b32.xlu0 %v2348, 64
        %v2444 = vpop.permute.xlu0 %2443
        %vm2477 = vcmask 589312
        %2478 = vst.msk [vmem:[#allocation3] sm:$0xff] %vm2477, %v2382
        %2479 = vst.msk [vmem:[#allocation3 + $0x8] sm:$0xff] %vm2477, %v2384
        %2480 = vst.msk [vmem:[#allocation3 + $0x10] sm:$0xff] %vm2477, %v2386
        %2481 = vst.msk [vmem:[#allocation3 + $0x18] sm:$0xff] %vm2477, %v2388
        %2482 = vst.msk [vmem:[#allocation3 + $0x20] sm:$0xff] %vm2477, %v2390
        %2483 = vst.msk [vmem:[#allocation3 + $0x28] sm:$0xff] %vm2477, %v2392
        %2484 = vst.msk [vmem:[#allocation3 + $0x30] sm:$0xff] %vm2477, %v2394
        %2485 = vst.msk [vmem:[#allocation3 + $0x38] sm:$0xff] %vm2477, %v2396
        %2486 = vst.msk [vmem:[#allocation3 + $0x40] sm:$0xff] %vm2477, %v2398
        %2487 = vst.msk [vmem:[#allocation3 + $0x48] sm:$0xff] %vm2477, %v2400
        %2488 = vst.msk [vmem:[#allocation3 + $0x50] sm:$0xff] %vm2477, %v2402
        %2489 = vst.msk [vmem:[#allocation3 + $0x58] sm:$0xff] %vm2477, %v2404
        %2490 = vst.msk [vmem:[#allocation3 + $0x60] sm:$0xff] %vm2477, %v2406
        %2491 = vst.msk [vmem:[#allocation3 + $0x68] sm:$0xff] %vm2477, %v2408
        %2492 = vst.msk [vmem:[#allocation3 + $0x70] sm:$0xff] %vm2477, %v2410
        %2493 = vst.msk [vmem:[#allocation3 + $0x78] sm:$0xff] %vm2477, %v2412
        %2494 = vst.msk [vmem:[#allocation3 + $0x80] sm:$0xff] %vm2477, %v2414
        %2495 = vst.msk [vmem:[#allocation3 + $0x88] sm:$0xff] %vm2477, %v2416
        %2496 = vst.msk [vmem:[#allocation3 + $0x90] sm:$0xff] %vm2477, %v2418
        %2497 = vst.msk [vmem:[#allocation3 + $0x98] sm:$0xff] %vm2477, %v2420
        %2498 = vst.msk [vmem:[#allocation3 + $0xa0] sm:$0xff] %vm2477, %v2422
        %2499 = vst.msk [vmem:[#allocation3 + $0xa8] sm:$0xff] %vm2477, %v2424
        %2500 = vst.msk [vmem:[#allocation3 + $0xb0] sm:$0xff] %vm2477, %v2426
        %2501 = vst.msk [vmem:[#allocation3 + $0xb8] sm:$0xff] %vm2477, %v2428
        %2502 = vst.msk [vmem:[#allocation3 + $0xc0] sm:$0xff] %vm2477, %v2430
        %2503 = vst.msk [vmem:[#allocation3 + $0xc8] sm:$0xff] %vm2477, %v2432
        %2504 = vst.msk [vmem:[#allocation3 + $0xd0] sm:$0xff] %vm2477, %v2434
        %2505 = vst.msk [vmem:[#allocation3 + $0xd8] sm:$0xff] %vm2477, %v2436
        %2506 = vst.msk [vmem:[#allocation3 + $0xe0] sm:$0xff] %vm2477, %v2438
        %2507 = vst.msk [vmem:[#allocation3 + $0xe8] sm:$0xff] %vm2477, %v2440
        %2508 = vst.msk [vmem:[#allocation3 + $0xf0] sm:$0xff] %vm2477, %v2442
        %2509 = vst.msk [vmem:[#allocation3 + $0xf8] sm:$0xff] %vm2477, %v2444
        %v2510 = vld [vmem:[#allocation3] sm:$0xff]
        %v2511 = vld [vmem:[#allocation3 + $0x8] sm:$0xff]
        %v2512 = vld [vmem:[#allocation3 + $0x10] sm:$0xff]
        %v2513 = vld [vmem:[#allocation3 + $0x18] sm:$0xff]
        %v2514 = vld [vmem:[#allocation3 + $0x20] sm:$0xff]
        %v2515 = vld [vmem:[#allocation3 + $0x28] sm:$0xff]
        %v2516 = vld [vmem:[#allocation3 + $0x30] sm:$0xff]
        %v2517 = vld [vmem:[#allocation3 + $0x38] sm:$0xff]
        %v2518 = vld [vmem:[#allocation3 + $0x40] sm:$0xff]
        %v2519 = vld [vmem:[#allocation3 + $0x48] sm:$0xff]
        %v2520 = vld [vmem:[#allocation3 + $0x50] sm:$0xff]
        %v2521 = vld [vmem:[#allocation3 + $0x58] sm:$0xff]
        %v2522 = vld [vmem:[#allocation3 + $0x60] sm:$0xff]
        %v2523 = vld [vmem:[#allocation3 + $0x68] sm:$0xff]
        %v2524 = vld [vmem:[#allocation3 + $0x70] sm:$0xff]
        %v2525 = vld [vmem:[#allocation3 + $0x78] sm:$0xff]
        %v2526 = vld [vmem:[#allocation3 + $0x80] sm:$0xff]
        %v2527 = vld [vmem:[#allocation3 + $0x88] sm:$0xff]
        %v2528 = vld [vmem:[#allocation3 + $0x90] sm:$0xff]
        %v2529 = vld [vmem:[#allocation3 + $0x98] sm:$0xff]
        %v2530 = vld [vmem:[#allocation3 + $0xa0] sm:$0xff]
        %v2531 = vld [vmem:[#allocation3 + $0xa8] sm:$0xff]
        %v2532 = vld [vmem:[#allocation3 + $0xb0] sm:$0xff]
        %v2533 = vld [vmem:[#allocation3 + $0xb8] sm:$0xff]
        %v2534 = vld [vmem:[#allocation3 + $0xc0] sm:$0xff]
        %v2535 = vld [vmem:[#allocation3 + $0xc8] sm:$0xff]
        %v2536 = vld [vmem:[#allocation3 + $0xd0] sm:$0xff]
        %v2537 = vld [vmem:[#allocation3 + $0xd8] sm:$0xff]
        %v2538 = vld [vmem:[#allocation3 + $0xe0] sm:$0xff]
        %v2539 = vld [vmem:[#allocation3 + $0xe8] sm:$0xff]
        %v2540 = vld [vmem:[#allocation3 + $0xf0] sm:$0xff]
        %v2541 = vld [vmem:[#allocation3 + $0xf8] sm:$0xff]
        %v2542 = vld [vmem:[%s3] sm:$0xff]
        %v2543 = vld [vmem:[%s3 + $0x8] sm:$0xff]
        %v2544 = vld [vmem:[%s3 + $0x10] sm:$0xff]
        %v2545 = vld [vmem:[%s3 + $0x18] sm:$0xff]
        %v2546 = vld [vmem:[%s3 + $0x20] sm:$0xff]
        %v2547 = vld [vmem:[%s3 + $0x28] sm:$0xff]
        %v2548 = vld [vmem:[%s3 + $0x30] sm:$0xff]
        %v2549 = vld [vmem:[%s3 + $0x38] sm:$0xff]
        %v2550 = vld [vmem:[%s3 + $0x40] sm:$0xff]
        %vm2551 = vcmask 588800
        %v2553 = vsel %vm2551, %v2510, 0
        %v2556 = vsel %vm2551, %v2511, 0
        %v2559 = vsel %vm2551, %v2512, 0
        %v2562 = vsel %vm2551, %v2513, 0
        %v2565 = vsel %vm2551, %v2514, 0
        %v2568 = vsel %vm2551, %v2515, 0
        %v2571 = vsel %vm2551, %v2516, 0
        %v2574 = vsel %vm2551, %v2517, 0
        %v2577 = vsel %vm2551, %v2518, 0
        %v2580 = vsel %vm2551, %v2519, 0
        %v2583 = vsel %vm2551, %v2520, 0
        %v2586 = vsel %vm2551, %v2521, 0
        %v2589 = vsel %vm2551, %v2522, 0
        %v2592 = vsel %vm2551, %v2523, 0
        %v2595 = vsel %vm2551, %v2524, 0
        %v2598 = vsel %vm2551, %v2525, 0
        %v2601 = vsel %vm2551, %v2526, 0
        %v2604 = vsel %vm2551, %v2527, 0
        %v2607 = vsel %vm2551, %v2528, 0
        %v2610 = vsel %vm2551, %v2529, 0
        %v2613 = vsel %vm2551, %v2530, 0
        %v2616 = vsel %vm2551, %v2531, 0
        %v2619 = vsel %vm2551, %v2532, 0
        %v2622 = vsel %vm2551, %v2533, 0
        %v2625 = vsel %vm2551, %v2534, 0
        %v2628 = vsel %vm2551, %v2535, 0
        %v2631 = vsel %vm2551, %v2536, 0
        %v2634 = vsel %vm2551, %v2537, 0
        %v2637 = vsel %vm2551, %v2538, 0
        %v2640 = vsel %vm2551, %v2539, 0
        %v2643 = vsel %vm2551, %v2540, 0
        %v2646 = vsel %vm2551, %v2541, 0
        %2648 = vmatprep.subr.mxu0 0.0
        %2649 = vmatpush1.msra.mxu0 0.0
        %2650 = vmatprep.subr.mxu0 0.0
        %2651 = vmatpush1.msra.mxu0 0.0
        %2652 = vmatprep.subr.mxu0 0.0
        %2653 = vmatpush1.msra.mxu0 0.0
        %2654 = vmatprep.subr.mxu0 0.0
        %2655 = vmatpush1.msra.mxu0 0.0
        %2656 = vmatprep.subr.mxu0 0.0
        %2657 = vmatpush1.msra.mxu0 0.0
        %2658 = vmatprep.subr.mxu0 0.0
        %2659 = vmatpush1.msra.mxu0 0.0
        %2660 = vmatprep.subr.mxu0 0.0
        %2661 = vmatpush1.msra.mxu0 0.0
        %2662 = vmatprep.subr.mxu0 0.0
        %2663 = vmatpush1.msra.mxu0 %v2550
        %2664 = vmatprep.subr.mxu0 0.0
        %2665 = vmatpush1.msra.mxu0 %v2549
        %2666 = vmatprep.subr.mxu0 0.0
        %2667 = vmatpush1.msra.mxu0 %v2548
        %2668 = vmatprep.subr.mxu0 0.0
        %2669 = vmatpush1.msra.mxu0 %v2547
        %2670 = vmatprep.subr.mxu0 0.0
        %2671 = vmatpush1.msra.mxu0 %v2546
        %2672 = vmatprep.subr.mxu0 0.0
        %2673 = vmatpush1.msra.mxu0 %v2545
        %2674 = vmatprep.subr.mxu0 0.0
        %2675 = vmatpush1.msra.mxu0 %v2544
        %2676 = vmatprep.subr.mxu0 0.0
        %2677 = vmatpush1.msra.mxu0 %v2543
        %2678 = vmatprep.subr.mxu0 0.0
        %2679 = vmatpush1.msra.mxu0 %v2542
        %2680 = vmatprep.subr.mxu0 0.0
        %2681 = vmatpush2.msra.mxu0 0.0
        %2682 = vmatprep.subr.mxu0 0.0
        %2683 = vmatpush2.msra.mxu0 0.0
        %2684 = vmatprep.subr.mxu0 0.0
        %2685 = vmatpush2.msra.mxu0 0.0
        %2686 = vmatprep.subr.mxu0 0.0
        %2687 = vmatpush2.msra.mxu0 0.0
        %2688 = vmatprep.subr.mxu0 0.0
        %2689 = vmatpush2.msra.mxu0 0.0
        %2690 = vmatprep.subr.mxu0 0.0
        %2691 = vmatpush2.msra.mxu0 0.0
        %2692 = vmatprep.subr.mxu0 0.0
        %2693 = vmatpush2.msra.mxu0 0.0
        %2694 = vmatprep.subr.mxu0 0.0
        %2695 = vmatpush2.msra.mxu0 0.0
        %2696 = vmatprep.subr.mxu0 0.0
        %2697 = vmatpush2.msra.mxu0 0.0
        %2698 = vmatprep.subr.mxu0 0.0
        %2699 = vmatpush2.msra.mxu0 0.0
        %2700 = vmatprep.subr.mxu0 0.0
        %2701 = vmatpush2.msra.mxu0 0.0
        %2702 = vmatprep.subr.mxu0 0.0
        %2703 = vmatpush2.msra.mxu0 0.0
        %2704 = vmatprep.subr.mxu0 0.0
        %2705 = vmatpush2.msra.mxu0 0.0
        %2706 = vmatprep.subr.mxu0 0.0
        %2707 = vmatpush2.msra.mxu0 0.0
        %2708 = vmatprep.subr.mxu0 0.0
        %2709 = vmatpush2.msra.mxu0 0.0
        %2710 = vmatprep.subr.mxu0 0.0
        %2711 = vmatpush2.msra.mxu0 0.0
        %2712 = vmatprep.mubr.f32.mxu0 0.0
        %2713 = vmatmul.mubr.f32.gmra.mxu0 %v2553
        %v2714 = vpop.f32.mrf.mxu0
        %v2715 = vadd.f32 0.0, %v2714
        %v2716 = vpop.f32.mrf.mxu0
        %2717 = vmatprep.mubr.f32.mxu0 0.0
        %2718 = vmatmul.mubr.f32.gmra.mxu0 %v2556
        %v2719 = vpop.f32.mrf.mxu0
        %v2720 = vadd.f32 0.0, %v2719
        %v2721 = vpop.f32.mrf.mxu0
        %2722 = vmatprep.mubr.f32.mxu0 0.0
        %2723 = vmatmul.mubr.f32.gmra.mxu0 %v2559
        %v2724 = vpop.f32.mrf.mxu0
        %v2725 = vadd.f32 0.0, %v2724
        %v2726 = vpop.f32.mrf.mxu0
        %2727 = vmatprep.mubr.f32.mxu0 0.0
        %2728 = vmatmul.mubr.f32.gmra.mxu0 %v2562
        %v2729 = vpop.f32.mrf.mxu0
        %v2730 = vadd.f32 0.0, %v2729
        %v2731 = vpop.f32.mrf.mxu0
        %2732 = vmatprep.mubr.f32.mxu0 0.0
        %2733 = vmatmul.mubr.f32.gmra.mxu0 %v2565
        %v2734 = vpop.f32.mrf.mxu0
        %v2735 = vadd.f32 0.0, %v2734
        %v2736 = vpop.f32.mrf.mxu0
        %2737 = vmatprep.mubr.f32.mxu0 0.0
        %2738 = vmatmul.mubr.f32.gmra.mxu0 %v2568
        %v2739 = vpop.f32.mrf.mxu0
        %v2740 = vadd.f32 0.0, %v2739
        %v2741 = vpop.f32.mrf.mxu0
        %2742 = vmatprep.mubr.f32.mxu0 0.0
        %2743 = vmatmul.mubr.f32.gmra.mxu0 %v2571
        %v2744 = vpop.f32.mrf.mxu0
        %v2745 = vadd.f32 0.0, %v2744
        %v2746 = vpop.f32.mrf.mxu0
        %2747 = vmatprep.mubr.f32.mxu0 0.0
        %2748 = vmatmul.mubr.f32.gmra.mxu0 %v2574
        %v2749 = vpop.f32.mrf.mxu0
        %v2750 = vadd.f32 0.0, %v2749
        %v2751 = vpop.f32.mrf.mxu0
        %2752 = vmatprep.mubr.f32.mxu0 0.0
        %2753 = vmatmul.mubr.f32.gmra.mxu0 %v2577
        %v2754 = vpop.f32.mrf.mxu0
        %v2755 = vadd.f32 0.0, %v2754
        %v2756 = vpop.f32.mrf.mxu0
        %2757 = vmatprep.mubr.f32.mxu0 0.0
        %2758 = vmatmul.mubr.f32.gmra.mxu0 %v2580
        %v2759 = vpop.f32.mrf.mxu0
        %v2760 = vadd.f32 0.0, %v2759
        %v2761 = vpop.f32.mrf.mxu0
        %2762 = vmatprep.mubr.f32.mxu0 0.0
        %2763 = vmatmul.mubr.f32.gmra.mxu0 %v2583
        %v2764 = vpop.f32.mrf.mxu0
        %v2765 = vadd.f32 0.0, %v2764
        %v2766 = vpop.f32.mrf.mxu0
        %2767 = vmatprep.mubr.f32.mxu0 0.0
        %2768 = vmatmul.mubr.f32.gmra.mxu0 %v2586
        %v2769 = vpop.f32.mrf.mxu0
        %v2770 = vadd.f32 0.0, %v2769
        %v2771 = vpop.f32.mrf.mxu0
        %2772 = vmatprep.mubr.f32.mxu0 0.0
        %2773 = vmatmul.mubr.f32.gmra.mxu0 %v2589
        %v2774 = vpop.f32.mrf.mxu0
        %v2775 = vadd.f32 0.0, %v2774
        %v2776 = vpop.f32.mrf.mxu0
        %2777 = vmatprep.mubr.f32.mxu0 0.0
        %2778 = vmatmul.mubr.f32.gmra.mxu0 %v2592
        %v2779 = vpop.f32.mrf.mxu0
        %v2780 = vadd.f32 0.0, %v2779
        %v2781 = vpop.f32.mrf.mxu0
        %2782 = vmatprep.mubr.f32.mxu0 0.0
        %2783 = vmatmul.mubr.f32.gmra.mxu0 %v2595
        %v2784 = vpop.f32.mrf.mxu0
        %v2785 = vadd.f32 0.0, %v2784
        %v2786 = vpop.f32.mrf.mxu0
        %2787 = vmatprep.mubr.f32.mxu0 0.0
        %2788 = vmatmul.mubr.f32.gmra.mxu0 %v2598
        %v2789 = vpop.f32.mrf.mxu0
        %v2790 = vadd.f32 0.0, %v2789
        %v2791 = vpop.f32.mrf.mxu0
        %2792 = vmatprep.mubr.f32.mxu0 0.0
        %2793 = vmatmul.mubr.f32.gmra.mxu0 %v2601
        %v2794 = vpop.f32.mrf.mxu0
        %v2795 = vadd.f32 0.0, %v2794
        %v2796 = vpop.f32.mrf.mxu0
        %2797 = vmatprep.mubr.f32.mxu0 0.0
        %2798 = vmatmul.mubr.f32.gmra.mxu0 %v2604
        %v2799 = vpop.f32.mrf.mxu0
        %v2800 = vadd.f32 0.0, %v2799
        %v2801 = vpop.f32.mrf.mxu0
        %2802 = vmatprep.mubr.f32.mxu0 0.0
        %2803 = vmatmul.mubr.f32.gmra.mxu0 %v2607
        %v2804 = vpop.f32.mrf.mxu0
        %v2805 = vadd.f32 0.0, %v2804
        %v2806 = vpop.f32.mrf.mxu0
        %2807 = vmatprep.mubr.f32.mxu0 0.0
        %2808 = vmatmul.mubr.f32.gmra.mxu0 %v2610
        %v2809 = vpop.f32.mrf.mxu0
        %v2810 = vadd.f32 0.0, %v2809
        %v2811 = vpop.f32.mrf.mxu0
        %2812 = vmatprep.mubr.f32.mxu0 0.0
        %2813 = vmatmul.mubr.f32.gmra.mxu0 %v2613
        %v2814 = vpop.f32.mrf.mxu0
        %v2815 = vadd.f32 0.0, %v2814
        %v2816 = vpop.f32.mrf.mxu0
        %2817 = vmatprep.mubr.f32.mxu0 0.0
        %2818 = vmatmul.mubr.f32.gmra.mxu0 %v2616
        %v2819 = vpop.f32.mrf.mxu0
        %v2820 = vadd.f32 0.0, %v2819
        %v2821 = vpop.f32.mrf.mxu0
        %2822 = vmatprep.mubr.f32.mxu0 0.0
        %2823 = vmatmul.mubr.f32.gmra.mxu0 %v2619
        %v2824 = vpop.f32.mrf.mxu0
        %v2825 = vadd.f32 0.0, %v2824
        %v2826 = vpop.f32.mrf.mxu0
        %2827 = vmatprep.mubr.f32.mxu0 0.0
        %2828 = vmatmul.mubr.f32.gmra.mxu0 %v2622
        %v2829 = vpop.f32.mrf.mxu0
        %v2830 = vadd.f32 0.0, %v2829
        %v2831 = vpop.f32.mrf.mxu0
        %2832 = vmatprep.mubr.f32.mxu0 0.0
        %2833 = vmatmul.mubr.f32.gmra.mxu0 %v2625
        %v2834 = vpop.f32.mrf.mxu0
        %v2835 = vadd.f32 0.0, %v2834
        %v2836 = vpop.f32.mrf.mxu0
        %2837 = vmatprep.mubr.f32.mxu0 0.0
        %2838 = vmatmul.mubr.f32.gmra.mxu0 %v2628
        %v2839 = vpop.f32.mrf.mxu0
        %v2840 = vadd.f32 0.0, %v2839
        %v2841 = vpop.f32.mrf.mxu0
        %2842 = vmatprep.mubr.f32.mxu0 0.0
        %2843 = vmatmul.mubr.f32.gmra.mxu0 %v2631
        %v2844 = vpop.f32.mrf.mxu0
        %v2845 = vadd.f32 0.0, %v2844
        %v2846 = vpop.f32.mrf.mxu0
        %2847 = vmatprep.mubr.f32.mxu0 0.0
        %2848 = vmatmul.mubr.f32.gmra.mxu0 %v2634
        %v2849 = vpop.f32.mrf.mxu0
        %v2850 = vadd.f32 0.0, %v2849
        %v2851 = vpop.f32.mrf.mxu0
        %2852 = vmatprep.mubr.f32.mxu0 0.0
        %2853 = vmatmul.mubr.f32.gmra.mxu0 %v2637
        %v2854 = vpop.f32.mrf.mxu0
        %v2855 = vadd.f32 0.0, %v2854
        %v2856 = vpop.f32.mrf.mxu0
        %2857 = vmatprep.mubr.f32.mxu0 0.0
        %2858 = vmatmul.mubr.f32.gmra.mxu0 %v2640
        %v2859 = vpop.f32.mrf.mxu0
        %v2860 = vadd.f32 0.0, %v2859
        %v2861 = vpop.f32.mrf.mxu0
        %2862 = vmatprep.mubr.f32.mxu0 0.0
        %2863 = vmatmul.mubr.f32.gmra.mxu0 %v2643
        %v2864 = vpop.f32.mrf.mxu0
        %v2865 = vadd.f32 0.0, %v2864
        %v2866 = vpop.f32.mrf.mxu0
        %2867 = vmatprep.mubr.f32.mxu0 0.0
        %2868 = vmatmul.mubr.f32.gmra.mxu0 %v2646
        %v2869 = vpop.f32.mrf.mxu0
        %v2870 = vadd.f32 0.0, %v2869
        %v2871 = vpop.f32.mrf.mxu0
        %2872 = vdwg.mxu0
        %2873 = vst.msk [vmem:[%s255] sm:$0xff] %vm707, %v2715
        %2874 = vst.msk [vmem:[%s255 + $0x8] sm:$0xff] %vm707, %v2720
        %2875 = vst.msk [vmem:[%s255 + $0x10] sm:$0xff] %vm707, %v2725
        %2876 = vst.msk [vmem:[%s255 + $0x18] sm:$0xff] %vm707, %v2730
        %2877 = vst.msk [vmem:[%s255 + $0x20] sm:$0xff] %vm707, %v2735
        %2878 = vst.msk [vmem:[%s255 + $0x28] sm:$0xff] %vm707, %v2740
        %2879 = vst.msk [vmem:[%s255 + $0x30] sm:$0xff] %vm707, %v2745
        %2880 = vst.msk [vmem:[%s255 + $0x38] sm:$0xff] %vm707, %v2750
        %2881 = vst.msk [vmem:[%s255 + $0x40] sm:$0xff] %vm707, %v2755
        %2882 = vst.msk [vmem:[%s255 + $0x48] sm:$0xff] %vm707, %v2760
        %2883 = vst.msk [vmem:[%s255 + $0x50] sm:$0xff] %vm707, %v2765
        %2884 = vst.msk [vmem:[%s255 + $0x58] sm:$0xff] %vm707, %v2770
        %2885 = vst.msk [vmem:[%s255 + $0x60] sm:$0xff] %vm707, %v2775
        %2886 = vst.msk [vmem:[%s255 + $0x68] sm:$0xff] %vm707, %v2780
        %2887 = vst.msk [vmem:[%s255 + $0x70] sm:$0xff] %vm707, %v2785
        %2888 = vst.msk [vmem:[%s255 + $0x78] sm:$0xff] %vm707, %v2790
        %2889 = vst.msk [vmem:[%s255 + $0x80] sm:$0xff] %vm707, %v2795
        %2890 = vst.msk [vmem:[%s255 + $0x88] sm:$0xff] %vm707, %v2800
        %2891 = vst.msk [vmem:[%s255 + $0x90] sm:$0xff] %vm707, %v2805
        %2892 = vst.msk [vmem:[%s255 + $0x98] sm:$0xff] %vm707, %v2810
        %2893 = vst.msk [vmem:[%s255 + $0xa0] sm:$0xff] %vm707, %v2815
        %2894 = vst.msk [vmem:[%s255 + $0xa8] sm:$0xff] %vm707, %v2820
        %2895 = vst.msk [vmem:[%s255 + $0xb0] sm:$0xff] %vm707, %v2825
        %2896 = vst.msk [vmem:[%s255 + $0xb8] sm:$0xff] %vm707, %v2830
        %2897 = vst.msk [vmem:[%s255 + $0xc0] sm:$0xff] %vm707, %v2835
        %2898 = vst.msk [vmem:[%s255 + $0xc8] sm:$0xff] %vm707, %v2840
        %2899 = vst.msk [vmem:[%s255 + $0xd0] sm:$0xff] %vm707, %v2845
        %2900 = vst.msk [vmem:[%s255 + $0xd8] sm:$0xff] %vm707, %v2850
        %2901 = vst.msk [vmem:[%s255 + $0xe0] sm:$0xff] %vm707, %v2855
        %2902 = vst.msk [vmem:[%s255 + $0xe8] sm:$0xff] %vm707, %v2860
        %2903 = vst.msk [vmem:[%s255 + $0xf0] sm:$0xff] %vm707, %v2865
        %2904 = vst.msk [vmem:[%s255 + $0xf8] sm:$0xff] %vm707, %v2870
        %v2905 = vsel %vm707, %v2715, 0.0
        %v2906 = vsel %vm707, %v2720, 0.0
        %v2907 = vadd.f32 %v2905, %v2906
        %v2908 = vsel %vm707, %v2725, 0.0
        %v2909 = vadd.f32 %v2907, %v2908
        %v2910 = vsel %vm707, %v2730, 0.0
        %v2911 = vadd.f32 %v2909, %v2910
        %v2912 = vsel %vm707, %v2735, 0.0
        %v2913 = vadd.f32 %v2911, %v2912
        %v2914 = vsel %vm707, %v2740, 0.0
        %v2915 = vadd.f32 %v2913, %v2914
        %v2916 = vsel %vm707, %v2745, 0.0
        %v2917 = vadd.f32 %v2915, %v2916
        %v2918 = vsel %vm707, %v2750, 0.0
        %v2919 = vadd.f32 %v2917, %v2918
        %v2920 = vsel %vm707, %v2755, 0.0
        %v2921 = vadd.f32 %v2919, %v2920
        %v2922 = vsel %vm707, %v2760, 0.0
        %v2923 = vadd.f32 %v2921, %v2922
        %v2924 = vsel %vm707, %v2765, 0.0
        %v2925 = vadd.f32 %v2923, %v2924
        %v2926 = vsel %vm707, %v2770, 0.0
        %v2927 = vadd.f32 %v2925, %v2926
        %v2928 = vsel %vm707, %v2775, 0.0
        %v2929 = vadd.f32 %v2927, %v2928
        %v2930 = vsel %vm707, %v2780, 0.0
        %v2931 = vadd.f32 %v2929, %v2930
        %v2932 = vsel %vm707, %v2785, 0.0
        %v2933 = vadd.f32 %v2931, %v2932
        %v2934 = vsel %vm707, %v2790, 0.0
        %v2935 = vadd.f32 %v2933, %v2934
        %v2936 = vsel %vm707, %v2795, 0.0
        %v2937 = vadd.f32 %v2935, %v2936
        %v2938 = vsel %vm707, %v2800, 0.0
        %v2939 = vadd.f32 %v2937, %v2938
        %v2940 = vsel %vm707, %v2805, 0.0
        %v2941 = vadd.f32 %v2939, %v2940
        %v2942 = vsel %vm707, %v2810, 0.0
        %v2943 = vadd.f32 %v2941, %v2942
        %v2944 = vsel %vm707, %v2815, 0.0
        %v2945 = vadd.f32 %v2943, %v2944
        %v2946 = vsel %vm707, %v2820, 0.0
        %v2947 = vadd.f32 %v2945, %v2946
        %v2948 = vsel %vm707, %v2825, 0.0
        %v2949 = vadd.f32 %v2947, %v2948
        %v2950 = vsel %vm707, %v2830, 0.0
        %v2951 = vadd.f32 %v2949, %v2950
        %v2952 = vsel %vm707, %v2835, 0.0
        %v2953 = vadd.f32 %v2951, %v2952
        %v2954 = vsel %vm707, %v2840, 0.0
        %v2955 = vadd.f32 %v2953, %v2954
        %v2956 = vsel %vm707, %v2845, 0.0
        %v2957 = vadd.f32 %v2955, %v2956
        %v2958 = vsel %vm707, %v2850, 0.0
        %v2959 = vadd.f32 %v2957, %v2958
        %v2960 = vsel %vm707, %v2855, 0.0
        %v2961 = vadd.f32 %v2959, %v2960
        %v2962 = vsel %vm707, %v2860, 0.0
        %v2963 = vadd.f32 %v2961, %v2962
        %v2964 = vsel %vm707, %v2865, 0.0
        %v2965 = vadd.f32 %v2963, %v2964
        %v2966 = vsel %vm707, %v2870, 0.0
        %v2967 = vadd.f32 %v2965, %v2966
        %v2968 = vrot.slane %v2967, 4
        %v2969 = vadd.f32 %v2967, %v2968
        %v2970 = vrot.slane %v2969, 2
        %v2971 = vadd.f32 %v2969, %v2970
        %v2972 = vrot.slane %v2971, 1
        %v2973 = vadd.f32 %v2971, %v2972
        %vm2974 = vcmask 24576
        %2975 = vst.msk [vmem:[%s240] sm:$0x1] %vm2974, %v2973
        %v2976 = vmul.f32 %v2715, %v2715
        %v2977 = vmul.f32 %v2720, %v2720
        %v2978 = vmul.f32 %v2725, %v2725
        %v2979 = vmul.f32 %v2730, %v2730
        %v2980 = vmul.f32 %v2735, %v2735
        %v2981 = vmul.f32 %v2740, %v2740
        %v2982 = vmul.f32 %v2745, %v2745
        %v2983 = vmul.f32 %v2750, %v2750
        %v2984 = vmul.f32 %v2755, %v2755
        %v2985 = vmul.f32 %v2760, %v2760
        %v2986 = vmul.f32 %v2765, %v2765
        %v2987 = vmul.f32 %v2770, %v2770
        %v2988 = vmul.f32 %v2775, %v2775
        %v2989 = vmul.f32 %v2780, %v2780
        %v2990 = vmul.f32 %v2785, %v2785
        %v2991 = vmul.f32 %v2790, %v2790
        %v2992 = vmul.f32 %v2795, %v2795
        %v2993 = vmul.f32 %v2800, %v2800
        %v2994 = vmul.f32 %v2805, %v2805
        %v2995 = vmul.f32 %v2810, %v2810
        %v2996 = vmul.f32 %v2815, %v2815
        %v2997 = vmul.f32 %v2820, %v2820
        %v2998 = vmul.f32 %v2825, %v2825
        %v2999 = vmul.f32 %v2830, %v2830
        %v3000 = vmul.f32 %v2835, %v2835
        %v3001 = vmul.f32 %v2840, %v2840
        %v3002 = vmul.f32 %v2845, %v2845
        %v3003 = vmul.f32 %v2850, %v2850
        %v3004 = vmul.f32 %v2855, %v2855
        %v3005 = vmul.f32 %v2860, %v2860
        %v3006 = vmul.f32 %v2865, %v2865
        %v3007 = vmul.f32 %v2870, %v2870
        %v3008 = vsel %vm707, %v2976, 0.0
        %v3009 = vsel %vm707, %v2977, 0.0
        %v3010 = vadd.f32 %v3008, %v3009
        %v3011 = vsel %vm707, %v2978, 0.0
        %v3012 = vadd.f32 %v3010, %v3011
        %v3013 = vsel %vm707, %v2979, 0.0
        %v3014 = vadd.f32 %v3012, %v3013
        %v3015 = vsel %vm707, %v2980, 0.0
        %v3016 = vadd.f32 %v3014, %v3015
        %v3017 = vsel %vm707, %v2981, 0.0
        %v3018 = vadd.f32 %v3016, %v3017
        %v3019 = vsel %vm707, %v2982, 0.0
        %v3020 = vadd.f32 %v3018, %v3019
        %v3021 = vsel %vm707, %v2983, 0.0
        %v3022 = vadd.f32 %v3020, %v3021
        %v3023 = vsel %vm707, %v2984, 0.0
        %v3024 = vadd.f32 %v3022, %v3023
        %v3025 = vsel %vm707, %v2985, 0.0
        %v3026 = vadd.f32 %v3024, %v3025
        %v3027 = vsel %vm707, %v2986, 0.0
        %v3028 = vadd.f32 %v3026, %v3027
        %v3029 = vsel %vm707, %v2987, 0.0
        %v3030 = vadd.f32 %v3028, %v3029
        %v3031 = vsel %vm707, %v2988, 0.0
        %v3032 = vadd.f32 %v3030, %v3031
        %v3033 = vsel %vm707, %v2989, 0.0
        %v3034 = vadd.f32 %v3032, %v3033
        %v3035 = vsel %vm707, %v2990, 0.0
        %v3036 = vadd.f32 %v3034, %v3035
        %v3037 = vsel %vm707, %v2991, 0.0
        %v3038 = vadd.f32 %v3036, %v3037
        %v3039 = vsel %vm707, %v2992, 0.0
        %v3040 = vadd.f32 %v3038, %v3039
        %v3041 = vsel %vm707, %v2993, 0.0
        %v3042 = vadd.f32 %v3040, %v3041
        %v3043 = vsel %vm707, %v2994, 0.0
        %v3044 = vadd.f32 %v3042, %v3043
        %v3045 = vsel %vm707, %v2995, 0.0
        %v3046 = vadd.f32 %v3044, %v3045
        %v3047 = vsel %vm707, %v2996, 0.0
        %v3048 = vadd.f32 %v3046, %v3047
        %v3049 = vsel %vm707, %v2997, 0.0
        %v3050 = vadd.f32 %v3048, %v3049
        %v3051 = vsel %vm707, %v2998, 0.0
        %v3052 = vadd.f32 %v3050, %v3051
        %v3053 = vsel %vm707, %v2999, 0.0
        %v3054 = vadd.f32 %v3052, %v3053
        %v3055 = vsel %vm707, %v3000, 0.0
        %v3056 = vadd.f32 %v3054, %v3055
        %v3057 = vsel %vm707, %v3001, 0.0
        %v3058 = vadd.f32 %v3056, %v3057
        %v3059 = vsel %vm707, %v3002, 0.0
        %v3060 = vadd.f32 %v3058, %v3059
        %v3061 = vsel %vm707, %v3003, 0.0
        %v3062 = vadd.f32 %v3060, %v3061
        %v3063 = vsel %vm707, %v3004, 0.0
        %v3064 = vadd.f32 %v3062, %v3063
        %v3065 = vsel %vm707, %v3005, 0.0
        %v3066 = vadd.f32 %v3064, %v3065
        %v3067 = vsel %vm707, %v3006, 0.0
        %v3068 = vadd.f32 %v3066, %v3067
        %v3069 = vsel %vm707, %v3007, 0.0
        %v3070 = vadd.f32 %v3068, %v3069
        %v3071 = vrot.slane %v3070, 4
        %v3072 = vadd.f32 %v3070, %v3071
        %v3073 = vrot.slane %v3072, 2
        %v3074 = vadd.f32 %v3072, %v3073
        %v3075 = vrot.slane %v3074, 1
        %v3076 = vadd.f32 %v3074, %v3075
        %3077 = vst.msk [vmem:[%s240 + $0x1] sm:$0x1] %vm2974, %v3076
        %p3078 = scmp.lt.s32.totalorder %s20, 1
        %s3079 = scalar_select %p3078, %s20, 1
        %s3080 = smul.addr %s3079, 32
        %s3081 = smul.addr %s3080, 8
        %s3082 = scalar_lea.vmem %s4, %s3081
        %s3083 = sand.u32 %s148, 1
        %s3084 = scalar_lea.sflag [#allocation5], %s3083
        %s3085 = sand.u32 %s148, 1
        %s3086 = smul.addr %s3085, 2
        %s3087 = scalar_lea.vmem [#allocation4], %s3086
        // Predicated region
        $region37: #{tpu_custom_call.1} parent=35 // pred_check
          %p3088 = pneg %p132
        $region38: #{tpu_custom_call.1} parent=35 // pred_check_branch
          %3090 = sbr.rel (%p3088) target = $region40
        $region39: #{tpu_custom_call.1} parent=35 // pred_region
          _
        $region40: #{tpu_custom_call.1} parent=35 // pred_fallthru
          _
        // Predicated region
        $region41: #{tpu_custom_call.1} parent=35 // pred_check
          %p3091 = pneg %p158
        $region42: #{tpu_custom_call.1} parent=35 // pred_check_branch
          %3093 = sbr.rel (%p3091) target = $region44
        $region43: #{tpu_custom_call.1} parent=35 // pred_region
          %s3095 = ssub.s32 32, 32
          %3096 = vsyncadd %s3084, %s3095
          %s3097 = smul.addr %s20, 32
          %s3098 = scalar_lea.hbm %s5, %s3097
          %s3100 = sshll.u32 %s3087, 4
          %s3101 = int_to_ptr.vmem [resolvable:$true] %s3100
          %3103 = dma.vmem_to_hbm [thread:$0]  %s3101, 32, %s3098, %s3084
        $region44: #{tpu_custom_call.1} parent=35 // pred_fallthru
          _
      $region36: #{tpu_custom_call.1} parent=5 // pred_fallthru
        _
      %p3104 = scmp.le.s32.totalorder 2, %s15
      // Predicated region
      $region45: #{tpu_custom_call.1} parent=5 // pred_check
        %p3105 = pneg %p3104
      $region46: #{tpu_custom_call.1} parent=5 // pred_check_branch
        %3107 = sbr.rel (%p3105) target = $region48
      $region47: #{tpu_custom_call.1} parent=5 // pred_region
        %s3108 = ssub.s32 %s15, 2
        // Predicated region
        $region49: #{tpu_custom_call.1} parent=47 // pred_check
          %p3109 = pneg %p138
        $region50: #{tpu_custom_call.1} parent=47 // pred_check_branch
          %3111 = sbr.rel (%p3109) target = $region52
        $region51: #{tpu_custom_call.1} parent=47 // pred_region
          %p3112 = scmp.lt.s32.totalorder %s21, 1
          %s3113 = scalar_select %p3112, %s21, 1
          %s3114 = smul.addr %s3113, 32
          %s3115 = smul.addr %s3114, 8
          %s3116 = scalar_lea.vmem %s4, %s3115
        $region52: #{tpu_custom_call.1} parent=47 // pred_fallthru
          _
        // Predicated region
        $region53: #{tpu_custom_call.1} parent=47 // pred_check
          %p3117 = pneg %p164
        $region54: #{tpu_custom_call.1} parent=47 // pred_check_branch
          %3119 = sbr.rel (%p3117) target = $region56
        $region55: #{tpu_custom_call.1} parent=47 // pred_region
          %s3120 = sand.u32 %s149, 1
          %s3121 = scalar_lea.sflag [#allocation5], %s3120
          %s3122 = sand.u32 %s149, 1
          %s3123 = smul.addr %s3122, 2
          %s3124 = scalar_lea.vmem [#allocation4], %s3123
          %3125 = dma.done %s3121, 32
        $region56: #{tpu_custom_call.1} parent=47 // pred_fallthru
          _
      $region48: #{tpu_custom_call.1} parent=5 // pred_fallthru
        _
    $region6: #{tpu_custom_call.1} parent=1 // loop_footer
      %s19 = sadd.s32 1, %s15
    $region7: #{tpu_custom_call.1} parent=1 // loop_footer_branch
      %14 = sbr.rel target = $region3
    $region8: #{tpu_custom_call.1} parent=1 // loop_exit
      _
    %3126 = vsyncpa [#allocation5], 1
    %s3127 = scalar_lea.sflag [#allocation5], 1
    %3128 = vsyncpa %s3127, 1

</llo_original>
